<compile_context>
chip_gen: v7x
topology: tpu7x:2x2x1
jax: 0.10.0
libtpu: 0.0.40
codegen_flags: <defaults>
</compile_context>

<pallas_src>
import jax
import jax.numpy as jnp
from jax.experimental import pallas as pl
from jax.experimental.pallas import tpu as pltpu


# ----------------------------------------------------------------------------
# Helpers
# ----------------------------------------------------------------------------
def _round_up(v, m):
    return ((v + m - 1) // m) * m


def _largest_tile(dim, cap, align):
    """Largest t <= cap with dim % t == 0 and t % align == 0 (else full dim)."""
    if dim <= cap:
        return dim
    t = (cap // align) * align
    while t >= align:
        if dim % t == 0:
            return t
        t -= align
    # TODO(synk): pad awkward weight dims instead of falling back to untiled.
    return dim


def _pick_tm(n, cap):
    """Row-tile size: multiple of 16 (bf16 sublane packing), <= cap."""
    cap = max(16, (cap // 16) * 16)
    if n >= cap:
        return cap
    return _round_up(n, 16)


def _mosaic_params():
    limit = 48 * 1024 * 1024
    try:
        cap = getattr(pltpu.get_tpu_info(), "vmem_capacity_bytes", None)
        if cap:
            limit = min(limit, int(cap) * 3 // 4)   # v7x: 64 MiB -> 48 MiB
    except Exception:
        pass
    return pltpu.CompilerParams(
        dimension_semantics=("parallel", "parallel", "arbitrary"),
        vmem_limit_bytes=limit,
    )


# ----------------------------------------------------------------------------
# Pallas kernels
# ----------------------------------------------------------------------------
def _gateup_swiglu_dual_kernel(ht_ref, hv_ref, m_ref, x_ref,
                               wg_t_ref, wu_t_ref, wg_v_ref, wu_v_ref,
                               o_ref, acc_g_ref, acc_u_ref):
    """Dual-expert gate/up projection + fused SwiGLU epilogue.

    ht/hv: per-m-tile has_text / has_vision flags (SMEM, scalar-prefetched).
    m: [tm,1] bf16 vision mask column (1 = vision row).  Expert routing is the
    masked-add formulation: the idle expert sees an all-zero row.
    """
    i = pl.program_id(0)
    k = pl.program_id(2)

    @pl.when(k == 0)
    def _():
        acc_g_ref[...] = jnp.zeros_like(acc_g_ref)
        acc_u_ref[...] = jnp.zeros_like(acc_u_ref)

    x = x_ref[...]
    m = m_ref[...]                       # (tm, 1) bf16

    @pl.when(ht_ref[i] != 0)
    def _():
        xt = x * (1.0 - m)               # text rows of x (VPU filler)
        acc_g_ref[...] += jnp.dot(xt, wg_t_ref[...],
                                  preferred_element_type=jnp.float32)
        acc_u_ref[...] += jnp.dot(xt, wu_t_ref[...],
                                  preferred_element_type=jnp.float32)

    @pl.when(hv_ref[i] != 0)
    def _():
        xv = x * m                       # vision rows of x
        acc_g_ref[...] += jnp.dot(xv, wg_v_ref[...],
                                  preferred_element_type=jnp.float32)
        acc_u_ref[...] += jnp.dot(xv, wu_v_ref[...],
                                  preferred_element_type=jnp.float32)

    @pl.when(k == pl.num_programs(2) - 1)
    def _():
        g = acc_g_ref[...]
        # silu(g) * u  (logistic goes to the EUP slot; muls stay on the VPU)
        o_ref[...] = (g * jax.lax.logistic(g) * acc_u_ref[...]).astype(o_ref.dtype)


def _down_dual_kernel(ht_ref, hv_ref, m_ref, h_ref, wd_t_ref, wd_v_ref,
                      o_ref, acc_ref):
    """Dual-expert down projection: o = (h*(1-m)) @ Wt + (h*m) @ Wv."""
    i = pl.program_id(0)
    k = pl.program_id(2)

    @pl.when(k == 0)
    def _():
        acc_ref[...] = jnp.zeros_like(acc_ref)

    h = h_ref[...]
    m = m_ref[...]

    @pl.when(ht_ref[i] != 0)
    def _():
        acc_ref[...] += jnp.dot(h * (1.0 - m), wd_t_ref[...],
                                preferred_element_type=jnp.float32)

    @pl.when(hv_ref[i] != 0)
    def _():
        acc_ref[...] += jnp.dot(h * m, wd_v_ref[...],
                                preferred_element_type=jnp.float32)

    @pl.when(k == pl.num_programs(2) - 1)
    def _():
        o_ref[...] = acc_ref[...].astype(o_ref.dtype)


def _gateup_swiglu_single_kernel(x_ref, wg_ref, wu_ref, o_ref,
                                 acc_g_ref, acc_u_ref):
    """Single-expert gate/up + SwiGLU (vision_mask is None fast path)."""
    k = pl.program_id(2)

    @pl.when(k == 0)
    def _():
        acc_g_ref[...] = jnp.zeros_like(acc_g_ref)
        acc_u_ref[...] = jnp.zeros_like(acc_u_ref)

    x = x_ref[...]
    acc_g_ref[...] += jnp.dot(x, wg_ref[...], preferred_element_type=jnp.float32)
    acc_u_ref[...] += jnp.dot(x, wu_ref[...], preferred_element_type=jnp.float32)

    @pl.when(k == pl.num_programs(2) - 1)
    def _():
        g = acc_g_ref[...]
        o_ref[...] = (g * jax.lax.logistic(g) * acc_u_ref[...]).astype(o_ref.dtype)


def _matmul_single_kernel(x_ref, w_ref, o_ref, acc_ref):
    k = pl.program_id(2)

    @pl.when(k == 0)
    def _():
        acc_ref[...] = jnp.zeros_like(acc_ref)

    acc_ref[...] += jnp.dot(x_ref[...], w_ref[...],
                            preferred_element_type=jnp.float32)

    @pl.when(k == pl.num_programs(2) - 1)
    def _():
        o_ref[...] = acc_ref[...].astype(o_ref.dtype)


# ----------------------------------------------------------------------------
# Kernel wrappers
# ----------------------------------------------------------------------------
def _gateup_swiglu_dual(has_text, has_vis, m_col, x, wg_t, wu_t, wg_v, wu_v,
                        *, tm, tn_cap, tk_cap):
    n, kdim = x.shape
    idim = wg_t.shape[1]
    tn = _largest_tile(idim, tn_cap, 128)
    tk = _largest_tile(kdim, tk_cap, 128)
    grid = (n // tm, idim // tn, kdim // tk)

    x_spec = pl.BlockSpec((tm, tk), lambda i, j, k, ht, hv: (i, k))
    m_spec = pl.BlockSpec((tm, 1), lambda i, j, k, ht, hv: (i, 0))
    # Idle expert's weight stream is pinned to K-block 0 -> not re-fetched.
    wt_spec = pl.BlockSpec((tk, tn), lambda i, j, k, ht, hv: (ht[i] * k, j))
    wv_spec = pl.BlockSpec((tk, tn), lambda i, j, k, ht, hv: (hv[i] * k, j))
    o_spec = pl.BlockSpec((tm, tn), lambda i, j, k, ht, hv: (i, j))

    return pl.pallas_call(
        _gateup_swiglu_dual_kernel,
        grid_spec=pltpu.PrefetchScalarGridSpec(
            num_scalar_prefetch=2,
            grid=grid,
            in_specs=[m_spec, x_spec, wt_spec, wt_spec, wv_spec, wv_spec],
            out_specs=o_spec,
            scratch_shapes=[pltpu.VMEM((tm, tn), jnp.float32),
                            pltpu.VMEM((tm, tn), jnp.float32)]),
        out_shape=jax.ShapeDtypeStruct((n, idim), x.dtype),
        compiler_params=_mosaic_params(),
    )(has_text, has_vis, m_col, x, wg_t, wu_t, wg_v, wu_v)


def _down_dual(has_text, has_vis, m_col, h, wd_t, wd_v, *, tm, tn_cap, tk_cap):
    n, kdim = h.shape
    hdim = wd_t.shape[1]
    tn = _largest_tile(hdim, tn_cap, 128)
    tk = _largest_tile(kdim, tk_cap, 128)
    grid = (n // tm, hdim // tn, kdim // tk)

    h_spec = pl.BlockSpec((tm, tk), lambda i, j, k, ht, hv: (i, k))
    m_spec = pl.BlockSpec((tm, 1), lambda i, j, k, ht, hv: (i, 0))
    wt_spec = pl.BlockSpec((tk, tn), lambda i, j, k, ht, hv: (ht[i] * k, j))
    wv_spec = pl.BlockSpec((tk, tn), lambda i, j, k, ht, hv: (hv[i] * k, j))
    o_spec = pl.BlockSpec((tm, tn), lambda i, j, k, ht, hv: (i, j))

    return pl.pallas_call(
        _down_dual_kernel,
        grid_spec=pltpu.PrefetchScalarGridSpec(
            num_scalar_prefetch=2,
            grid=grid,
            in_specs=[m_spec, h_spec, wt_spec, wv_spec],
            out_specs=o_spec,
            scratch_shapes=[pltpu.VMEM((tm, tn), jnp.float32)]),
        out_shape=jax.ShapeDtypeStruct((n, hdim), h.dtype),
        compiler_params=_mosaic_params(),
    )(has_text, has_vis, m_col, h, wd_t, wd_v)


def _gateup_swiglu_single(x, wg, wu, *, tm, tn_cap, tk_cap):
    n, kdim = x.shape
    idim = wg.shape[1]
    tn = _largest_tile(idim, tn_cap, 128)
    tk = _largest_tile(kdim, tk_cap, 128)
    grid = (n // tm, idim // tn, kdim // tk)

    return pl.pallas_call(
        _gateup_swiglu_single_kernel,
        grid=grid,
        in_specs=[pl.BlockSpec((tm, tk), lambda i, j, k: (i, k)),
                  pl.BlockSpec((tk, tn), lambda i, j, k: (k, j)),
                  pl.BlockSpec((tk, tn), lambda i, j, k: (k, j))],
        out_specs=pl.BlockSpec((tm, tn), lambda i, j, k: (i, j)),
        out_shape=jax.ShapeDtypeStruct((n, idim), x.dtype),
        scratch_shapes=[pltpu.VMEM((tm, tn), jnp.float32),
                        pltpu.VMEM((tm, tn), jnp.float32)],
        compiler_params=_mosaic_params(),
    )(x, wg, wu)


def _matmul_single(x, w, *, tm, tn_cap, tk_cap):
    n, kdim = x.shape
    mdim = w.shape[1]
    tn = _largest_tile(mdim, tn_cap, 128)
    tk = _largest_tile(kdim, tk_cap, 128)
    grid = (n // tm, mdim // tn, kdim // tk)

    return pl.pallas_call(
        _matmul_single_kernel,
        grid=grid,
        in_specs=[pl.BlockSpec((tm, tk), lambda i, j, k: (i, k)),
                  pl.BlockSpec((tk, tn), lambda i, j, k: (k, j))],
        out_specs=pl.BlockSpec((tm, tn), lambda i, j, k: (i, j)),
        out_shape=jax.ShapeDtypeStruct((n, mdim), x.dtype),
        scratch_shapes=[pltpu.VMEM((tm, tn), jnp.float32)],
        compiler_params=_mosaic_params(),
    )(x, w)


# ----------------------------------------------------------------------------
# Cogvlm2MLP forward (matches the torch module semantics, bias=False, silu)
# ----------------------------------------------------------------------------
def cogvlm2_mlp_forward(params, hidden_states, vision_mask,
                        *, tm_cap=512, tn_cap=1024, tk_cap=512):
    """hidden_states: [N, H]; vision_mask: [N] bool or None -> [N, H] bf16."""
    x = hidden_states.astype(jnp.bfloat16)
    n, _ = x.shape

    tm = _pick_tm(n, tm_cap)
    np_ = _round_up(n, tm)
    if np_ != n:
        x = jnp.pad(x, ((0, np_ - n), (0, 0)))

    if vision_mask is None:
        # Single-expert (text) fast path: vision weights never touch HBM/VMEM.
        h = _gateup_swiglu_single(x, params["gate_text"], params["up_text"],
                                  tm=tm, tn_cap=tn_cap, tk_cap=tk_cap)
        o = _matmul_single(h, params["down_text"],
                           tm=tm, tn_cap=tn_cap, tk_cap=tk_cap)
        return o[:n]

    vm = vision_mask
    if np_ != n:
        vm = jnp.pad(vm, ((0, np_ - n),))            # padded rows -> text

    m_col = vm.astype(jnp.bfloat16).reshape(np_, 1)  # 1.0 = vision row
    vm_tiles = vm.reshape(np_ // tm, tm)
    has_text = jnp.any(~vm_tiles, axis=1).astype(jnp.int32)   # per-m-tile flags
    has_vis = jnp.any(vm_tiles, axis=1).astype(jnp.int32)

    # Fused dual-expert gate/up projection + SwiGLU (per-tile expert skipping).
    h = _gateup_swiglu_dual(has_text, has_vis, m_col, x,
                            params["gate_text"], params["up_text"],
                            params["gate_vis"], params["up_vis"],
                            tm=tm, tn_cap=tn_cap, tk_cap=tk_cap)   # [Np, I]

    # Routed down projection (masking happens in-kernel; h streamed once).
    o = _down_dual(has_text, has_vis, m_col, h,
                   params["down_text"], params["down_vis"],
                   tm=tm, tn_cap=tn_cap, tk_cap=tk_cap)            # [Np, H]
    return o[:n]


# ----------------------------------------------------------------------------
# Pure-JAX reference (mirrors the torch module with bf16 weights/activations)
# ----------------------------------------------------------------------------
def cogvlm2_mlp_reference(params, hidden_states_bf16, vision_mask):
    x = hidden_states_bf16.astype(jnp.float32)

    def expert(wg, wu, wd):
        g = x @ wg.astype(jnp.float32)
        u = x @ wu.astype(jnp.float32)
        h = (jax.nn.silu(g) * u).astype(jnp.bfloat16).astype(jnp.float32)
        return h @ wd.astype(jnp.float32)

    out_text = expert(params["gate_text"], params["up_text"], params["down_text"])
    if vision_mask is None:
        return out_text
    out_vis = expert(params["gate_vis"], params["up_vis"], params["down_vis"])
    return jnp.where(vision_mask[:, None], out_vis, out_text)


# ----------------------------------------------------------------------------
# Deterministic parameter init (weights stored [in_features, out_features])
# ----------------------------------------------------------------------------
def init_params(key, hidden_size, intermediate_size, dtype=jnp.bfloat16):
    h, i = hidden_size, intermediate_size
    ks = jax.random.split(key, 6)

    def w(k, shape, scale=0.05):
        return (scale * jax.random.normal(k, shape, jnp.float32)).astype(dtype)

    return dict(
        gate_text=w(ks[0], (h, i)),
        up_text=w(ks[1], (h, i)),
        down_text=w(ks[2], (i, h)),
        gate_vis=w(ks[3], (h, i)),
        up_vis=w(ks[4], (h, i)),
        down_vis=w(ks[5], (i, h)),
    )


# ----------------------------------------------------------------------------
# Main
# ----------------------------------------------------------------------------
if __name__ == "__main__":
    hidden_size = 512
    intermediate_size = 1024
    num_tokens = 190          # not a multiple of 16 -> exercises row padding

    key = jax.random.PRNGKey(0)
    kp, kx = jax.random.split(key)
    params = init_params(kp, hidden_size, intermediate_size)

    hidden_states = jax.random.normal(kx, (num_tokens, hidden_size), jnp.float32)
    # vision span [60, 128): with tm=64 this yields a mixed tile, a pure-vision
    # tile and a pure-text tile -> exercises both pl.when expert-skip branches.
    idx = jnp.arange(num_tokens)
    vision_mask = (idx >= 60) & (idx < 128)

    # Small tile caps so the test exercises multi-step M/N/K grids.
    out = cogvlm2_mlp_forward(params, hidden_states, vision_mask,
                              tm_cap=64, tn_cap=512, tk_cap=256)
    jax.block_until_ready(out)

    ref = cogvlm2_mlp_reference(params, hidden_states.astype(jnp.bfloat16),
                                vision_mask)
    out_f32 = out.astype(jnp.float32)
    max_err = float(jnp.max(jnp.abs(out_f32 - ref)))

    assert out.shape == (num_tokens, hidden_size)
    assert bool(jnp.isfinite(out_f32).all())
    assert max_err < 4e-2, f"max abs err vs reference (dual): {max_err}"

    # vision_mask=None fast path (single-expert kernels).
    out_none = cogvlm2_mlp_forward(params, hidden_states, None,
                                   tm_cap=64, tn_cap=512, tk_cap=256)
    jax.block_until_ready(out_none)
    ref_none = cogvlm2_mlp_reference(params, hidden_states.astype(jnp.bfloat16),
                                     None)
    max_err_none = float(jnp.max(jnp.abs(out_none.astype(jnp.float32) - ref_none)))
    assert out_none.shape == (num_tokens, hidden_size)
    assert max_err_none < 4e-2, f"max abs err vs reference (none): {max_err_none}"

    print("KERNEL_OK")
</pallas_src>

<mosaic_0001>
module attributes {stable_mosaic.version = 11 : i64} {
  func.func @_gateup_swiglu_dual_kernel(%arg0: i32, %arg1: i32, %arg2: i32, %arg3: memref<3xi32, #tpu.memory_space<smem>>, %arg4: memref<3xi32, #tpu.memory_space<smem>>, %arg5: memref<64x1xbf16, #tpu.memory_space<vmem>>, %arg6: memref<64x256xbf16, #tpu.memory_space<vmem>>, %arg7: memref<256x512xbf16, #tpu.memory_space<vmem>>, %arg8: memref<256x512xbf16, #tpu.memory_space<vmem>>, %arg9: memref<256x512xbf16, #tpu.memory_space<vmem>>, %arg10: memref<256x512xbf16, #tpu.memory_space<vmem>>, %arg11: memref<64x512xbf16, #tpu.memory_space<vmem>>, %arg12: memref<64x512xf32, #tpu.memory_space<vmem>>, %arg13: memref<64x512xf32, #tpu.memory_space<vmem>>) attributes {dimension_semantics = [#tpu.dimension_semantics<parallel>, #tpu.dimension_semantics<parallel>, #tpu.dimension_semantics<arbitrary>], iteration_bounds = array<i64: 3, 2, 2>, scalar_prefetch = 2 : i64, scratch_operands = 2 : i64, tpu.core_type = #tpu.core_type<tc>, window_params = [{transform_indices = @transform_0, window_bounds = array<i64: 64, 1>}, {transform_indices = @transform_1, window_bounds = array<i64: 64, 256>}, {transform_indices = @transform_2, window_bounds = array<i64: 256, 512>}, {transform_indices = @transform_3, window_bounds = array<i64: 256, 512>}, {transform_indices = @transform_4, window_bounds = array<i64: 256, 512>}, {transform_indices = @transform_5, window_bounds = array<i64: 256, 512>}, {transform_indices = @transform_6, window_bounds = array<i64: 64, 512>}]} {
    %c0_i32 = arith.constant 0 : i32
    %0 = arith.cmpi eq, %arg2, %c0_i32 : i32
    %1 = arith.extui %0 : i1 to i32
    %c0_i32_0 = arith.constant 0 : i32
    %2 = arith.cmpi ne, %1, %c0_i32_0 : i32
    scf.if %2 {
      %cst = arith.constant 0.000000e+00 : f32
      %18 = vector.broadcast %cst : f32 to vector<64x512xf32>
      %c0_9 = arith.constant 0 : index
      %c0_10 = arith.constant 0 : index
      %19 = vector.load %arg12[%c0_9, %c0_10] : memref<64x512xf32, #tpu.memory_space<vmem>>, vector<64x512xf32>
      tpu.vector_store %arg12[%c0_9, %c0_10], %18 {strides = array<i32>} : memref<64x512xf32, #tpu.memory_space<vmem>>, vector<64x512xf32>,
      %cst_11 = arith.constant 0.000000e+00 : f32
      %20 = vector.broadcast %cst_11 : f32 to vector<64x512xf32>
      %c0_12 = arith.constant 0 : index
      %c0_13 = arith.constant 0 : index
      %21 = vector.load %arg13[%c0_12, %c0_13] : memref<64x512xf32, #tpu.memory_space<vmem>>, vector<64x512xf32>
      tpu.vector_store %arg13[%c0_12, %c0_13], %20 {strides = array<i32>} : memref<64x512xf32, #tpu.memory_space<vmem>>, vector<64x512xf32>,
    } else {
    }
    %c0 = arith.constant 0 : index
    %c0_1 = arith.constant 0 : index
    %3 = vector.load %arg6[%c0, %c0_1] : memref<64x256xbf16, #tpu.memory_space<vmem>>, vector<64x256xbf16>
    %c0_2 = arith.constant 0 : index
    %c0_3 = arith.constant 0 : index
    %4 = vector.load %arg5[%c0_2, %c0_3] : memref<64x1xbf16, #tpu.memory_space<vmem>>, vector<64x1xbf16>
    %5 = arith.index_cast %arg0 : i32 to index
    %6 = memref.load %arg3[%5] : memref<3xi32, #tpu.memory_space<smem>>
    %c0_i32_4 = arith.constant 0 : i32
    %7 = arith.cmpi ne, %6, %c0_i32_4 : i32
    %8 = arith.extui %7 : i1 to i32
    %c0_i32_5 = arith.constant 0 : i32
    %9 = arith.cmpi ne, %8, %c0_i32_5 : i32
    scf.if %9 {
      %cst = arith.constant 1.000000e+00 : bf16
      %18 = vector.broadcast %cst : bf16 to vector<64x1xbf16>
      %19 = arith.subf %18, %4 : vector<64x1xbf16>
      %20 = vector.broadcast %19 : vector<64x1xbf16> to vector<64x256xbf16>
      %21 = arith.mulf %3, %20 : vector<64x256xbf16>
      %c0_9 = arith.constant 0 : index
      %c0_10 = arith.constant 0 : index
      %22 = vector.load %arg12[%c0_9, %c0_10] : memref<64x512xf32, #tpu.memory_space<vmem>>, vector<64x512xf32>
      %c0_11 = arith.constant 0 : index
      %c0_12 = arith.constant 0 : index
      %23 = vector.load %arg7[%c0_11, %c0_12] : memref<256x512xbf16, #tpu.memory_space<vmem>>, vector<256x512xbf16>
      %cst_13 = arith.constant dense<0.000000e+00> : vector<64x512xf32>
      %24 = tpu.matmul %21, %23, %cst_13 {dimension_numbers = #tpu.dot_dimension_numbers<[1], [0], [0], [1], [0, 0, 1, 1], [], []>} : vector<64x256xbf16>, vector<256x512xbf16>, vector<64x512xf32> -> vector<64x512xf32>
      %25 = arith.addf %22, %24 : vector<64x512xf32>
      %c0_14 = arith.constant 0 : index
      %c0_15 = arith.constant 0 : index
      %26 = vector.load %arg12[%c0_14, %c0_15] : memref<64x512xf32, #tpu.memory_space<vmem>>, vector<64x512xf32>
      tpu.vector_store %arg12[%c0_14, %c0_15], %25 {strides = array<i32>} : memref<64x512xf32, #tpu.memory_space<vmem>>, vector<64x512xf32>,
      %c0_16 = arith.constant 0 : index
      %c0_17 = arith.constant 0 : index
      %27 = vector.load %arg13[%c0_16, %c0_17] : memref<64x512xf32, #tpu.memory_space<vmem>>, vector<64x512xf32>
      %c0_18 = arith.constant 0 : index
      %c0_19 = arith.constant 0 : index
      %28 = vector.load %arg8[%c0_18, %c0_19] : memref<256x512xbf16, #tpu.memory_space<vmem>>, vector<256x512xbf16>
      %cst_20 = arith.constant dense<0.000000e+00> : vector<64x512xf32>
      %29 = tpu.matmul %21, %28, %cst_20 {dimension_numbers = #tpu.dot_dimension_numbers<[1], [0], [0], [1], [0, 0, 1, 1], [], []>} : vector<64x256xbf16>, vector<256x512xbf16>, vector<64x512xf32> -> vector<64x512xf32>
      %30 = arith.addf %27, %29 : vector<64x512xf32>
      %c0_21 = arith.constant 0 : index
      %c0_22 = arith.constant 0 : index
      %31 = vector.load %arg13[%c0_21, %c0_22] : memref<64x512xf32, #tpu.memory_space<vmem>>, vector<64x512xf32>
      tpu.vector_store %arg13[%c0_21, %c0_22], %30 {strides = array<i32>} : memref<64x512xf32, #tpu.memory_space<vmem>>, vector<64x512xf32>,
    } else {
    }
    %10 = arith.index_cast %arg0 : i32 to index
    %11 = memref.load %arg4[%10] : memref<3xi32, #tpu.memory_space<smem>>
    %c0_i32_6 = arith.constant 0 : i32
    %12 = arith.cmpi ne, %11, %c0_i32_6 : i32
    %13 = arith.extui %12 : i1 to i32
    %c0_i32_7 = arith.constant 0 : i32
    %14 = arith.cmpi ne, %13, %c0_i32_7 : i32
    scf.if %14 {
      %18 = vector.broadcast %4 : vector<64x1xbf16> to vector<64x256xbf16>
      %19 = arith.mulf %3, %18 : vector<64x256xbf16>
      %c0_9 = arith.constant 0 : index
      %c0_10 = arith.constant 0 : index
      %20 = vector.load %arg12[%c0_9, %c0_10] : memref<64x512xf32, #tpu.memory_space<vmem>>, vector<64x512xf32>
      %c0_11 = arith.constant 0 : index
      %c0_12 = arith.constant 0 : index
      %21 = vector.load %arg9[%c0_11, %c0_12] : memref<256x512xbf16, #tpu.memory_space<vmem>>, vector<256x512xbf16>
      %cst = arith.constant dense<0.000000e+00> : vector<64x512xf32>
      %22 = tpu.matmul %19, %21, %cst {dimension_numbers = #tpu.dot_dimension_numbers<[1], [0], [0], [1], [0, 0, 1, 1], [], []>} : vector<64x256xbf16>, vector<256x512xbf16>, vector<64x512xf32> -> vector<64x512xf32>
      %23 = arith.addf %20, %22 : vector<64x512xf32>
      %c0_13 = arith.constant 0 : index
      %c0_14 = arith.constant 0 : index
      %24 = vector.load %arg12[%c0_13, %c0_14] : memref<64x512xf32, #tpu.memory_space<vmem>>, vector<64x512xf32>
      tpu.vector_store %arg12[%c0_13, %c0_14], %23 {strides = array<i32>} : memref<64x512xf32, #tpu.memory_space<vmem>>, vector<64x512xf32>,
      %c0_15 = arith.constant 0 : index
      %c0_16 = arith.constant 0 : index
      %25 = vector.load %arg13[%c0_15, %c0_16] : memref<64x512xf32, #tpu.memory_space<vmem>>, vector<64x512xf32>
      %c0_17 = arith.constant 0 : index
      %c0_18 = arith.constant 0 : index
      %26 = vector.load %arg10[%c0_17, %c0_18] : memref<256x512xbf16, #tpu.memory_space<vmem>>, vector<256x512xbf16>
      %cst_19 = arith.constant dense<0.000000e+00> : vector<64x512xf32>
      %27 = tpu.matmul %19, %26, %cst_19 {dimension_numbers = #tpu.dot_dimension_numbers<[1], [0], [0], [1], [0, 0, 1, 1], [], []>} : vector<64x256xbf16>, vector<256x512xbf16>, vector<64x512xf32> -> vector<64x512xf32>
      %28 = arith.addf %25, %27 : vector<64x512xf32>
      %c0_20 = arith.constant 0 : index
      %c0_21 = arith.constant 0 : index
      %29 = vector.load %arg13[%c0_20, %c0_21] : memref<64x512xf32, #tpu.memory_space<vmem>>, vector<64x512xf32>
      tpu.vector_store %arg13[%c0_20, %c0_21], %28 {strides = array<i32>} : memref<64x512xf32, #tpu.memory_space<vmem>>, vector<64x512xf32>,
    } else {
    }
    %c1_i32 = arith.constant 1 : i32
    %15 = arith.cmpi eq, %arg2, %c1_i32 : i32
    %16 = arith.extui %15 : i1 to i32
    %c0_i32_8 = arith.constant 0 : i32
    %17 = arith.cmpi ne, %16, %c0_i32_8 : i32
    scf.if %17 {
      %c0_9 = arith.constant 0 : index
      %c0_10 = arith.constant 0 : index
      %18 = vector.load %arg12[%c0_9, %c0_10] : memref<64x512xf32, #tpu.memory_space<vmem>>, vector<64x512xf32>
      %19 = arith.negf %18 : vector<64x512xf32>
      %20 = math.exp %19 : vector<64x512xf32>
      %cst = arith.constant 1.000000e+00 : f32
      %21 = vector.broadcast %cst : f32 to vector<64x512xf32>
      %22 = arith.addf %21, %20 : vector<64x512xf32>
      %23 = arith.divf %21, %22 : vector<64x512xf32>
      %24 = arith.mulf %18, %23 : vector<64x512xf32>
      %c0_11 = arith.constant 0 : index
      %c0_12 = arith.constant 0 : index
      %25 = vector.load %arg13[%c0_11, %c0_12] : memref<64x512xf32, #tpu.memory_space<vmem>>, vector<64x512xf32>
      %26 = arith.mulf %24, %25 : vector<64x512xf32>
      %27 = arith.truncf %26 : vector<64x512xf32> to vector<64x512xbf16>
      %c0_13 = arith.constant 0 : index
      %c0_14 = arith.constant 0 : index
      %28 = vector.load %arg11[%c0_13, %c0_14] : memref<64x512xbf16, #tpu.memory_space<vmem>>, vector<64x512xbf16>
      tpu.vector_store %arg11[%c0_13, %c0_14], %27 {strides = array<i32>} : memref<64x512xbf16, #tpu.memory_space<vmem>>, vector<64x512xbf16>,
    } else {
    }
    return
  }
  func.func @transform_0(%arg0: i32, %arg1: i32, %arg2: i32, %arg3: memref<3xi32, #tpu.memory_space<smem>>, %arg4: memref<3xi32, #tpu.memory_space<smem>>) -> (i32, i32) {
    %c0_i32 = arith.constant 0 : i32
    %c0_i32_0 = arith.constant 0 : i32
    return %arg0, %c0_i32 : i32, i32
  }
  func.func @transform_1(%arg0: i32, %arg1: i32, %arg2: i32, %arg3: memref<3xi32, #tpu.memory_space<smem>>, %arg4: memref<3xi32, #tpu.memory_space<smem>>) -> (i32, i32) {
    %c0_i32 = arith.constant 0 : i32
    return %arg0, %arg2 : i32, i32
  }
  func.func @transform_2(%arg0: i32, %arg1: i32, %arg2: i32, %arg3: memref<3xi32, #tpu.memory_space<smem>>, %arg4: memref<3xi32, #tpu.memory_space<smem>>) -> (i32, i32) {
    %0 = arith.index_cast %arg0 : i32 to index
    %1 = memref.load %arg3[%0] : memref<3xi32, #tpu.memory_space<smem>>
    %2 = arith.muli %1, %arg2 : i32
    %c0_i32 = arith.constant 0 : i32
    return %2, %arg1 : i32, i32
  }
  func.func @transform_3(%arg0: i32, %arg1: i32, %arg2: i32, %arg3: memref<3xi32, #tpu.memory_space<smem>>, %arg4: memref<3xi32, #tpu.memory_space<smem>>) -> (i32, i32) {
    %0 = arith.index_cast %arg0 : i32 to index
    %1 = memref.load %arg3[%0] : memref<3xi32, #tpu.memory_space<smem>>
    %2 = arith.muli %1, %arg2 : i32
    %c0_i32 = arith.constant 0 : i32
    return %2, %arg1 : i32, i32
  }
  func.func @transform_4(%arg0: i32, %arg1: i32, %arg2: i32, %arg3: memref<3xi32, #tpu.memory_space<smem>>, %arg4: memref<3xi32, #tpu.memory_space<smem>>) -> (i32, i32) {
    %0 = arith.index_cast %arg0 : i32 to index
    %1 = memref.load %arg4[%0] : memref<3xi32, #tpu.memory_space<smem>>
    %2 = arith.muli %1, %arg2 : i32
    %c0_i32 = arith.constant 0 : i32
    return %2, %arg1 : i32, i32
  }
  func.func @transform_5(%arg0: i32, %arg1: i32, %arg2: i32, %arg3: memref<3xi32, #tpu.memory_space<smem>>, %arg4: memref<3xi32, #tpu.memory_space<smem>>) -> (i32, i32) {
    %0 = arith.index_cast %arg0 : i32 to index
    %1 = memref.load %arg4[%0] : memref<3xi32, #tpu.memory_space<smem>>
    %2 = arith.muli %1, %arg2 : i32
    %c0_i32 = arith.constant 0 : i32
    return %2, %arg1 : i32, i32
  }
  func.func @transform_6(%arg0: i32, %arg1: i32, %arg2: i32, %arg3: memref<3xi32, #tpu.memory_space<smem>>, %arg4: memref<3xi32, #tpu.memory_space<smem>>) -> (i32, i32) {
    %c0_i32 = arith.constant 0 : i32
    return %arg0, %arg1 : i32, i32
  }
}

</mosaic_0001>

<llo_original>
// kernel: tpu_custom_call.1
$region0: #{tpu_custom_call.1}
  #allocation0 [shape = 'u32[]', space=smem, size = 0x4, offset = 0x4, fixed_abs, tag = 'smem constant byte address 0x4 - core index']
  #allocation1 [shape = 'u32[144,128]{1,0:T(1,128)}', space=vmem, size = 0x12000, scoped, tag = 'internal scratch']
  #allocation2 [shape = 'f32[64,512]{1,0:T(8,128)}', space=vmem, size = 0x20000, scoped, tag = 'scratch operand']
  #allocation3 [shape = 'f32[64,512]{1,0:T(8,128)}', space=vmem, size = 0x20000, scoped, tag = 'scratch operand']
  #allocation4 [shape = 's32[1]{0}', space=sflag, size = 0x4, scoped, tag = 'scoped memory for tpu_custom_call.1']
  #allocation5 [shape = 'u8[512]{0}', space=smem, size = 0x200, scoped, tag = 'prefetched SMEM operand 0']
  #allocation6 [shape = 'u8[512]{0}', space=smem, size = 0x200, scoped, tag = 'prefetched SMEM operand 1']
  %s0 = inlined_call_operand.vmem [shape: s32[3], index: 0, kind: input, shape index: {}]
  %s1 = inlined_call_operand.vmem [shape: s32[3], index: 1, kind: input, shape index: {}]
  %s2 = inlined_call_operand.vmem [shape: bf16[192,1], index: 2, kind: input, shape index: {}]
  %s3 = inlined_call_operand.hbm [shape: bf16[192,512], index: 3, kind: input, shape index: {}]
  %s4 = inlined_call_operand.hbm [shape: bf16[512,1024], index: 4, kind: input, shape index: {}]
  %s5 = inlined_call_operand.hbm [shape: bf16[512,1024], index: 5, kind: input, shape index: {}]
  %s6 = inlined_call_operand.hbm [shape: bf16[512,1024], index: 6, kind: input, shape index: {}]
  %s7 = inlined_call_operand.hbm [shape: bf16[512,1024], index: 7, kind: input, shape index: {}]
  %s8 = inlined_call_operand.hbm [shape: bf16[192,1024], index: 8, kind: output, shape index: {}]
  %s9 = sld [smem:[#allocation0]]
  $region93: #{tpu_custom_call.1} parent=0
    _
  %s11 = ssub.s32 1, %s9
  %s12 = scalar_select 0, %s11, %s9
  %s13 = sshll.u32 %s0, 4
  %s14 = int_to_ptr.vmem [resolvable:$true] %s13
  %16 = dma.vmem_to_smem %s14, 16, [#allocation5], [#allocation4]
  %s17 = sshll.u32 %s1, 4
  %s18 = int_to_ptr.vmem [resolvable:$true] %s17
  %20 = dma.vmem_to_smem %s18, 16, [#allocation6], [#allocation4]
  %21 = dma.done [#allocation4], 32
  %22 = sfence
  $region1: #{tpu_custom_call.1} parent=0
    #allocation7 [shape = 'u8[65536]{0}', space=vmem, size = 0x10000, scoped, tag = 'input window, operand 3']
    #allocation8 [shape = 's32[2]{0}', space=sflag, size = 0x8, scoped, tag = 'scoped memory for tpu_custom_call.1']
    #allocation9 [shape = 's32[2]{0}', space=sflag, size = 0x8, scoped, tag = 'scoped memory for tpu_custom_call.1']
    #allocation10 [shape = 'u8[524288]{0}', space=vmem, size = 0x80000, scoped, tag = 'input window, operand 4']
    #allocation11 [shape = 's32[2]{0}', space=sflag, size = 0x8, scoped, tag = 'scoped memory for tpu_custom_call.1']
    #allocation12 [shape = 'u8[524288]{0}', space=vmem, size = 0x80000, scoped, tag = 'input window, operand 5']
    #allocation13 [shape = 'u8[524288]{0}', space=vmem, size = 0x80000, scoped, tag = 'input window, operand 6']
    #allocation14 [shape = 's32[2]{0}', space=sflag, size = 0x8, scoped, tag = 'scoped memory for tpu_custom_call.1']
    #allocation15 [shape = 'u8[524288]{0}', space=vmem, size = 0x80000, scoped, tag = 'input window, operand 7']
    #allocation16 [shape = 'u8[131072]{0}', space=vmem, size = 0x20000, scoped, tag = 'output window, operand 0']
    %23 = vsyncpa [#allocation8], 0
    %s24 = scalar_lea.sflag [#allocation8], 1
    %25 = vsyncpa %s24, 0
    %26 = vsyncpa [#allocation11], 0
    %s27 = scalar_lea.sflag [#allocation11], 1
    %28 = vsyncpa %s27, 0
    %29 = vsyncpa [#allocation14], 0
    %s30 = scalar_lea.sflag [#allocation14], 1
    %31 = vsyncpa %s30, 0
    %32 = vsyncpa [#allocation9], 0
    %s33 = scalar_lea.sflag [#allocation9], 1
    %34 = vsyncpa %s33, 0
    loop: start=0, step=1, limit=14
    $region2: #{tpu_custom_call.1} parent=1 // loop_pre_header
      _
    $region3: #{tpu_custom_call.1} parent=1 // loop_header
      %s36 = sphi 0, %s40
      %p37 = scmp.ge.s32.totalorder %s36, 14
      %s43 = sphi 0, %s62
      %s44 = sphi 0, %s58
      %s45 = sphi 0, %s54
      %s46 = sphi 0, %s43
      %s47 = sphi 0, %s44
      %s48 = sphi 0, %s45
      %s49 = sphi 0, %s46
      %s50 = sphi 0, %s47
      %s51 = sphi 0, %s48
      %s65 = sphi 0, %s67
      %s68 = sphi 0, %s65
      %s69 = sphi 0, %s68
      %s85 = sphi 0, %s69
      %s93 = sphi 0, %s95
      %s96 = sphi 0, %s93
      %s97 = sphi 0, %s96
      %s113 = sphi 0, %s97
      %s125 = sphi 0, %s127
      %s128 = sphi 0, %s125
      %s129 = sphi 0, %s128
      %s145 = sphi 0, %s129
      %s157 = sphi 0, %s159
      %s160 = sphi 0, %s157
      %s161 = sphi 0, %s160
      %s177 = sphi 0, %s161
      %s189 = sphi 0, %s191
      %s192 = sphi 0, %s189
      %s193 = sphi 0, %s192
      %s209 = sphi 0, %s193
      %s221 = sphi 0, %s223
      %s224 = sphi 0, %s221
      %s225 = sphi 0, %s224
      %s241 = sphi 0, %s225
      %s249 = sphi 0, %s251
      %s252 = sphi 0, %s249
      %s253 = sphi 0, %s252
      %s269 = sphi 0, %s253
    $region4: #{tpu_custom_call.1} parent=1 // loop_header_branch
      %39 = sbr.rel (%p37) target = $region8
    $region5: #{tpu_custom_call.1} parent=1 // loop_body
      %s41 = ssub.s32 %s36, 1
      %s42 = ssub.s32 %s36, 2
      %s52 = sadd.s32 1, %s45
      %p53 = scmp.ge.s32.totalorder %s52, 2
      %s54 = scalar_select %p53, 0, %s52
      %s55 = sadd.s32 1, %s44
      %s56 = scalar_select %p53, %s55, %s44
      %p57 = scmp.ge.s32.totalorder %s56, 2
      %s58 = scalar_select %p57, 0, %s56
      %s59 = sadd.s32 1, %s43
      %s60 = scalar_select %p57, %s59, %s43
      %p61 = scmp.ge.s32.totalorder %s60, 3
      %s62 = scalar_select %p61, 0, %s60
      %s63 = ssub.s32 %s43, %s62
      %p64 = scmp.eq.s32.totalorder %s63, 0
      %s66 = sadd.s32 %s65, 1
      %s67 = scalar_select %p64, %s65, %s66
      %p70 = pneg %p64
      %p71 = scmp.eq.s32.totalorder %s36, 11
      %p72 = por %p70, %p71
      %p73 = scmp.ne.s32.totalorder %s65, %s68
      %p74 = scmp.eq.s32.totalorder %s36, 0
      %p75 = por %p73, %p74
      %p76 = scmp.ne.s32.totalorder %s65, %s68
      %p77 = scmp.eq.s32.totalorder %s41, 11
      %p78 = por %p76, %p77
      %p79 = scmp.ne.s32.totalorder %s68, %s69
      %p80 = scmp.eq.s32.totalorder %s41, 0
      %p81 = por %p79, %p80
      %p82 = scmp.ne.s32.totalorder %s68, %s69
      %p83 = scmp.eq.s32.totalorder %s42, 11
      %p84 = por %p82, %p83
      %p86 = scmp.ne.s32.totalorder %s69, %s85
      %p87 = scmp.eq.s32.totalorder %s42, 0
      %p88 = por %p86, %p87
      %s89 = ssub.s32 %s43, %s62
      %s90 = ssub.s32 %s45, %s54
      %s91 = sor.u32 %s89, %s90
      %p92 = scmp.eq.s32.totalorder %s91, 0
      %s94 = sadd.s32 %s93, 1
      %s95 = scalar_select %p92, %s93, %s94
      %p98 = pneg %p92
      %p99 = scmp.eq.s32.totalorder %s36, 11
      %p100 = por %p98, %p99
      %p101 = scmp.ne.s32.totalorder %s93, %s96
      %p102 = scmp.eq.s32.totalorder %s36, 0
      %p103 = por %p101, %p102
      %p104 = scmp.ne.s32.totalorder %s93, %s96
      %p105 = scmp.eq.s32.totalorder %s41, 11
      %p106 = por %p104, %p105
      %p107 = scmp.ne.s32.totalorder %s96, %s97
      %p108 = scmp.eq.s32.totalorder %s41, 0
      %p109 = por %p107, %p108
      %p110 = scmp.ne.s32.totalorder %s96, %s97
      %p111 = scmp.eq.s32.totalorder %s42, 11
      %p112 = por %p110, %p111
      %p114 = scmp.ne.s32.totalorder %s97, %s113
      %p115 = scmp.eq.s32.totalorder %s42, 0
      %p116 = por %p114, %p115
      %s117 = sld [smem:[#allocation5 + %s43]]
      %s118 = smul.u32 %s117, %s45
      %s119 = sld [smem:[#allocation5 + %s62]]
      %s120 = smul.u32 %s119, %s54
      %s121 = ssub.s32 %s118, %s120
      %s122 = ssub.s32 %s44, %s58
      %s123 = sor.u32 %s121, %s122
      %p124 = scmp.eq.s32.totalorder %s123, 0
      %s126 = sadd.s32 %s125, 1
      %s127 = scalar_select %p124, %s125, %s126
      %p130 = pneg %p124
      %p131 = scmp.eq.s32.totalorder %s36, 11
      %p132 = por %p130, %p131
      %p133 = scmp.ne.s32.totalorder %s125, %s128
      %p134 = scmp.eq.s32.totalorder %s36, 0
      %p135 = por %p133, %p134
      %p136 = scmp.ne.s32.totalorder %s125, %s128
      %p137 = scmp.eq.s32.totalorder %s41, 11
      %p138 = por %p136, %p137
      %p139 = scmp.ne.s32.totalorder %s128, %s129
      %p140 = scmp.eq.s32.totalorder %s41, 0
      %p141 = por %p139, %p140
      %p142 = scmp.ne.s32.totalorder %s128, %s129
      %p143 = scmp.eq.s32.totalorder %s42, 11
      %p144 = por %p142, %p143
      %p146 = scmp.ne.s32.totalorder %s129, %s145
      %p147 = scmp.eq.s32.totalorder %s42, 0
      %p148 = por %p146, %p147
      %s149 = sld [smem:[#allocation5 + %s43]]
      %s150 = smul.u32 %s149, %s45
      %s151 = sld [smem:[#allocation5 + %s62]]
      %s152 = smul.u32 %s151, %s54
      %s153 = ssub.s32 %s150, %s152
      %s154 = ssub.s32 %s44, %s58
      %s155 = sor.u32 %s153, %s154
      %p156 = scmp.eq.s32.totalorder %s155, 0
      %s158 = sadd.s32 %s157, 1
      %s159 = scalar_select %p156, %s157, %s158
      %p162 = pneg %p156
      %p163 = scmp.eq.s32.totalorder %s36, 11
      %p164 = por %p162, %p163
      %p165 = scmp.ne.s32.totalorder %s157, %s160
      %p166 = scmp.eq.s32.totalorder %s36, 0
      %p167 = por %p165, %p166
      %p168 = scmp.ne.s32.totalorder %s157, %s160
      %p169 = scmp.eq.s32.totalorder %s41, 11
      %p170 = por %p168, %p169
      %p171 = scmp.ne.s32.totalorder %s160, %s161
      %p172 = scmp.eq.s32.totalorder %s41, 0
      %p173 = por %p171, %p172
      %p174 = scmp.ne.s32.totalorder %s160, %s161
      %p175 = scmp.eq.s32.totalorder %s42, 11
      %p176 = por %p174, %p175
      %p178 = scmp.ne.s32.totalorder %s161, %s177
      %p179 = scmp.eq.s32.totalorder %s42, 0
      %p180 = por %p178, %p179
      %s181 = sld [smem:[#allocation6 + %s43]]
      %s182 = smul.u32 %s181, %s45
      %s183 = sld [smem:[#allocation6 + %s62]]
      %s184 = smul.u32 %s183, %s54
      %s185 = ssub.s32 %s182, %s184
      %s186 = ssub.s32 %s44, %s58
      %s187 = sor.u32 %s185, %s186
      %p188 = scmp.eq.s32.totalorder %s187, 0
      %s190 = sadd.s32 %s189, 1
      %s191 = scalar_select %p188, %s189, %s190
      %p194 = pneg %p188
      %p195 = scmp.eq.s32.totalorder %s36, 11
      %p196 = por %p194, %p195
      %p197 = scmp.ne.s32.totalorder %s189, %s192
      %p198 = scmp.eq.s32.totalorder %s36, 0
      %p199 = por %p197, %p198
      %p200 = scmp.ne.s32.totalorder %s189, %s192
      %p201 = scmp.eq.s32.totalorder %s41, 11
      %p202 = por %p200, %p201
      %p203 = scmp.ne.s32.totalorder %s192, %s193
      %p204 = scmp.eq.s32.totalorder %s41, 0
      %p205 = por %p203, %p204
      %p206 = scmp.ne.s32.totalorder %s192, %s193
      %p207 = scmp.eq.s32.totalorder %s42, 11
      %p208 = por %p206, %p207
      %p210 = scmp.ne.s32.totalorder %s193, %s209
      %p211 = scmp.eq.s32.totalorder %s42, 0
      %p212 = por %p210, %p211
      %s213 = sld [smem:[#allocation6 + %s43]]
      %s214 = smul.u32 %s213, %s45
      %s215 = sld [smem:[#allocation6 + %s62]]
      %s216 = smul.u32 %s215, %s54
      %s217 = ssub.s32 %s214, %s216
      %s218 = ssub.s32 %s44, %s58
      %s219 = sor.u32 %s217, %s218
      %p220 = scmp.eq.s32.totalorder %s219, 0
      %s222 = sadd.s32 %s221, 1
      %s223 = scalar_select %p220, %s221, %s222
      %p226 = pneg %p220
      %p227 = scmp.eq.s32.totalorder %s36, 11
      %p228 = por %p226, %p227
      %p229 = scmp.ne.s32.totalorder %s221, %s224
      %p230 = scmp.eq.s32.totalorder %s36, 0
      %p231 = por %p229, %p230
      %p232 = scmp.ne.s32.totalorder %s221, %s224
      %p233 = scmp.eq.s32.totalorder %s41, 11
      %p234 = por %p232, %p233
      %p235 = scmp.ne.s32.totalorder %s224, %s225
      %p236 = scmp.eq.s32.totalorder %s41, 0
      %p237 = por %p235, %p236
      %p238 = scmp.ne.s32.totalorder %s224, %s225
      %p239 = scmp.eq.s32.totalorder %s42, 11
      %p240 = por %p238, %p239
      %p242 = scmp.ne.s32.totalorder %s225, %s241
      %p243 = scmp.eq.s32.totalorder %s42, 0
      %p244 = por %p242, %p243
      %s245 = ssub.s32 %s43, %s62
      %s246 = ssub.s32 %s44, %s58
      %s247 = sor.u32 %s245, %s246
      %p248 = scmp.eq.s32.totalorder %s247, 0
      %s250 = sadd.s32 %s249, 1
      %s251 = scalar_select %p248, %s249, %s250
      %p254 = pneg %p248
      %p255 = scmp.eq.s32.totalorder %s36, 11
      %p256 = por %p254, %p255
      %p257 = scmp.ne.s32.totalorder %s249, %s252
      %p258 = scmp.eq.s32.totalorder %s36, 0
      %p259 = por %p257, %p258
      %p260 = scmp.ne.s32.totalorder %s249, %s252
      %p261 = scmp.eq.s32.totalorder %s41, 11
      %p262 = por %p260, %p261
      %p263 = scmp.ne.s32.totalorder %s252, %s253
      %p264 = scmp.eq.s32.totalorder %s41, 0
      %p265 = por %p263, %p264
      %p266 = scmp.ne.s32.totalorder %s252, %s253
      %p267 = scmp.eq.s32.totalorder %s42, 11
      %p268 = por %p266, %p267
      %p270 = scmp.ne.s32.totalorder %s253, %s269
      %p271 = scmp.eq.s32.totalorder %s42, 0
      %p272 = por %p270, %p271
      %p273 = scmp.le.s32.totalorder 1, %s36
      %p274 = scmp.lt.s32.totalorder %s36, 13
      %p275 = pnand %p273, %p274
      %p276 = pneg %p275
      // Predicated region
      $region9: #{tpu_custom_call.1} parent=5 // pred_check
        _
      $region10: #{tpu_custom_call.1} parent=5 // pred_check_branch
        %278 = sbr.rel (%p275) target = $region12
      $region11: #{tpu_custom_call.1} parent=5 // pred_region
        %s279 = ssub.s32 %s36, 1
      $region12: #{tpu_custom_call.1} parent=5 // pred_fallthru
        _
      %p280 = scmp.lt.s32.totalorder %s36, 12
      // Predicated region
      $region13: #{tpu_custom_call.1} parent=5 // pred_check
        %p281 = pneg %p280
      $region14: #{tpu_custom_call.1} parent=5 // pred_check_branch
        %283 = sbr.rel (%p281) target = $region16
      $region15: #{tpu_custom_call.1} parent=5 // pred_region
        // Predicated region
        $region17: #{tpu_custom_call.1} parent=15 // pred_check
          %p284 = pneg %p75
        $region18: #{tpu_custom_call.1} parent=15 // pred_check_branch
          %286 = sbr.rel (%p284) target = $region20
        $region19: #{tpu_custom_call.1} parent=15 // pred_region
          %s287 = smul.u32 8, %s43
          %p288 = scmp.lt.s32.totalorder %s287, 23
          %s289 = scalar_select %p288, %s287, 23
          %s290 = smul.addr %s289, 4
          %s291 = scalar_lea.vmem %s2, %s290
          %s292 = smul.u32 8, %s43
        $region20: #{tpu_custom_call.1} parent=15 // pred_fallthru
          _
        // Predicated region
        $region21: #{tpu_custom_call.1} parent=15 // pred_check
          %p293 = pneg %p103
        $region22: #{tpu_custom_call.1} parent=15 // pred_check_branch
          %295 = sbr.rel (%p293) target = $region24
        $region23: #{tpu_custom_call.1} parent=15 // pred_region
          %s296 = sand.u32 %s93, 1
          %s297 = scalar_lea.sflag [#allocation8], %s296
          %s298 = sand.u32 %s93, 1
          %s299 = smul.addr %s298, 64
          %s300 = scalar_lea.vmem [#allocation7], %s299
          %s301 = smul.u32 8, %s43
          %s302 = smul.u32 2, %s45
          %s304 = ssub.s32 1024, 1024
          %305 = vsyncadd %s297, %s304
          %s306 = smul.addr %s301, 4
          %s307 = sadd.s32 %s302, %s306
          %s308 = smul.addr %s307, 64
          %s309 = scalar_lea.hbm %s3, %s308
          %s310 = sshll.u32 %s300, 4
          %s311 = int_to_ptr.vmem [resolvable:$true] %s310
          %316 = dma.hbm_to_vmem [thread:$0]  %s309, 1024, %s311, %s297, 256, 128, 8
        $region24: #{tpu_custom_call.1} parent=15 // pred_fallthru
          _
        // Predicated region
        $region25: #{tpu_custom_call.1} parent=15 // pred_check
          %p317 = pneg %p135
        $region26: #{tpu_custom_call.1} parent=15 // pred_check_branch
          %319 = sbr.rel (%p317) target = $region28
        $region27: #{tpu_custom_call.1} parent=15 // pred_region
          %s320 = sand.u32 %s36, 1
          %s321 = scalar_lea.sflag [#allocation11], %s320
          %s322 = sand.u32 %s125, 1
          %s323 = smul.addr %s322, 512
          %s324 = scalar_lea.vmem [#allocation10], %s323
          %s325 = sld [smem:[#allocation5 + %s43]]
          %s326 = smul.u32 %s325, %s45
          %s327 = smul.u32 32, %s326
          %s328 = smul.u32 4, %s44
          %s330 = ssub.s32 8192, 8192
          %331 = vsyncadd %s321, %s330
          %s332 = smul.addr %s327, 8
          %s333 = sadd.s32 %s328, %s332
          %s334 = smul.addr %s333, 64
          %s335 = scalar_lea.hbm %s4, %s334
          %s336 = sshll.u32 %s324, 4
          %s337 = int_to_ptr.vmem [resolvable:$true] %s336
          %342 = dma.hbm_to_vmem [thread:$0]  %s335, 8192, %s337, %s321, 512, 256, 16
        $region28: #{tpu_custom_call.1} parent=15 // pred_fallthru
          _
        // Predicated region
        $region29: #{tpu_custom_call.1} parent=15 // pred_check
          %p343 = pneg %p167
        $region30: #{tpu_custom_call.1} parent=15 // pred_check_branch
          %345 = sbr.rel (%p343) target = $region32
        $region31: #{tpu_custom_call.1} parent=15 // pred_region
          %s346 = sand.u32 %s36, 1
          %s347 = scalar_lea.sflag [#allocation11], %s346
          %s348 = sand.u32 %s157, 1
          %s349 = smul.addr %s348, 512
          %s350 = scalar_lea.vmem [#allocation12], %s349
          %s351 = sld [smem:[#allocation5 + %s43]]
          %s352 = smul.u32 %s351, %s45
          %s353 = smul.u32 32, %s352
          %s354 = smul.u32 4, %s44
          %s356 = ssub.s32 8192, 8192
          %357 = vsyncadd %s347, %s356
          %s358 = smul.addr %s353, 8
          %s359 = sadd.s32 %s354, %s358
          %s360 = smul.addr %s359, 64
          %s361 = scalar_lea.hbm %s5, %s360
          %s362 = sshll.u32 %s350, 4
          %s363 = int_to_ptr.vmem [resolvable:$true] %s362
          %368 = dma.hbm_to_vmem [thread:$0]  %s361, 8192, %s363, %s347, 512, 256, 16
        $region32: #{tpu_custom_call.1} parent=15 // pred_fallthru
          _
        // Predicated region
        $region33: #{tpu_custom_call.1} parent=15 // pred_check
          %p369 = pneg %p199
        $region34: #{tpu_custom_call.1} parent=15 // pred_check_branch
          %371 = sbr.rel (%p369) target = $region36
        $region35: #{tpu_custom_call.1} parent=15 // pred_region
          %s372 = sand.u32 %s36, 1
          %s373 = scalar_lea.sflag [#allocation14], %s372
          %s374 = sand.u32 %s189, 1
          %s375 = smul.addr %s374, 512
          %s376 = scalar_lea.vmem [#allocation13], %s375
          %s377 = sld [smem:[#allocation6 + %s43]]
          %s378 = smul.u32 %s377, %s45
          %s379 = smul.u32 32, %s378
          %s380 = smul.u32 4, %s44
          %s382 = ssub.s32 8192, 8192
          %383 = vsyncadd %s373, %s382
          %s384 = smul.addr %s379, 8
          %s385 = sadd.s32 %s380, %s384
          %s386 = smul.addr %s385, 64
          %s387 = scalar_lea.hbm %s6, %s386
          %s388 = sshll.u32 %s376, 4
          %s389 = int_to_ptr.vmem [resolvable:$true] %s388
          %394 = dma.hbm_to_vmem [thread:$0]  %s387, 8192, %s389, %s373, 512, 256, 16
        $region36: #{tpu_custom_call.1} parent=15 // pred_fallthru
          _
        // Predicated region
        $region37: #{tpu_custom_call.1} parent=15 // pred_check
          %p395 = pneg %p231
        $region38: #{tpu_custom_call.1} parent=15 // pred_check_branch
          %397 = sbr.rel (%p395) target = $region40
        $region39: #{tpu_custom_call.1} parent=15 // pred_region
          %s398 = sand.u32 %s36, 1
          %s399 = scalar_lea.sflag [#allocation14], %s398
          %s400 = sand.u32 %s221, 1
          %s401 = smul.addr %s400, 512
          %s402 = scalar_lea.vmem [#allocation15], %s401
          %s403 = sld [smem:[#allocation6 + %s43]]
          %s404 = smul.u32 %s403, %s45
          %s405 = smul.u32 32, %s404
          %s406 = smul.u32 4, %s44
          %s408 = ssub.s32 8192, 8192
          %409 = vsyncadd %s399, %s408
          %s410 = smul.addr %s405, 8
          %s411 = sadd.s32 %s406, %s410
          %s412 = smul.addr %s411, 64
          %s413 = scalar_lea.hbm %s7, %s412
          %s414 = sshll.u32 %s402, 4
          %s415 = int_to_ptr.vmem [resolvable:$true] %s414
          %420 = dma.hbm_to_vmem [thread:$0]  %s413, 8192, %s415, %s399, 512, 256, 16
        $region40: #{tpu_custom_call.1} parent=15 // pred_fallthru
          _
      $region16: #{tpu_custom_call.1} parent=5 // pred_fallthru
        _
      %p421 = scmp.le.s32.totalorder 1, %s36
      %p422 = scmp.lt.s32.totalorder %s36, 13
      %p423 = pnand %p421, %p422
      %p424 = pneg %p423
      // Predicated region
      $region41: #{tpu_custom_call.1} parent=5 // pred_check
        _
      $region42: #{tpu_custom_call.1} parent=5 // pred_check_branch
        %426 = sbr.rel (%p423) target = $region44
      $region43: #{tpu_custom_call.1} parent=5 // pred_region
        %s427 = ssub.s32 %s36, 1
        %s428 = sand.u32 %s96, 1
        %s429 = scalar_lea.sflag [#allocation8], %s428
        %s430 = sand.u32 %s96, 1
        %s431 = smul.addr %s430, 64
        %s432 = scalar_lea.vmem [#allocation7], %s431
        // Predicated region
        $region45: #{tpu_custom_call.1} parent=43 // pred_check
          %p433 = pneg %p109
        $region46: #{tpu_custom_call.1} parent=43 // pred_check_branch
          %435 = sbr.rel (%p433) target = $region48
        $region47: #{tpu_custom_call.1} parent=43 // pred_region
          %436 = dma.done %s429, 1024
        $region48: #{tpu_custom_call.1} parent=43 // pred_fallthru
          _
        %s437 = sand.u32 %s41, 1
        %s438 = scalar_lea.sflag [#allocation11], %s437
        %s439 = sand.u32 %s128, 1
        %s440 = smul.addr %s439, 512
        %s441 = scalar_lea.vmem [#allocation10], %s440
        // Predicated region
        $region49: #{tpu_custom_call.1} parent=43 // pred_check
          %p442 = pneg %p141
        $region50: #{tpu_custom_call.1} parent=43 // pred_check_branch
          %444 = sbr.rel (%p442) target = $region52
        $region51: #{tpu_custom_call.1} parent=43 // pred_region
          %445 = dma.done %s438, 8192
        $region52: #{tpu_custom_call.1} parent=43 // pred_fallthru
          _
        %s446 = sand.u32 %s41, 1
        %s447 = scalar_lea.sflag [#allocation11], %s446
        %s448 = sand.u32 %s160, 1
        %s449 = smul.addr %s448, 512
        %s450 = scalar_lea.vmem [#allocation12], %s449
        // Predicated region
        $region53: #{tpu_custom_call.1} parent=43 // pred_check
          %p451 = pneg %p173
        $region54: #{tpu_custom_call.1} parent=43 // pred_check_branch
          %453 = sbr.rel (%p451) target = $region56
        $region55: #{tpu_custom_call.1} parent=43 // pred_region
          %454 = dma.done %s447, 8192
        $region56: #{tpu_custom_call.1} parent=43 // pred_fallthru
          _
        %s455 = sand.u32 %s41, 1
        %s456 = scalar_lea.sflag [#allocation14], %s455
        %s457 = sand.u32 %s192, 1
        %s458 = smul.addr %s457, 512
        %s459 = scalar_lea.vmem [#allocation13], %s458
        // Predicated region
        $region57: #{tpu_custom_call.1} parent=43 // pred_check
          %p460 = pneg %p205
        $region58: #{tpu_custom_call.1} parent=43 // pred_check_branch
          %462 = sbr.rel (%p460) target = $region60
        $region59: #{tpu_custom_call.1} parent=43 // pred_region
          %463 = dma.done %s456, 8192
        $region60: #{tpu_custom_call.1} parent=43 // pred_fallthru
          _
        %s464 = sand.u32 %s41, 1
        %s465 = scalar_lea.sflag [#allocation14], %s464
        %s466 = sand.u32 %s224, 1
        %s467 = smul.addr %s466, 512
        %s468 = scalar_lea.vmem [#allocation15], %s467
        // Predicated region
        $region61: #{tpu_custom_call.1} parent=43 // pred_check
          %p469 = pneg %p237
        $region62: #{tpu_custom_call.1} parent=43 // pred_check_branch
          %471 = sbr.rel (%p469) target = $region64
        $region63: #{tpu_custom_call.1} parent=43 // pred_region
          %472 = dma.done %s465, 8192
        $region64: #{tpu_custom_call.1} parent=43 // pred_fallthru
          _
        %s473 = smul.u32 8, %s46
        %p474 = scmp.lt.s32.totalorder %s473, 23
        %s475 = scalar_select %p474, %s473, 23
        %s476 = smul.addr %s475, 4
        %s477 = scalar_lea.vmem %s2, %s476
        %p478 = pneg %p81
        %p479 = pneg %p78
        %s480 = sand.u32 %s96, 1
        %s481 = scalar_lea.sflag [#allocation8], %s480
        %s482 = sand.u32 %s96, 1
        %s483 = smul.addr %s482, 64
        %s484 = scalar_lea.vmem [#allocation7], %s483
        %p485 = pneg %p109
        %p486 = pneg %p106
        %s487 = sand.u32 %s41, 1
        %s488 = scalar_lea.sflag [#allocation11], %s487
        %s489 = sand.u32 %s128, 1
        %s490 = smul.addr %s489, 512
        %s491 = scalar_lea.vmem [#allocation10], %s490
        %p492 = pneg %p141
        %p493 = pneg %p138
        %s494 = sand.u32 %s41, 1
        %s495 = scalar_lea.sflag [#allocation11], %s494
        %s496 = sand.u32 %s160, 1
        %s497 = smul.addr %s496, 512
        %s498 = scalar_lea.vmem [#allocation12], %s497
        %p499 = pneg %p173
        %p500 = pneg %p170
        %s501 = sand.u32 %s41, 1
        %s502 = scalar_lea.sflag [#allocation14], %s501
        %s503 = sand.u32 %s192, 1
        %s504 = smul.addr %s503, 512
        %s505 = scalar_lea.vmem [#allocation13], %s504
        %p506 = pneg %p205
        %p507 = pneg %p202
        %s508 = sand.u32 %s41, 1
        %s509 = scalar_lea.sflag [#allocation14], %s508
        %s510 = sand.u32 %s224, 1
        %s511 = smul.addr %s510, 512
        %s512 = scalar_lea.vmem [#allocation15], %s511
        %p513 = pneg %p237
        %p514 = pneg %p234
        %p515 = pneg %p265
        %p516 = pneg %p262
        %s517 = sand.u32 %s252, 1
        %s518 = scalar_lea.sflag [#allocation9], %s517
        %s519 = sand.u32 %s252, 1
        %s520 = smul.addr %s519, 128
        %s521 = scalar_lea.vmem [#allocation16], %s520
        %s522 = smul.u32 8, %s46
        %p523 = scmp.lt.s32.totalorder %s522, 23
        %s524 = scalar_select %p523, %s522, 23
        %s525 = smul.addr %s524, 4
        %s526 = scalar_lea.vmem %s2, %s525
        %s527 = smul.u32 8, %s46
        %s528 = smul.u32 8, %s46
        %s529 = smul.u32 2, %s48
        %s530 = sld [smem:[#allocation5 + %s46]]
        %s531 = smul.u32 %s530, %s48
        %s532 = smul.u32 32, %s531
        %s533 = smul.u32 4, %s47
        %s534 = sld [smem:[#allocation5 + %s46]]
        %s535 = smul.u32 %s534, %s48
        %s536 = smul.u32 32, %s535
        %s537 = smul.u32 4, %s47
        %s538 = sld [smem:[#allocation6 + %s46]]
        %s539 = smul.u32 %s538, %s48
        %s540 = smul.u32 32, %s539
        %s541 = smul.u32 4, %s47
        %s542 = sld [smem:[#allocation6 + %s46]]
        %s543 = smul.u32 %s542, %s48
        %s544 = smul.u32 32, %s543
        %s545 = smul.u32 4, %s47
        %s546 = smul.u32 8, %s46
        %s547 = smul.u32 4, %s47
        %p549 = scmp.eq.s32.totalorder %s48, 0
        // Predicated region
        $region65: #{tpu_custom_call.1} parent=43 // pred_check
          %p550 = pneg %p549
        $region66: #{tpu_custom_call.1} parent=43 // pred_check_branch
          %552 = sbr.rel (%p550) target = $region68
        $region67: #{tpu_custom_call.1} parent=43 // pred_region
          %553 = vst [vmem:[#allocation2] sm:$0xff] 0.0
          %554 = vst [vmem:[#allocation2 + $0x8] sm:$0xff] 0.0
          %555 = vst [vmem:[#allocation2 + $0x10] sm:$0xff] 0.0
          %556 = vst [vmem:[#allocation2 + $0x18] sm:$0xff] 0.0
          %557 = vst [vmem:[#allocation2 + $0x20] sm:$0xff] 0.0
          %558 = vst [vmem:[#allocation2 + $0x28] sm:$0xff] 0.0
          %559 = vst [vmem:[#allocation2 + $0x30] sm:$0xff] 0.0
          %560 = vst [vmem:[#allocation2 + $0x38] sm:$0xff] 0.0
          %561 = vst [vmem:[#allocation2 + $0x40] sm:$0xff] 0.0
          %562 = vst [vmem:[#allocation2 + $0x48] sm:$0xff] 0.0
          %563 = vst [vmem:[#allocation2 + $0x50] sm:$0xff] 0.0
          %564 = vst [vmem:[#allocation2 + $0x58] sm:$0xff] 0.0
          %565 = vst [vmem:[#allocation2 + $0x60] sm:$0xff] 0.0
          %566 = vst [vmem:[#allocation2 + $0x68] sm:$0xff] 0.0
          %567 = vst [vmem:[#allocation2 + $0x70] sm:$0xff] 0.0
          %568 = vst [vmem:[#allocation2 + $0x78] sm:$0xff] 0.0
          %569 = vst [vmem:[#allocation2 + $0x80] sm:$0xff] 0.0
          %570 = vst [vmem:[#allocation2 + $0x88] sm:$0xff] 0.0
          %571 = vst [vmem:[#allocation2 + $0x90] sm:$0xff] 0.0
          %572 = vst [vmem:[#allocation2 + $0x98] sm:$0xff] 0.0
          %573 = vst [vmem:[#allocation2 + $0xa0] sm:$0xff] 0.0
          %574 = vst [vmem:[#allocation2 + $0xa8] sm:$0xff] 0.0
          %575 = vst [vmem:[#allocation2 + $0xb0] sm:$0xff] 0.0
          %576 = vst [vmem:[#allocation2 + $0xb8] sm:$0xff] 0.0
          %577 = vst [vmem:[#allocation2 + $0xc0] sm:$0xff] 0.0
          %578 = vst [vmem:[#allocation2 + $0xc8] sm:$0xff] 0.0
          %579 = vst [vmem:[#allocation2 + $0xd0] sm:$0xff] 0.0
          %580 = vst [vmem:[#allocation2 + $0xd8] sm:$0xff] 0.0
          %581 = vst [vmem:[#allocation2 + $0xe0] sm:$0xff] 0.0
          %582 = vst [vmem:[#allocation2 + $0xe8] sm:$0xff] 0.0
          %583 = vst [vmem:[#allocation2 + $0xf0] sm:$0xff] 0.0
          %584 = vst [vmem:[#allocation2 + $0xf8] sm:$0xff] 0.0
          %585 = vst [vmem:[#allocation3] sm:$0xff] 0.0
          %586 = vst [vmem:[#allocation3 + $0x8] sm:$0xff] 0.0
          %587 = vst [vmem:[#allocation3 + $0x10] sm:$0xff] 0.0
          %588 = vst [vmem:[#allocation3 + $0x18] sm:$0xff] 0.0
          %589 = vst [vmem:[#allocation3 + $0x20] sm:$0xff] 0.0
          %590 = vst [vmem:[#allocation3 + $0x28] sm:$0xff] 0.0
          %591 = vst [vmem:[#allocation3 + $0x30] sm:$0xff] 0.0
          %592 = vst [vmem:[#allocation3 + $0x38] sm:$0xff] 0.0
          %593 = vst [vmem:[#allocation3 + $0x40] sm:$0xff] 0.0
          %594 = vst [vmem:[#allocation3 + $0x48] sm:$0xff] 0.0
          %595 = vst [vmem:[#allocation3 + $0x50] sm:$0xff] 0.0
          %596 = vst [vmem:[#allocation3 + $0x58] sm:$0xff] 0.0
          %597 = vst [vmem:[#allocation3 + $0x60] sm:$0xff] 0.0
          %598 = vst [vmem:[#allocation3 + $0x68] sm:$0xff] 0.0
          %599 = vst [vmem:[#allocation3 + $0x70] sm:$0xff] 0.0
          %600 = vst [vmem:[#allocation3 + $0x78] sm:$0xff] 0.0
          %601 = vst [vmem:[#allocation3 + $0x80] sm:$0xff] 0.0
          %602 = vst [vmem:[#allocation3 + $0x88] sm:$0xff] 0.0
          %603 = vst [vmem:[#allocation3 + $0x90] sm:$0xff] 0.0
          %604 = vst [vmem:[#allocation3 + $0x98] sm:$0xff] 0.0
          %605 = vst [vmem:[#allocation3 + $0xa0] sm:$0xff] 0.0
          %606 = vst [vmem:[#allocation3 + $0xa8] sm:$0xff] 0.0
          %607 = vst [vmem:[#allocation3 + $0xb0] sm:$0xff] 0.0
          %608 = vst [vmem:[#allocation3 + $0xb8] sm:$0xff] 0.0
          %609 = vst [vmem:[#allocation3 + $0xc0] sm:$0xff] 0.0
          %610 = vst [vmem:[#allocation3 + $0xc8] sm:$0xff] 0.0
          %611 = vst [vmem:[#allocation3 + $0xd0] sm:$0xff] 0.0
          %612 = vst [vmem:[#allocation3 + $0xd8] sm:$0xff] 0.0
          %613 = vst [vmem:[#allocation3 + $0xe0] sm:$0xff] 0.0
          %614 = vst [vmem:[#allocation3 + $0xe8] sm:$0xff] 0.0
          %615 = vst [vmem:[#allocation3 + $0xf0] sm:$0xff] 0.0
          %616 = vst [vmem:[#allocation3 + $0xf8] sm:$0xff] 0.0
        $region68: #{tpu_custom_call.1} parent=43 // pred_fallthru
          _
        %v617 = vld [vmem:[%s432] sm:$0xff]
        %v618 = vld [vmem:[%s432 + $0x8] sm:$0xff]
        %v619 = vld [vmem:[%s432 + $0x10] sm:$0xff]
        %v620 = vld [vmem:[%s432 + $0x18] sm:$0xff]
        %v621 = vld [vmem:[%s432 + $0x20] sm:$0xff]
        %v622 = vld [vmem:[%s432 + $0x28] sm:$0xff]
        %v623 = vld [vmem:[%s432 + $0x30] sm:$0xff]
        %v624 = vld [vmem:[%s432 + $0x38] sm:$0xff]
        %v625 = vld [vmem:[%s526] sm:$0xf]
        %v626 = vld [vmem:[%s526 + $0x4] sm:$0xf]
        %v627 = vld [vmem:[%s526 + $0x8] sm:$0xf]
        %v628 = vld [vmem:[%s526 + $0xc] sm:$0xf]
        %v629 = vld [vmem:[%s526 + $0x10] sm:$0xf]
        %v630 = vld [vmem:[%s526 + $0x14] sm:$0xf]
        %v631 = vld [vmem:[%s526 + $0x18] sm:$0xf]
        %v632 = vld [vmem:[%s526 + $0x1c] sm:$0xf]
        %s633 = sld [smem:[#allocation5 + %s46]]
        %p634 = scmp.ne.s32.totalorder %s633, 0
        // Predicated region
        $region69: #{tpu_custom_call.1} parent=43 // pred_check
          %p635 = pneg %p634
        $region70: #{tpu_custom_call.1} parent=43 // pred_check_branch
          %637 = sbr.rel (%p635) target = $region72
        $region71: #{tpu_custom_call.1} parent=43 // pred_region
          %v638 = vsub.bf16 1065369472, %v625
          %v639 = vsub.bf16 1065369472, %v626
          %v640 = vsub.bf16 1065369472, %v627
          %v641 = vsub.bf16 1065369472, %v628
          %v642 = vsub.bf16 1065369472, %v629
          %v643 = vsub.bf16 1065369472, %v630
          %v644 = vsub.bf16 1065369472, %v631
          %v645 = vsub.bf16 1065369472, %v632
          %647 = vset.pattern.permute.xlu0 0
          %648 = vperm.xlu0 %647, %v638
          %v649 = vpop.permute.xlu0 %648
          %v652 = vunpack.c.l.s4 839922192
          %v653 = vunpack.c.0.s8 %v652
          %v654 = vlaneseq
          %v655 = vshrl.u32 %v654, 7
          %v656 = vsub.s32 %v653, %v655
          %v657 = vrot.slane %v649, %v656
          %659 = vset.pattern.permute.xlu0 0
          %660 = vperm.xlu0 %659, %v639
          %v661 = vpop.permute.xlu0 %660
          %v664 = vunpack.c.l.s4 839922192
          %v665 = vunpack.c.0.s8 %v664
          %v666 = vlaneseq
          %v667 = vshrl.u32 %v666, 7
          %v668 = vsub.s32 %v665, %v667
          %v669 = vrot.slane %v661, %v668
          %671 = vset.pattern.permute.xlu0 0
          %672 = vperm.xlu0 %671, %v640
          %v673 = vpop.permute.xlu0 %672
          %v676 = vunpack.c.l.s4 839922192
          %v677 = vunpack.c.0.s8 %v676
          %v678 = vlaneseq
          %v679 = vshrl.u32 %v678, 7
          %v680 = vsub.s32 %v677, %v679
          %v681 = vrot.slane %v673, %v680
          %683 = vset.pattern.permute.xlu0 0
          %684 = vperm.xlu0 %683, %v641
          %v685 = vpop.permute.xlu0 %684
          %v688 = vunpack.c.l.s4 839922192
          %v689 = vunpack.c.0.s8 %v688
          %v690 = vlaneseq
          %v691 = vshrl.u32 %v690, 7
          %v692 = vsub.s32 %v689, %v691
          %v693 = vrot.slane %v685, %v692
          %695 = vset.pattern.permute.xlu0 0
          %696 = vperm.xlu0 %695, %v642
          %v697 = vpop.permute.xlu0 %696
          %v700 = vunpack.c.l.s4 839922192
          %v701 = vunpack.c.0.s8 %v700
          %v702 = vlaneseq
          %v703 = vshrl.u32 %v702, 7
          %v704 = vsub.s32 %v701, %v703
          %v705 = vrot.slane %v697, %v704
          %707 = vset.pattern.permute.xlu0 0
          %708 = vperm.xlu0 %707, %v643
          %v709 = vpop.permute.xlu0 %708
          %v712 = vunpack.c.l.s4 839922192
          %v713 = vunpack.c.0.s8 %v712
          %v714 = vlaneseq
          %v715 = vshrl.u32 %v714, 7
          %v716 = vsub.s32 %v713, %v715
          %v717 = vrot.slane %v709, %v716
          %719 = vset.pattern.permute.xlu0 0
          %720 = vperm.xlu0 %719, %v644
          %v721 = vpop.permute.xlu0 %720
          %v724 = vunpack.c.l.s4 839922192
          %v725 = vunpack.c.0.s8 %v724
          %v726 = vlaneseq
          %v727 = vshrl.u32 %v726, 7
          %v728 = vsub.s32 %v725, %v727
          %v729 = vrot.slane %v721, %v728
          %731 = vset.pattern.permute.xlu0 0
          %732 = vperm.xlu0 %731, %v645
          %v733 = vpop.permute.xlu0 %732
          %v736 = vunpack.c.l.s4 839922192
          %v737 = vunpack.c.0.s8 %v736
          %v738 = vlaneseq
          %v739 = vshrl.u32 %v738, 7
          %v740 = vsub.s32 %v737, %v739
          %v741 = vrot.slane %v733, %v740
          %v742 = vmul.bf16 %v617, %v657
          %v743 = vmul.bf16 %v618, %v669
          %v744 = vmul.bf16 %v619, %v681
          %v745 = vmul.bf16 %v620, %v693
          %v746 = vmul.bf16 %v621, %v705
          %v747 = vmul.bf16 %v622, %v717
          %v748 = vmul.bf16 %v623, %v729
          %v749 = vmul.bf16 %v624, %v741
          %v750 = vld [vmem:[#allocation2] sm:$0xff]
          %v751 = vld [vmem:[#allocation2 + $0x8] sm:$0xff]
          %v752 = vld [vmem:[#allocation2 + $0x10] sm:$0xff]
          %v753 = vld [vmem:[#allocation2 + $0x18] sm:$0xff]
          %v754 = vld [vmem:[#allocation2 + $0x20] sm:$0xff]
          %v755 = vld [vmem:[#allocation2 + $0x28] sm:$0xff]
          %v756 = vld [vmem:[#allocation2 + $0x30] sm:$0xff]
          %v757 = vld [vmem:[#allocation2 + $0x38] sm:$0xff]
          %v758 = vld [vmem:[#allocation2 + $0x40] sm:$0xff]
          %v759 = vld [vmem:[#allocation2 + $0x48] sm:$0xff]
          %v760 = vld [vmem:[#allocation2 + $0x50] sm:$0xff]
          %v761 = vld [vmem:[#allocation2 + $0x58] sm:$0xff]
          %v762 = vld [vmem:[#allocation2 + $0x60] sm:$0xff]
          %v763 = vld [vmem:[#allocation2 + $0x68] sm:$0xff]
          %v764 = vld [vmem:[#allocation2 + $0x70] sm:$0xff]
          %v765 = vld [vmem:[#allocation2 + $0x78] sm:$0xff]
          %v766 = vld [vmem:[#allocation2 + $0x80] sm:$0xff]
          %v767 = vld [vmem:[#allocation2 + $0x88] sm:$0xff]
          %v768 = vld [vmem:[#allocation2 + $0x90] sm:$0xff]
          %v769 = vld [vmem:[#allocation2 + $0x98] sm:$0xff]
          %v770 = vld [vmem:[#allocation2 + $0xa0] sm:$0xff]
          %v771 = vld [vmem:[#allocation2 + $0xa8] sm:$0xff]
          %v772 = vld [vmem:[#allocation2 + $0xb0] sm:$0xff]
          %v773 = vld [vmem:[#allocation2 + $0xb8] sm:$0xff]
          %v774 = vld [vmem:[#allocation2 + $0xc0] sm:$0xff]
          %v775 = vld [vmem:[#allocation2 + $0xc8] sm:$0xff]
          %v776 = vld [vmem:[#allocation2 + $0xd0] sm:$0xff]
          %v777 = vld [vmem:[#allocation2 + $0xd8] sm:$0xff]
          %v778 = vld [vmem:[#allocation2 + $0xe0] sm:$0xff]
          %v779 = vld [vmem:[#allocation2 + $0xe8] sm:$0xff]
          %v780 = vld [vmem:[#allocation2 + $0xf0] sm:$0xff]
          %v781 = vld [vmem:[#allocation2 + $0xf8] sm:$0xff]
          %v782 = vld [vmem:[%s441] sm:$0xff]
          %v783 = vld [vmem:[%s441 + $0x8] sm:$0xff]
          %v784 = vld [vmem:[%s441 + $0x10] sm:$0xff]
          %v785 = vld [vmem:[%s441 + $0x18] sm:$0xff]
          %v786 = vld [vmem:[%s441 + $0x20] sm:$0xff]
          %v787 = vld [vmem:[%s441 + $0x28] sm:$0xff]
          %v788 = vld [vmem:[%s441 + $0x30] sm:$0xff]
          %v789 = vld [vmem:[%s441 + $0x38] sm:$0xff]
          %v790 = vld [vmem:[%s441 + $0x40] sm:$0xff]
          %v791 = vld [vmem:[%s441 + $0x48] sm:$0xff]
          %v792 = vld [vmem:[%s441 + $0x50] sm:$0xff]
          %v793 = vld [vmem:[%s441 + $0x58] sm:$0xff]
          %v794 = vld [vmem:[%s441 + $0x60] sm:$0xff]
          %v795 = vld [vmem:[%s441 + $0x68] sm:$0xff]
          %v796 = vld [vmem:[%s441 + $0x70] sm:$0xff]
          %v797 = vld [vmem:[%s441 + $0x78] sm:$0xff]
          %v798 = vld [vmem:[%s441 + $0x80] sm:$0xff]
          %v799 = vld [vmem:[%s441 + $0x88] sm:$0xff]
          %v800 = vld [vmem:[%s441 + $0x90] sm:$0xff]
          %v801 = vld [vmem:[%s441 + $0x98] sm:$0xff]
          %v802 = vld [vmem:[%s441 + $0xa0] sm:$0xff]
          %v803 = vld [vmem:[%s441 + $0xa8] sm:$0xff]
          %v804 = vld [vmem:[%s441 + $0xb0] sm:$0xff]
          %v805 = vld [vmem:[%s441 + $0xb8] sm:$0xff]
          %v806 = vld [vmem:[%s441 + $0xc0] sm:$0xff]
          %v807 = vld [vmem:[%s441 + $0xc8] sm:$0xff]
          %v808 = vld [vmem:[%s441 + $0xd0] sm:$0xff]
          %v809 = vld [vmem:[%s441 + $0xd8] sm:$0xff]
          %v810 = vld [vmem:[%s441 + $0xe0] sm:$0xff]
          %v811 = vld [vmem:[%s441 + $0xe8] sm:$0xff]
          %v812 = vld [vmem:[%s441 + $0xf0] sm:$0xff]
          %v813 = vld [vmem:[%s441 + $0xf8] sm:$0xff]
          %v814 = vld [vmem:[%s441 + $0x100] sm:$0xff]
          %v815 = vld [vmem:[%s441 + $0x108] sm:$0xff]
          %v816 = vld [vmem:[%s441 + $0x110] sm:$0xff]
          %v817 = vld [vmem:[%s441 + $0x118] sm:$0xff]
          %v818 = vld [vmem:[%s441 + $0x120] sm:$0xff]
          %v819 = vld [vmem:[%s441 + $0x128] sm:$0xff]
          %v820 = vld [vmem:[%s441 + $0x130] sm:$0xff]
          %v821 = vld [vmem:[%s441 + $0x138] sm:$0xff]
          %v822 = vld [vmem:[%s441 + $0x140] sm:$0xff]
          %v823 = vld [vmem:[%s441 + $0x148] sm:$0xff]
          %v824 = vld [vmem:[%s441 + $0x150] sm:$0xff]
          %v825 = vld [vmem:[%s441 + $0x158] sm:$0xff]
          %v826 = vld [vmem:[%s441 + $0x160] sm:$0xff]
          %v827 = vld [vmem:[%s441 + $0x168] sm:$0xff]
          %v828 = vld [vmem:[%s441 + $0x170] sm:$0xff]
          %v829 = vld [vmem:[%s441 + $0x178] sm:$0xff]
          %v830 = vld [vmem:[%s441 + $0x180] sm:$0xff]
          %v831 = vld [vmem:[%s441 + $0x188] sm:$0xff]
          %v832 = vld [vmem:[%s441 + $0x190] sm:$0xff]
          %v833 = vld [vmem:[%s441 + $0x198] sm:$0xff]
          %v834 = vld [vmem:[%s441 + $0x1a0] sm:$0xff]
          %v835 = vld [vmem:[%s441 + $0x1a8] sm:$0xff]
          %v836 = vld [vmem:[%s441 + $0x1b0] sm:$0xff]
          %v837 = vld [vmem:[%s441 + $0x1b8] sm:$0xff]
          %v838 = vld [vmem:[%s441 + $0x1c0] sm:$0xff]
          %v839 = vld [vmem:[%s441 + $0x1c8] sm:$0xff]
          %v840 = vld [vmem:[%s441 + $0x1d0] sm:$0xff]
          %v841 = vld [vmem:[%s441 + $0x1d8] sm:$0xff]
          %v842 = vld [vmem:[%s441 + $0x1e0] sm:$0xff]
          %v843 = vld [vmem:[%s441 + $0x1e8] sm:$0xff]
          %v844 = vld [vmem:[%s441 + $0x1f0] sm:$0xff]
          %v845 = vld [vmem:[%s441 + $0x1f8] sm:$0xff]
          %v854 = vunpack.c.l.b16 %v742
          %v855 = vunpack.c.h.b16 %v742
          %v856 = vunpack.c.l.b16 %v743
          %v857 = vunpack.c.h.b16 %v743
          %v858 = vunpack.c.l.b16 %v744
          %v859 = vunpack.c.h.b16 %v744
          %v860 = vunpack.c.l.b16 %v745
          %v861 = vunpack.c.h.b16 %v745
          %v862 = vunpack.c.l.b16 %v746
          %v863 = vunpack.c.h.b16 %v746
          %v864 = vunpack.c.l.b16 %v747
          %v865 = vunpack.c.h.b16 %v747
          %v866 = vunpack.c.l.b16 %v748
          %v867 = vunpack.c.h.b16 %v748
          %v868 = vunpack.c.l.b16 %v749
          %v869 = vunpack.c.h.b16 %v749
          %v870 = vpack.c.b16 %v856, %v854
          %v871 = vpack.c.b16 %v857, %v855
          %v872 = vpack.c.b16 %v860, %v858
          %v873 = vpack.c.b16 %v861, %v859
          %v874 = vpack.c.b16 %v864, %v862
          %v875 = vpack.c.b16 %v865, %v863
          %v876 = vpack.c.b16 %v868, %v866
          %v877 = vpack.c.b16 %v869, %v867
          %v950 = vunpack.c.l.b16 %v782
          %v951 = vunpack.c.h.b16 %v782
          %v952 = vunpack.c.l.b16 %v783
          %v953 = vunpack.c.h.b16 %v783
          %v954 = vunpack.c.l.b16 %v784
          %v955 = vunpack.c.h.b16 %v784
          %v956 = vunpack.c.l.b16 %v785
          %v957 = vunpack.c.h.b16 %v785
          %v958 = vunpack.c.l.b16 %v786
          %v959 = vunpack.c.h.b16 %v786
          %v960 = vunpack.c.l.b16 %v787
          %v961 = vunpack.c.h.b16 %v787
          %v962 = vunpack.c.l.b16 %v788
          %v963 = vunpack.c.h.b16 %v788
          %v964 = vunpack.c.l.b16 %v789
          %v965 = vunpack.c.h.b16 %v789
          %v966 = vunpack.c.l.b16 %v790
          %v967 = vunpack.c.h.b16 %v790
          %v968 = vunpack.c.l.b16 %v791
          %v969 = vunpack.c.h.b16 %v791
          %v970 = vunpack.c.l.b16 %v792
          %v971 = vunpack.c.h.b16 %v792
          %v972 = vunpack.c.l.b16 %v793
          %v973 = vunpack.c.h.b16 %v793
          %v974 = vunpack.c.l.b16 %v794
          %v975 = vunpack.c.h.b16 %v794
          %v976 = vunpack.c.l.b16 %v795
          %v977 = vunpack.c.h.b16 %v795
          %v978 = vunpack.c.l.b16 %v796
          %v979 = vunpack.c.h.b16 %v796
          %v980 = vunpack.c.l.b16 %v797
          %v981 = vunpack.c.h.b16 %v797
          %v982 = vunpack.c.l.b16 %v798
          %v983 = vunpack.c.h.b16 %v798
          %v984 = vunpack.c.l.b16 %v799
          %v985 = vunpack.c.h.b16 %v799
          %v986 = vunpack.c.l.b16 %v800
          %v987 = vunpack.c.h.b16 %v800
          %v988 = vunpack.c.l.b16 %v801
          %v989 = vunpack.c.h.b16 %v801
          %v990 = vunpack.c.l.b16 %v802
          %v991 = vunpack.c.h.b16 %v802
          %v992 = vunpack.c.l.b16 %v803
          %v993 = vunpack.c.h.b16 %v803
          %v994 = vunpack.c.l.b16 %v804
          %v995 = vunpack.c.h.b16 %v804
          %v996 = vunpack.c.l.b16 %v805
          %v997 = vunpack.c.h.b16 %v805
          %v998 = vunpack.c.l.b16 %v806
          %v999 = vunpack.c.h.b16 %v806
          %v1000 = vunpack.c.l.b16 %v807
          %v1001 = vunpack.c.h.b16 %v807
          %v1002 = vunpack.c.l.b16 %v808
          %v1003 = vunpack.c.h.b16 %v808
          %v1004 = vunpack.c.l.b16 %v809
          %v1005 = vunpack.c.h.b16 %v809
          %v1006 = vunpack.c.l.b16 %v810
          %v1007 = vunpack.c.h.b16 %v810
          %v1008 = vunpack.c.l.b16 %v811
          %v1009 = vunpack.c.h.b16 %v811
          %v1010 = vunpack.c.l.b16 %v812
          %v1011 = vunpack.c.h.b16 %v812
          %v1012 = vunpack.c.l.b16 %v813
          %v1013 = vunpack.c.h.b16 %v813
          %v1014 = vunpack.c.l.b16 %v814
          %v1015 = vunpack.c.h.b16 %v814
          %v1016 = vunpack.c.l.b16 %v815
          %v1017 = vunpack.c.h.b16 %v815
          %v1018 = vunpack.c.l.b16 %v816
          %v1019 = vunpack.c.h.b16 %v816
          %v1020 = vunpack.c.l.b16 %v817
          %v1021 = vunpack.c.h.b16 %v817
          %v1022 = vunpack.c.l.b16 %v818
          %v1023 = vunpack.c.h.b16 %v818
          %v1024 = vunpack.c.l.b16 %v819
          %v1025 = vunpack.c.h.b16 %v819
          %v1026 = vunpack.c.l.b16 %v820
          %v1027 = vunpack.c.h.b16 %v820
          %v1028 = vunpack.c.l.b16 %v821
          %v1029 = vunpack.c.h.b16 %v821
          %v1030 = vunpack.c.l.b16 %v822
          %v1031 = vunpack.c.h.b16 %v822
          %v1032 = vunpack.c.l.b16 %v823
          %v1033 = vunpack.c.h.b16 %v823
          %v1034 = vunpack.c.l.b16 %v824
          %v1035 = vunpack.c.h.b16 %v824
          %v1036 = vunpack.c.l.b16 %v825
          %v1037 = vunpack.c.h.b16 %v825
          %v1038 = vunpack.c.l.b16 %v826
          %v1039 = vunpack.c.h.b16 %v826
          %v1040 = vunpack.c.l.b16 %v827
          %v1041 = vunpack.c.h.b16 %v827
          %v1042 = vunpack.c.l.b16 %v828
          %v1043 = vunpack.c.h.b16 %v828
          %v1044 = vunpack.c.l.b16 %v829
          %v1045 = vunpack.c.h.b16 %v829
          %v1046 = vunpack.c.l.b16 %v830
          %v1047 = vunpack.c.h.b16 %v830
          %v1048 = vunpack.c.l.b16 %v831
          %v1049 = vunpack.c.h.b16 %v831
          %v1050 = vunpack.c.l.b16 %v832
          %v1051 = vunpack.c.h.b16 %v832
          %v1052 = vunpack.c.l.b16 %v833
          %v1053 = vunpack.c.h.b16 %v833
          %v1054 = vunpack.c.l.b16 %v834
          %v1055 = vunpack.c.h.b16 %v834
          %v1056 = vunpack.c.l.b16 %v835
          %v1057 = vunpack.c.h.b16 %v835
          %v1058 = vunpack.c.l.b16 %v836
          %v1059 = vunpack.c.h.b16 %v836
          %v1060 = vunpack.c.l.b16 %v837
          %v1061 = vunpack.c.h.b16 %v837
          %v1062 = vunpack.c.l.b16 %v838
          %v1063 = vunpack.c.h.b16 %v838
          %v1064 = vunpack.c.l.b16 %v839
          %v1065 = vunpack.c.h.b16 %v839
          %v1066 = vunpack.c.l.b16 %v840
          %v1067 = vunpack.c.h.b16 %v840
          %v1068 = vunpack.c.l.b16 %v841
          %v1069 = vunpack.c.h.b16 %v841
          %v1070 = vunpack.c.l.b16 %v842
          %v1071 = vunpack.c.h.b16 %v842
          %v1072 = vunpack.c.l.b16 %v843
          %v1073 = vunpack.c.h.b16 %v843
          %v1074 = vunpack.c.l.b16 %v844
          %v1075 = vunpack.c.h.b16 %v844
          %v1076 = vunpack.c.l.b16 %v845
          %v1077 = vunpack.c.h.b16 %v845
          %v1078 = vpack.c.b16 %v954, %v950
          %v1079 = vpack.c.b16 %v955, %v951
          %v1080 = vpack.c.b16 %v956, %v952
          %v1081 = vpack.c.b16 %v957, %v953
          %v1082 = vpack.c.b16 %v962, %v958
          %v1083 = vpack.c.b16 %v963, %v959
          %v1084 = vpack.c.b16 %v964, %v960
          %v1085 = vpack.c.b16 %v965, %v961
          %v1086 = vpack.c.b16 %v970, %v966
          %v1087 = vpack.c.b16 %v971, %v967
          %v1088 = vpack.c.b16 %v972, %v968
          %v1089 = vpack.c.b16 %v973, %v969
          %v1090 = vpack.c.b16 %v978, %v974
          %v1091 = vpack.c.b16 %v979, %v975
          %v1092 = vpack.c.b16 %v980, %v976
          %v1093 = vpack.c.b16 %v981, %v977
          %v1094 = vpack.c.b16 %v986, %v982
          %v1095 = vpack.c.b16 %v987, %v983
          %v1096 = vpack.c.b16 %v988, %v984
          %v1097 = vpack.c.b16 %v989, %v985
          %v1098 = vpack.c.b16 %v994, %v990
          %v1099 = vpack.c.b16 %v995, %v991
          %v1100 = vpack.c.b16 %v996, %v992
          %v1101 = vpack.c.b16 %v997, %v993
          %v1102 = vpack.c.b16 %v1002, %v998
          %v1103 = vpack.c.b16 %v1003, %v999
          %v1104 = vpack.c.b16 %v1004, %v1000
          %v1105 = vpack.c.b16 %v1005, %v1001
          %v1106 = vpack.c.b16 %v1010, %v1006
          %v1107 = vpack.c.b16 %v1011, %v1007
          %v1108 = vpack.c.b16 %v1012, %v1008
          %v1109 = vpack.c.b16 %v1013, %v1009
          %v1110 = vpack.c.b16 %v1018, %v1014
          %v1111 = vpack.c.b16 %v1019, %v1015
          %v1112 = vpack.c.b16 %v1020, %v1016
          %v1113 = vpack.c.b16 %v1021, %v1017
          %v1114 = vpack.c.b16 %v1026, %v1022
          %v1115 = vpack.c.b16 %v1027, %v1023
          %v1116 = vpack.c.b16 %v1028, %v1024
          %v1117 = vpack.c.b16 %v1029, %v1025
          %v1118 = vpack.c.b16 %v1034, %v1030
          %v1119 = vpack.c.b16 %v1035, %v1031
          %v1120 = vpack.c.b16 %v1036, %v1032
          %v1121 = vpack.c.b16 %v1037, %v1033
          %v1122 = vpack.c.b16 %v1042, %v1038
          %v1123 = vpack.c.b16 %v1043, %v1039
          %v1124 = vpack.c.b16 %v1044, %v1040
          %v1125 = vpack.c.b16 %v1045, %v1041
          %v1126 = vpack.c.b16 %v1050, %v1046
          %v1127 = vpack.c.b16 %v1051, %v1047
          %v1128 = vpack.c.b16 %v1052, %v1048
          %v1129 = vpack.c.b16 %v1053, %v1049
          %v1130 = vpack.c.b16 %v1058, %v1054
          %v1131 = vpack.c.b16 %v1059, %v1055
          %v1132 = vpack.c.b16 %v1060, %v1056
          %v1133 = vpack.c.b16 %v1061, %v1057
          %v1134 = vpack.c.b16 %v1066, %v1062
          %v1135 = vpack.c.b16 %v1067, %v1063
          %v1136 = vpack.c.b16 %v1068, %v1064
          %v1137 = vpack.c.b16 %v1069, %v1065
          %v1138 = vpack.c.b16 %v1074, %v1070
          %v1139 = vpack.c.b16 %v1075, %v1071
          %v1140 = vpack.c.b16 %v1076, %v1072
          %v1141 = vpack.c.b16 %v1077, %v1073
          %1206 = vmatprep.subr.bf16.mxu0 %v1079
          %1207 = vmatpush1.bf16.msra.mxu0 %v1078
          %1208 = vmatprep.subr.bf16.mxu0 %v1083
          %1209 = vmatpush1.bf16.msra.mxu0 %v1082
          %1210 = vmatprep.subr.bf16.mxu0 %v1087
          %1211 = vmatpush1.bf16.msra.mxu0 %v1086
          %1212 = vmatprep.subr.bf16.mxu0 %v1091
          %1213 = vmatpush1.bf16.msra.mxu0 %v1090
          %1214 = vmatprep.subr.bf16.mxu0 %v1095
          %1215 = vmatpush1.bf16.msra.mxu0 %v1094
          %1216 = vmatprep.subr.bf16.mxu0 %v1099
          %1217 = vmatpush1.bf16.msra.mxu0 %v1098
          %1218 = vmatprep.subr.bf16.mxu0 %v1103
          %1219 = vmatpush1.bf16.msra.mxu0 %v1102
          %1220 = vmatprep.subr.bf16.mxu0 %v1107
          %1221 = vmatpush1.bf16.msra.mxu0 %v1106
          %1222 = vmatprep.subr.bf16.mxu0 %v1111
          %1223 = vmatpush1.bf16.msra.mxu0 %v1110
          %1224 = vmatprep.subr.bf16.mxu0 %v1115
          %1225 = vmatpush1.bf16.msra.mxu0 %v1114
          %1226 = vmatprep.subr.bf16.mxu0 %v1119
          %1227 = vmatpush1.bf16.msra.mxu0 %v1118
          %1228 = vmatprep.subr.bf16.mxu0 %v1123
          %1229 = vmatpush1.bf16.msra.mxu0 %v1122
          %1230 = vmatprep.subr.bf16.mxu0 %v1127
          %1231 = vmatpush1.bf16.msra.mxu0 %v1126
          %1232 = vmatprep.subr.bf16.mxu0 %v1131
          %1233 = vmatpush1.bf16.msra.mxu0 %v1130
          %1234 = vmatprep.subr.bf16.mxu0 %v1135
          %1235 = vmatpush1.bf16.msra.mxu0 %v1134
          %1236 = vmatprep.subr.bf16.mxu0 %v1139
          %1237 = vmatpush1.bf16.msra.mxu0 %v1138
          %1238 = vmatprep.mubr.bf16.mxu0 %v871
          %1239 = vmatmul.mubr.bf16.gmra.mrb[0].mxu0 %v870
          %v1240 = vpop.f32.mrb[0].mxu0
          %v1241 = vadd.f32 0.0, %v1240
          %v1242 = vpop.f32.mrb[0].mxu0
          %v1243 = vadd.f32 0.0, %v1242
          %v1244 = vpop.f32.mrb[0].mxu0
          %v1245 = vadd.f32 0.0, %v1244
          %v1246 = vpop.f32.mrb[0].mxu0
          %v1247 = vadd.f32 0.0, %v1246
          %1248 = vmatprep.mubr.bf16.mxu0 %v873
          %1249 = vmatmul.mubr.bf16.gmra.mrb[0].mxu0 %v872
          %v1250 = vpop.f32.mrb[0].mxu0
          %v1251 = vadd.f32 0.0, %v1250
          %v1252 = vpop.f32.mrb[0].mxu0
          %v1253 = vadd.f32 0.0, %v1252
          %v1254 = vpop.f32.mrb[0].mxu0
          %v1255 = vadd.f32 0.0, %v1254
          %v1256 = vpop.f32.mrb[0].mxu0
          %v1257 = vadd.f32 0.0, %v1256
          %1258 = vmatprep.mubr.bf16.mxu0 %v875
          %1259 = vmatmul.mubr.bf16.gmra.mrb[0].mxu0 %v874
          %v1260 = vpop.f32.mrb[0].mxu0
          %v1261 = vadd.f32 0.0, %v1260
          %v1262 = vpop.f32.mrb[0].mxu0
          %v1263 = vadd.f32 0.0, %v1262
          %v1264 = vpop.f32.mrb[0].mxu0
          %v1265 = vadd.f32 0.0, %v1264
          %v1266 = vpop.f32.mrb[0].mxu0
          %v1267 = vadd.f32 0.0, %v1266
          %1268 = vmatprep.mubr.bf16.mxu0 %v877
          %1269 = vmatmul.mubr.bf16.gmra.mrb[0].mxu0 %v876
          %v1270 = vpop.f32.mrb[0].mxu0
          %v1271 = vadd.f32 0.0, %v1270
          %v1272 = vpop.f32.mrb[0].mxu0
          %v1273 = vadd.f32 0.0, %v1272
          %v1274 = vpop.f32.mrb[0].mxu0
          %v1275 = vadd.f32 0.0, %v1274
          %v1276 = vpop.f32.mrb[0].mxu0
          %v1277 = vadd.f32 0.0, %v1276
          %1278 = vdwg.mxu0
          %1279 = vmatprep.subr.bf16.mxu0 %v1081
          %1280 = vmatpush1.bf16.msra.mxu0 %v1080
          %1281 = vmatprep.subr.bf16.mxu0 %v1085
          %1282 = vmatpush1.bf16.msra.mxu0 %v1084
          %1283 = vmatprep.subr.bf16.mxu0 %v1089
          %1284 = vmatpush1.bf16.msra.mxu0 %v1088
          %1285 = vmatprep.subr.bf16.mxu0 %v1093
          %1286 = vmatpush1.bf16.msra.mxu0 %v1092
          %1287 = vmatprep.subr.bf16.mxu0 %v1097
          %1288 = vmatpush1.bf16.msra.mxu0 %v1096
          %1289 = vmatprep.subr.bf16.mxu0 %v1101
          %1290 = vmatpush1.bf16.msra.mxu0 %v1100
          %1291 = vmatprep.subr.bf16.mxu0 %v1105
          %1292 = vmatpush1.bf16.msra.mxu0 %v1104
          %1293 = vmatprep.subr.bf16.mxu0 %v1109
          %1294 = vmatpush1.bf16.msra.mxu0 %v1108
          %1295 = vmatprep.subr.bf16.mxu0 %v1113
          %1296 = vmatpush1.bf16.msra.mxu0 %v1112
          %1297 = vmatprep.subr.bf16.mxu0 %v1117
          %1298 = vmatpush1.bf16.msra.mxu0 %v1116
          %1299 = vmatprep.subr.bf16.mxu0 %v1121
          %1300 = vmatpush1.bf16.msra.mxu0 %v1120
          %1301 = vmatprep.subr.bf16.mxu0 %v1125
          %1302 = vmatpush1.bf16.msra.mxu0 %v1124
          %1303 = vmatprep.subr.bf16.mxu0 %v1129
          %1304 = vmatpush1.bf16.msra.mxu0 %v1128
          %1305 = vmatprep.subr.bf16.mxu0 %v1133
          %1306 = vmatpush1.bf16.msra.mxu0 %v1132
          %1307 = vmatprep.subr.bf16.mxu0 %v1137
          %1308 = vmatpush1.bf16.msra.mxu0 %v1136
          %1309 = vmatprep.subr.bf16.mxu0 %v1141
          %1310 = vmatpush1.bf16.msra.mxu0 %v1140
          %1311 = vmatprep.mubr.bf16.mxu0 %v871
          %1312 = vmatmul.mubr.bf16.gmra.mrb[0].mxu0 %v870
          %v1313 = vpop.f32.mrb[0].mxu0
          %v1314 = vadd.f32 0.0, %v1313
          %v1315 = vpop.f32.mrb[0].mxu0
          %v1316 = vadd.f32 0.0, %v1315
          %v1317 = vpop.f32.mrb[0].mxu0
          %v1318 = vadd.f32 0.0, %v1317
          %v1319 = vpop.f32.mrb[0].mxu0
          %v1320 = vadd.f32 0.0, %v1319
          %1321 = vmatprep.mubr.bf16.mxu0 %v873
          %1322 = vmatmul.mubr.bf16.gmra.mrb[0].mxu0 %v872
          %v1323 = vpop.f32.mrb[0].mxu0
          %v1324 = vadd.f32 0.0, %v1323
          %v1325 = vpop.f32.mrb[0].mxu0
          %v1326 = vadd.f32 0.0, %v1325
          %v1327 = vpop.f32.mrb[0].mxu0
          %v1328 = vadd.f32 0.0, %v1327
          %v1329 = vpop.f32.mrb[0].mxu0
          %v1330 = vadd.f32 0.0, %v1329
          %1331 = vmatprep.mubr.bf16.mxu0 %v875
          %1332 = vmatmul.mubr.bf16.gmra.mrb[0].mxu0 %v874
          %v1333 = vpop.f32.mrb[0].mxu0
          %v1334 = vadd.f32 0.0, %v1333
          %v1335 = vpop.f32.mrb[0].mxu0
          %v1336 = vadd.f32 0.0, %v1335
          %v1337 = vpop.f32.mrb[0].mxu0
          %v1338 = vadd.f32 0.0, %v1337
          %v1339 = vpop.f32.mrb[0].mxu0
          %v1340 = vadd.f32 0.0, %v1339
          %1341 = vmatprep.mubr.bf16.mxu0 %v877
          %1342 = vmatmul.mubr.bf16.gmra.mrb[0].mxu0 %v876
          %v1343 = vpop.f32.mrb[0].mxu0
          %v1344 = vadd.f32 0.0, %v1343
          %v1345 = vpop.f32.mrb[0].mxu0
          %v1346 = vadd.f32 0.0, %v1345
          %v1347 = vpop.f32.mrb[0].mxu0
          %v1348 = vadd.f32 0.0, %v1347
          %v1349 = vpop.f32.mrb[0].mxu0
          %v1350 = vadd.f32 0.0, %v1349
          %1351 = vdwg.mxu0
          %v1352 = vadd.f32 %v750, %v1241
          %v1353 = vadd.f32 %v751, %v1243
          %v1354 = vadd.f32 %v752, %v1314
          %v1355 = vadd.f32 %v753, %v1316
          %v1356 = vadd.f32 %v754, %v1245
          %v1357 = vadd.f32 %v755, %v1247
          %v1358 = vadd.f32 %v756, %v1318
          %v1359 = vadd.f32 %v757, %v1320
          %v1360 = vadd.f32 %v758, %v1251
          %v1361 = vadd.f32 %v759, %v1253
          %v1362 = vadd.f32 %v760, %v1324
          %v1363 = vadd.f32 %v761, %v1326
          %v1364 = vadd.f32 %v762, %v1255
          %v1365 = vadd.f32 %v763, %v1257
          %v1366 = vadd.f32 %v764, %v1328
          %v1367 = vadd.f32 %v765, %v1330
          %v1368 = vadd.f32 %v766, %v1261
          %v1369 = vadd.f32 %v767, %v1263
          %v1370 = vadd.f32 %v768, %v1334
          %v1371 = vadd.f32 %v769, %v1336
          %v1372 = vadd.f32 %v770, %v1265
          %v1373 = vadd.f32 %v771, %v1267
          %v1374 = vadd.f32 %v772, %v1338
          %v1375 = vadd.f32 %v773, %v1340
          %v1376 = vadd.f32 %v774, %v1271
          %v1377 = vadd.f32 %v775, %v1273
          %v1378 = vadd.f32 %v776, %v1344
          %v1379 = vadd.f32 %v777, %v1346
          %v1380 = vadd.f32 %v778, %v1275
          %v1381 = vadd.f32 %v779, %v1277
          %v1382 = vadd.f32 %v780, %v1348
          %v1383 = vadd.f32 %v781, %v1350
          %1384 = vst [vmem:[#allocation2] sm:$0xff] %v1352
          %1385 = vst [vmem:[#allocation2 + $0x8] sm:$0xff] %v1353
          %1386 = vst [vmem:[#allocation2 + $0x10] sm:$0xff] %v1354
          %1387 = vst [vmem:[#allocation2 + $0x18] sm:$0xff] %v1355
          %1388 = vst [vmem:[#allocation2 + $0x20] sm:$0xff] %v1356
          %1389 = vst [vmem:[#allocation2 + $0x28] sm:$0xff] %v1357
          %1390 = vst [vmem:[#allocation2 + $0x30] sm:$0xff] %v1358
          %1391 = vst [vmem:[#allocation2 + $0x38] sm:$0xff] %v1359
          %1392 = vst [vmem:[#allocation2 + $0x40] sm:$0xff] %v1360
          %1393 = vst [vmem:[#allocation2 + $0x48] sm:$0xff] %v1361
          %1394 = vst [vmem:[#allocation2 + $0x50] sm:$0xff] %v1362
          %1395 = vst [vmem:[#allocation2 + $0x58] sm:$0xff] %v1363
          %1396 = vst [vmem:[#allocation2 + $0x60] sm:$0xff] %v1364
          %1397 = vst [vmem:[#allocation2 + $0x68] sm:$0xff] %v1365
          %1398 = vst [vmem:[#allocation2 + $0x70] sm:$0xff] %v1366
          %1399 = vst [vmem:[#allocation2 + $0x78] sm:$0xff] %v1367
          %1400 = vst [vmem:[#allocation2 + $0x80] sm:$0xff] %v1368
          %1401 = vst [vmem:[#allocation2 + $0x88] sm:$0xff] %v1369
          %1402 = vst [vmem:[#allocation2 + $0x90] sm:$0xff] %v1370
          %1403 = vst [vmem:[#allocation2 + $0x98] sm:$0xff] %v1371
          %1404 = vst [vmem:[#allocation2 + $0xa0] sm:$0xff] %v1372
          %1405 = vst [vmem:[#allocation2 + $0xa8] sm:$0xff] %v1373
          %1406 = vst [vmem:[#allocation2 + $0xb0] sm:$0xff] %v1374
          %1407 = vst [vmem:[#allocation2 + $0xb8] sm:$0xff] %v1375
          %1408 = vst [vmem:[#allocation2 + $0xc0] sm:$0xff] %v1376
          %1409 = vst [vmem:[#allocation2 + $0xc8] sm:$0xff] %v1377
          %1410 = vst [vmem:[#allocation2 + $0xd0] sm:$0xff] %v1378
          %1411 = vst [vmem:[#allocation2 + $0xd8] sm:$0xff] %v1379
          %1412 = vst [vmem:[#allocation2 + $0xe0] sm:$0xff] %v1380
          %1413 = vst [vmem:[#allocation2 + $0xe8] sm:$0xff] %v1381
          %1414 = vst [vmem:[#allocation2 + $0xf0] sm:$0xff] %v1382
          %1415 = vst [vmem:[#allocation2 + $0xf8] sm:$0xff] %v1383
          %v1416 = vld [vmem:[#allocation3] sm:$0xff]
          %v1417 = vld [vmem:[#allocation3 + $0x8] sm:$0xff]
          %v1418 = vld [vmem:[#allocation3 + $0x10] sm:$0xff]
          %v1419 = vld [vmem:[#allocation3 + $0x18] sm:$0xff]
          %v1420 = vld [vmem:[#allocation3 + $0x20] sm:$0xff]
          %v1421 = vld [vmem:[#allocation3 + $0x28] sm:$0xff]
          %v1422 = vld [vmem:[#allocation3 + $0x30] sm:$0xff]
          %v1423 = vld [vmem:[#allocation3 + $0x38] sm:$0xff]
          %v1424 = vld [vmem:[#allocation3 + $0x40] sm:$0xff]
          %v1425 = vld [vmem:[#allocation3 + $0x48] sm:$0xff]
          %v1426 = vld [vmem:[#allocation3 + $0x50] sm:$0xff]
          %v1427 = vld [vmem:[#allocation3 + $0x58] sm:$0xff]
          %v1428 = vld [vmem:[#allocation3 + $0x60] sm:$0xff]
          %v1429 = vld [vmem:[#allocation3 + $0x68] sm:$0xff]
          %v1430 = vld [vmem:[#allocation3 + $0x70] sm:$0xff]
          %v1431 = vld [vmem:[#allocation3 + $0x78] sm:$0xff]
          %v1432 = vld [vmem:[#allocation3 + $0x80] sm:$0xff]
          %v1433 = vld [vmem:[#allocation3 + $0x88] sm:$0xff]
          %v1434 = vld [vmem:[#allocation3 + $0x90] sm:$0xff]
          %v1435 = vld [vmem:[#allocation3 + $0x98] sm:$0xff]
          %v1436 = vld [vmem:[#allocation3 + $0xa0] sm:$0xff]
          %v1437 = vld [vmem:[#allocation3 + $0xa8] sm:$0xff]
          %v1438 = vld [vmem:[#allocation3 + $0xb0] sm:$0xff]
          %v1439 = vld [vmem:[#allocation3 + $0xb8] sm:$0xff]
          %v1440 = vld [vmem:[#allocation3 + $0xc0] sm:$0xff]
          %v1441 = vld [vmem:[#allocation3 + $0xc8] sm:$0xff]
          %v1442 = vld [vmem:[#allocation3 + $0xd0] sm:$0xff]
          %v1443 = vld [vmem:[#allocation3 + $0xd8] sm:$0xff]
          %v1444 = vld [vmem:[#allocation3 + $0xe0] sm:$0xff]
          %v1445 = vld [vmem:[#allocation3 + $0xe8] sm:$0xff]
          %v1446 = vld [vmem:[#allocation3 + $0xf0] sm:$0xff]
          %v1447 = vld [vmem:[#allocation3 + $0xf8] sm:$0xff]
          %v1448 = vld [vmem:[%s450] sm:$0xff]
          %v1449 = vld [vmem:[%s450 + $0x8] sm:$0xff]
          %v1450 = vld [vmem:[%s450 + $0x10] sm:$0xff]
          %v1451 = vld [vmem:[%s450 + $0x18] sm:$0xff]
          %v1452 = vld [vmem:[%s450 + $0x20] sm:$0xff]
          %v1453 = vld [vmem:[%s450 + $0x28] sm:$0xff]
          %v1454 = vld [vmem:[%s450 + $0x30] sm:$0xff]
          %v1455 = vld [vmem:[%s450 + $0x38] sm:$0xff]
          %v1456 = vld [vmem:[%s450 + $0x40] sm:$0xff]
          %v1457 = vld [vmem:[%s450 + $0x48] sm:$0xff]
          %v1458 = vld [vmem:[%s450 + $0x50] sm:$0xff]
          %v1459 = vld [vmem:[%s450 + $0x58] sm:$0xff]
          %v1460 = vld [vmem:[%s450 + $0x60] sm:$0xff]
          %v1461 = vld [vmem:[%s450 + $0x68] sm:$0xff]
          %v1462 = vld [vmem:[%s450 + $0x70] sm:$0xff]
          %v1463 = vld [vmem:[%s450 + $0x78] sm:$0xff]
          %v1464 = vld [vmem:[%s450 + $0x80] sm:$0xff]
          %v1465 = vld [vmem:[%s450 + $0x88] sm:$0xff]
          %v1466 = vld [vmem:[%s450 + $0x90] sm:$0xff]
          %v1467 = vld [vmem:[%s450 + $0x98] sm:$0xff]
          %v1468 = vld [vmem:[%s450 + $0xa0] sm:$0xff]
          %v1469 = vld [vmem:[%s450 + $0xa8] sm:$0xff]
          %v1470 = vld [vmem:[%s450 + $0xb0] sm:$0xff]
          %v1471 = vld [vmem:[%s450 + $0xb8] sm:$0xff]
          %v1472 = vld [vmem:[%s450 + $0xc0] sm:$0xff]
          %v1473 = vld [vmem:[%s450 + $0xc8] sm:$0xff]
          %v1474 = vld [vmem:[%s450 + $0xd0] sm:$0xff]
          %v1475 = vld [vmem:[%s450 + $0xd8] sm:$0xff]
          %v1476 = vld [vmem:[%s450 + $0xe0] sm:$0xff]
          %v1477 = vld [vmem:[%s450 + $0xe8] sm:$0xff]
          %v1478 = vld [vmem:[%s450 + $0xf0] sm:$0xff]
          %v1479 = vld [vmem:[%s450 + $0xf8] sm:$0xff]
          %v1480 = vld [vmem:[%s450 + $0x100] sm:$0xff]
          %v1481 = vld [vmem:[%s450 + $0x108] sm:$0xff]
          %v1482 = vld [vmem:[%s450 + $0x110] sm:$0xff]
          %v1483 = vld [vmem:[%s450 + $0x118] sm:$0xff]
          %v1484 = vld [vmem:[%s450 + $0x120] sm:$0xff]
          %v1485 = vld [vmem:[%s450 + $0x128] sm:$0xff]
          %v1486 = vld [vmem:[%s450 + $0x130] sm:$0xff]
          %v1487 = vld [vmem:[%s450 + $0x138] sm:$0xff]
          %v1488 = vld [vmem:[%s450 + $0x140] sm:$0xff]
          %v1489 = vld [vmem:[%s450 + $0x148] sm:$0xff]
          %v1490 = vld [vmem:[%s450 + $0x150] sm:$0xff]
          %v1491 = vld [vmem:[%s450 + $0x158] sm:$0xff]
          %v1492 = vld [vmem:[%s450 + $0x160] sm:$0xff]
          %v1493 = vld [vmem:[%s450 + $0x168] sm:$0xff]
          %v1494 = vld [vmem:[%s450 + $0x170] sm:$0xff]
          %v1495 = vld [vmem:[%s450 + $0x178] sm:$0xff]
          %v1496 = vld [vmem:[%s450 + $0x180] sm:$0xff]
          %v1497 = vld [vmem:[%s450 + $0x188] sm:$0xff]
          %v1498 = vld [vmem:[%s450 + $0x190] sm:$0xff]
          %v1499 = vld [vmem:[%s450 + $0x198] sm:$0xff]
          %v1500 = vld [vmem:[%s450 + $0x1a0] sm:$0xff]
          %v1501 = vld [vmem:[%s450 + $0x1a8] sm:$0xff]
          %v1502 = vld [vmem:[%s450 + $0x1b0] sm:$0xff]
          %v1503 = vld [vmem:[%s450 + $0x1b8] sm:$0xff]
          %v1504 = vld [vmem:[%s450 + $0x1c0] sm:$0xff]
          %v1505 = vld [vmem:[%s450 + $0x1c8] sm:$0xff]
          %v1506 = vld [vmem:[%s450 + $0x1d0] sm:$0xff]
          %v1507 = vld [vmem:[%s450 + $0x1d8] sm:$0xff]
          %v1508 = vld [vmem:[%s450 + $0x1e0] sm:$0xff]
          %v1509 = vld [vmem:[%s450 + $0x1e8] sm:$0xff]
          %v1510 = vld [vmem:[%s450 + $0x1f0] sm:$0xff]
          %v1511 = vld [vmem:[%s450 + $0x1f8] sm:$0xff]
          %v1576 = vunpack.c.l.b16 %v1448
          %v1577 = vunpack.c.h.b16 %v1448
          %v1578 = vunpack.c.l.b16 %v1449
          %v1579 = vunpack.c.h.b16 %v1449
          %v1580 = vunpack.c.l.b16 %v1450
          %v1581 = vunpack.c.h.b16 %v1450
          %v1582 = vunpack.c.l.b16 %v1451
          %v1583 = vunpack.c.h.b16 %v1451
          %v1584 = vunpack.c.l.b16 %v1452
          %v1585 = vunpack.c.h.b16 %v1452
          %v1586 = vunpack.c.l.b16 %v1453
          %v1587 = vunpack.c.h.b16 %v1453
          %v1588 = vunpack.c.l.b16 %v1454
          %v1589 = vunpack.c.h.b16 %v1454
          %v1590 = vunpack.c.l.b16 %v1455
          %v1591 = vunpack.c.h.b16 %v1455
          %v1592 = vunpack.c.l.b16 %v1456
          %v1593 = vunpack.c.h.b16 %v1456
          %v1594 = vunpack.c.l.b16 %v1457
          %v1595 = vunpack.c.h.b16 %v1457
          %v1596 = vunpack.c.l.b16 %v1458
          %v1597 = vunpack.c.h.b16 %v1458
          %v1598 = vunpack.c.l.b16 %v1459
          %v1599 = vunpack.c.h.b16 %v1459
          %v1600 = vunpack.c.l.b16 %v1460
          %v1601 = vunpack.c.h.b16 %v1460
          %v1602 = vunpack.c.l.b16 %v1461
          %v1603 = vunpack.c.h.b16 %v1461
          %v1604 = vunpack.c.l.b16 %v1462
          %v1605 = vunpack.c.h.b16 %v1462
          %v1606 = vunpack.c.l.b16 %v1463
          %v1607 = vunpack.c.h.b16 %v1463
          %v1608 = vunpack.c.l.b16 %v1464
          %v1609 = vunpack.c.h.b16 %v1464
          %v1610 = vunpack.c.l.b16 %v1465
          %v1611 = vunpack.c.h.b16 %v1465
          %v1612 = vunpack.c.l.b16 %v1466
          %v1613 = vunpack.c.h.b16 %v1466
          %v1614 = vunpack.c.l.b16 %v1467
          %v1615 = vunpack.c.h.b16 %v1467
          %v1616 = vunpack.c.l.b16 %v1468
          %v1617 = vunpack.c.h.b16 %v1468
          %v1618 = vunpack.c.l.b16 %v1469
          %v1619 = vunpack.c.h.b16 %v1469
          %v1620 = vunpack.c.l.b16 %v1470
          %v1621 = vunpack.c.h.b16 %v1470
          %v1622 = vunpack.c.l.b16 %v1471
          %v1623 = vunpack.c.h.b16 %v1471
          %v1624 = vunpack.c.l.b16 %v1472
          %v1625 = vunpack.c.h.b16 %v1472
          %v1626 = vunpack.c.l.b16 %v1473
          %v1627 = vunpack.c.h.b16 %v1473
          %v1628 = vunpack.c.l.b16 %v1474
          %v1629 = vunpack.c.h.b16 %v1474
          %v1630 = vunpack.c.l.b16 %v1475
          %v1631 = vunpack.c.h.b16 %v1475
          %v1632 = vunpack.c.l.b16 %v1476
          %v1633 = vunpack.c.h.b16 %v1476
          %v1634 = vunpack.c.l.b16 %v1477
          %v1635 = vunpack.c.h.b16 %v1477
          %v1636 = vunpack.c.l.b16 %v1478
          %v1637 = vunpack.c.h.b16 %v1478
          %v1638 = vunpack.c.l.b16 %v1479
          %v1639 = vunpack.c.h.b16 %v1479
          %v1640 = vunpack.c.l.b16 %v1480
          %v1641 = vunpack.c.h.b16 %v1480
          %v1642 = vunpack.c.l.b16 %v1481
          %v1643 = vunpack.c.h.b16 %v1481
          %v1644 = vunpack.c.l.b16 %v1482
          %v1645 = vunpack.c.h.b16 %v1482
          %v1646 = vunpack.c.l.b16 %v1483
          %v1647 = vunpack.c.h.b16 %v1483
          %v1648 = vunpack.c.l.b16 %v1484
          %v1649 = vunpack.c.h.b16 %v1484
          %v1650 = vunpack.c.l.b16 %v1485
          %v1651 = vunpack.c.h.b16 %v1485
          %v1652 = vunpack.c.l.b16 %v1486
          %v1653 = vunpack.c.h.b16 %v1486
          %v1654 = vunpack.c.l.b16 %v1487
          %v1655 = vunpack.c.h.b16 %v1487
          %v1656 = vunpack.c.l.b16 %v1488
          %v1657 = vunpack.c.h.b16 %v1488
          %v1658 = vunpack.c.l.b16 %v1489
          %v1659 = vunpack.c.h.b16 %v1489
          %v1660 = vunpack.c.l.b16 %v1490
          %v1661 = vunpack.c.h.b16 %v1490
          %v1662 = vunpack.c.l.b16 %v1491
          %v1663 = vunpack.c.h.b16 %v1491
          %v1664 = vunpack.c.l.b16 %v1492
          %v1665 = vunpack.c.h.b16 %v1492
          %v1666 = vunpack.c.l.b16 %v1493
          %v1667 = vunpack.c.h.b16 %v1493
          %v1668 = vunpack.c.l.b16 %v1494
          %v1669 = vunpack.c.h.b16 %v1494
          %v1670 = vunpack.c.l.b16 %v1495
          %v1671 = vunpack.c.h.b16 %v1495
          %v1672 = vunpack.c.l.b16 %v1496
          %v1673 = vunpack.c.h.b16 %v1496
          %v1674 = vunpack.c.l.b16 %v1497
          %v1675 = vunpack.c.h.b16 %v1497
          %v1676 = vunpack.c.l.b16 %v1498
          %v1677 = vunpack.c.h.b16 %v1498
          %v1678 = vunpack.c.l.b16 %v1499
          %v1679 = vunpack.c.h.b16 %v1499
          %v1680 = vunpack.c.l.b16 %v1500
          %v1681 = vunpack.c.h.b16 %v1500
          %v1682 = vunpack.c.l.b16 %v1501
          %v1683 = vunpack.c.h.b16 %v1501
          %v1684 = vunpack.c.l.b16 %v1502
          %v1685 = vunpack.c.h.b16 %v1502
          %v1686 = vunpack.c.l.b16 %v1503
          %v1687 = vunpack.c.h.b16 %v1503
          %v1688 = vunpack.c.l.b16 %v1504
          %v1689 = vunpack.c.h.b16 %v1504
          %v1690 = vunpack.c.l.b16 %v1505
          %v1691 = vunpack.c.h.b16 %v1505
          %v1692 = vunpack.c.l.b16 %v1506
          %v1693 = vunpack.c.h.b16 %v1506
          %v1694 = vunpack.c.l.b16 %v1507
          %v1695 = vunpack.c.h.b16 %v1507
          %v1696 = vunpack.c.l.b16 %v1508
          %v1697 = vunpack.c.h.b16 %v1508
          %v1698 = vunpack.c.l.b16 %v1509
          %v1699 = vunpack.c.h.b16 %v1509
          %v1700 = vunpack.c.l.b16 %v1510
          %v1701 = vunpack.c.h.b16 %v1510
          %v1702 = vunpack.c.l.b16 %v1511
          %v1703 = vunpack.c.h.b16 %v1511
          %v1704 = vpack.c.b16 %v1580, %v1576
          %v1705 = vpack.c.b16 %v1581, %v1577
          %v1706 = vpack.c.b16 %v1582, %v1578
          %v1707 = vpack.c.b16 %v1583, %v1579
          %v1708 = vpack.c.b16 %v1588, %v1584
          %v1709 = vpack.c.b16 %v1589, %v1585
          %v1710 = vpack.c.b16 %v1590, %v1586
          %v1711 = vpack.c.b16 %v1591, %v1587
          %v1712 = vpack.c.b16 %v1596, %v1592
          %v1713 = vpack.c.b16 %v1597, %v1593
          %v1714 = vpack.c.b16 %v1598, %v1594
          %v1715 = vpack.c.b16 %v1599, %v1595
          %v1716 = vpack.c.b16 %v1604, %v1600
          %v1717 = vpack.c.b16 %v1605, %v1601
          %v1718 = vpack.c.b16 %v1606, %v1602
          %v1719 = vpack.c.b16 %v1607, %v1603
          %v1720 = vpack.c.b16 %v1612, %v1608
          %v1721 = vpack.c.b16 %v1613, %v1609
          %v1722 = vpack.c.b16 %v1614, %v1610
          %v1723 = vpack.c.b16 %v1615, %v1611
          %v1724 = vpack.c.b16 %v1620, %v1616
          %v1725 = vpack.c.b16 %v1621, %v1617
          %v1726 = vpack.c.b16 %v1622, %v1618
          %v1727 = vpack.c.b16 %v1623, %v1619
          %v1728 = vpack.c.b16 %v1628, %v1624
          %v1729 = vpack.c.b16 %v1629, %v1625
          %v1730 = vpack.c.b16 %v1630, %v1626
          %v1731 = vpack.c.b16 %v1631, %v1627
          %v1732 = vpack.c.b16 %v1636, %v1632
          %v1733 = vpack.c.b16 %v1637, %v1633
          %v1734 = vpack.c.b16 %v1638, %v1634
          %v1735 = vpack.c.b16 %v1639, %v1635
          %v1736 = vpack.c.b16 %v1644, %v1640
          %v1737 = vpack.c.b16 %v1645, %v1641
          %v1738 = vpack.c.b16 %v1646, %v1642
          %v1739 = vpack.c.b16 %v1647, %v1643
          %v1740 = vpack.c.b16 %v1652, %v1648
          %v1741 = vpack.c.b16 %v1653, %v1649
          %v1742 = vpack.c.b16 %v1654, %v1650
          %v1743 = vpack.c.b16 %v1655, %v1651
          %v1744 = vpack.c.b16 %v1660, %v1656
          %v1745 = vpack.c.b16 %v1661, %v1657
          %v1746 = vpack.c.b16 %v1662, %v1658
          %v1747 = vpack.c.b16 %v1663, %v1659
          %v1748 = vpack.c.b16 %v1668, %v1664
          %v1749 = vpack.c.b16 %v1669, %v1665
          %v1750 = vpack.c.b16 %v1670, %v1666
          %v1751 = vpack.c.b16 %v1671, %v1667
          %v1752 = vpack.c.b16 %v1676, %v1672
          %v1753 = vpack.c.b16 %v1677, %v1673
          %v1754 = vpack.c.b16 %v1678, %v1674
          %v1755 = vpack.c.b16 %v1679, %v1675
          %v1756 = vpack.c.b16 %v1684, %v1680
          %v1757 = vpack.c.b16 %v1685, %v1681
          %v1758 = vpack.c.b16 %v1686, %v1682
          %v1759 = vpack.c.b16 %v1687, %v1683
          %v1760 = vpack.c.b16 %v1692, %v1688
          %v1761 = vpack.c.b16 %v1693, %v1689
          %v1762 = vpack.c.b16 %v1694, %v1690
          %v1763 = vpack.c.b16 %v1695, %v1691
          %v1764 = vpack.c.b16 %v1700, %v1696
          %v1765 = vpack.c.b16 %v1701, %v1697
          %v1766 = vpack.c.b16 %v1702, %v1698
          %v1767 = vpack.c.b16 %v1703, %v1699
          %1832 = vmatprep.subr.bf16.mxu0 %v1705
          %1833 = vmatpush1.bf16.msra.mxu0 %v1704
          %1834 = vmatprep.subr.bf16.mxu0 %v1709
          %1835 = vmatpush1.bf16.msra.mxu0 %v1708
          %1836 = vmatprep.subr.bf16.mxu0 %v1713
          %1837 = vmatpush1.bf16.msra.mxu0 %v1712
          %1838 = vmatprep.subr.bf16.mxu0 %v1717
          %1839 = vmatpush1.bf16.msra.mxu0 %v1716
          %1840 = vmatprep.subr.bf16.mxu0 %v1721
          %1841 = vmatpush1.bf16.msra.mxu0 %v1720
          %1842 = vmatprep.subr.bf16.mxu0 %v1725
          %1843 = vmatpush1.bf16.msra.mxu0 %v1724
          %1844 = vmatprep.subr.bf16.mxu0 %v1729
          %1845 = vmatpush1.bf16.msra.mxu0 %v1728
          %1846 = vmatprep.subr.bf16.mxu0 %v1733
          %1847 = vmatpush1.bf16.msra.mxu0 %v1732
          %1848 = vmatprep.subr.bf16.mxu0 %v1737
          %1849 = vmatpush1.bf16.msra.mxu0 %v1736
          %1850 = vmatprep.subr.bf16.mxu0 %v1741
          %1851 = vmatpush1.bf16.msra.mxu0 %v1740
          %1852 = vmatprep.subr.bf16.mxu0 %v1745
          %1853 = vmatpush1.bf16.msra.mxu0 %v1744
          %1854 = vmatprep.subr.bf16.mxu0 %v1749
          %1855 = vmatpush1.bf16.msra.mxu0 %v1748
          %1856 = vmatprep.subr.bf16.mxu0 %v1753
          %1857 = vmatpush1.bf16.msra.mxu0 %v1752
          %1858 = vmatprep.subr.bf16.mxu0 %v1757
          %1859 = vmatpush1.bf16.msra.mxu0 %v1756
          %1860 = vmatprep.subr.bf16.mxu0 %v1761
          %1861 = vmatpush1.bf16.msra.mxu0 %v1760
          %1862 = vmatprep.subr.bf16.mxu0 %v1765
          %1863 = vmatpush1.bf16.msra.mxu0 %v1764
          %1864 = vmatprep.mubr.bf16.mxu0 %v871
          %1865 = vmatmul.mubr.bf16.gmra.mrb[0].mxu0 %v870
          %v1866 = vpop.f32.mrb[0].mxu0
          %v1867 = vadd.f32 0.0, %v1866
          %v1868 = vpop.f32.mrb[0].mxu0
          %v1869 = vadd.f32 0.0, %v1868
          %v1870 = vpop.f32.mrb[0].mxu0
          %v1871 = vadd.f32 0.0, %v1870
          %v1872 = vpop.f32.mrb[0].mxu0
          %v1873 = vadd.f32 0.0, %v1872
          %1874 = vmatprep.mubr.bf16.mxu0 %v873
          %1875 = vmatmul.mubr.bf16.gmra.mrb[0].mxu0 %v872
          %v1876 = vpop.f32.mrb[0].mxu0
          %v1877 = vadd.f32 0.0, %v1876
          %v1878 = vpop.f32.mrb[0].mxu0
          %v1879 = vadd.f32 0.0, %v1878
          %v1880 = vpop.f32.mrb[0].mxu0
          %v1881 = vadd.f32 0.0, %v1880
          %v1882 = vpop.f32.mrb[0].mxu0
          %v1883 = vadd.f32 0.0, %v1882
          %1884 = vmatprep.mubr.bf16.mxu0 %v875
          %1885 = vmatmul.mubr.bf16.gmra.mrb[0].mxu0 %v874
          %v1886 = vpop.f32.mrb[0].mxu0
          %v1887 = vadd.f32 0.0, %v1886
          %v1888 = vpop.f32.mrb[0].mxu0
          %v1889 = vadd.f32 0.0, %v1888
          %v1890 = vpop.f32.mrb[0].mxu0
          %v1891 = vadd.f32 0.0, %v1890
          %v1892 = vpop.f32.mrb[0].mxu0
          %v1893 = vadd.f32 0.0, %v1892
          %1894 = vmatprep.mubr.bf16.mxu0 %v877
          %1895 = vmatmul.mubr.bf16.gmra.mrb[0].mxu0 %v876
          %v1896 = vpop.f32.mrb[0].mxu0
          %v1897 = vadd.f32 0.0, %v1896
          %v1898 = vpop.f32.mrb[0].mxu0
          %v1899 = vadd.f32 0.0, %v1898
          %v1900 = vpop.f32.mrb[0].mxu0
          %v1901 = vadd.f32 0.0, %v1900
          %v1902 = vpop.f32.mrb[0].mxu0
          %v1903 = vadd.f32 0.0, %v1902
          %1904 = vdwg.mxu0
          %1905 = vmatprep.subr.bf16.mxu0 %v1707
          %1906 = vmatpush1.bf16.msra.mxu0 %v1706
          %1907 = vmatprep.subr.bf16.mxu0 %v1711
          %1908 = vmatpush1.bf16.msra.mxu0 %v1710
          %1909 = vmatprep.subr.bf16.mxu0 %v1715
          %1910 = vmatpush1.bf16.msra.mxu0 %v1714
          %1911 = vmatprep.subr.bf16.mxu0 %v1719
          %1912 = vmatpush1.bf16.msra.mxu0 %v1718
          %1913 = vmatprep.subr.bf16.mxu0 %v1723
          %1914 = vmatpush1.bf16.msra.mxu0 %v1722
          %1915 = vmatprep.subr.bf16.mxu0 %v1727
          %1916 = vmatpush1.bf16.msra.mxu0 %v1726
          %1917 = vmatprep.subr.bf16.mxu0 %v1731
          %1918 = vmatpush1.bf16.msra.mxu0 %v1730
          %1919 = vmatprep.subr.bf16.mxu0 %v1735
          %1920 = vmatpush1.bf16.msra.mxu0 %v1734
          %1921 = vmatprep.subr.bf16.mxu0 %v1739
          %1922 = vmatpush1.bf16.msra.mxu0 %v1738
          %1923 = vmatprep.subr.bf16.mxu0 %v1743
          %1924 = vmatpush1.bf16.msra.mxu0 %v1742
          %1925 = vmatprep.subr.bf16.mxu0 %v1747
          %1926 = vmatpush1.bf16.msra.mxu0 %v1746
          %1927 = vmatprep.subr.bf16.mxu0 %v1751
          %1928 = vmatpush1.bf16.msra.mxu0 %v1750
          %1929 = vmatprep.subr.bf16.mxu0 %v1755
          %1930 = vmatpush1.bf16.msra.mxu0 %v1754
          %1931 = vmatprep.subr.bf16.mxu0 %v1759
          %1932 = vmatpush1.bf16.msra.mxu0 %v1758
          %1933 = vmatprep.subr.bf16.mxu0 %v1763
          %1934 = vmatpush1.bf16.msra.mxu0 %v1762
          %1935 = vmatprep.subr.bf16.mxu0 %v1767
          %1936 = vmatpush1.bf16.msra.mxu0 %v1766
          %1937 = vmatprep.mubr.bf16.mxu0 %v871
          %1938 = vmatmul.mubr.bf16.gmra.mrb[0].mxu0 %v870
          %v1939 = vpop.f32.mrb[0].mxu0
          %v1940 = vadd.f32 0.0, %v1939
          %v1941 = vpop.f32.mrb[0].mxu0
          %v1942 = vadd.f32 0.0, %v1941
          %v1943 = vpop.f32.mrb[0].mxu0
          %v1944 = vadd.f32 0.0, %v1943
          %v1945 = vpop.f32.mrb[0].mxu0
          %v1946 = vadd.f32 0.0, %v1945
          %1947 = vmatprep.mubr.bf16.mxu0 %v873
          %1948 = vmatmul.mubr.bf16.gmra.mrb[0].mxu0 %v872
          %v1949 = vpop.f32.mrb[0].mxu0
          %v1950 = vadd.f32 0.0, %v1949
          %v1951 = vpop.f32.mrb[0].mxu0
          %v1952 = vadd.f32 0.0, %v1951
          %v1953 = vpop.f32.mrb[0].mxu0
          %v1954 = vadd.f32 0.0, %v1953
          %v1955 = vpop.f32.mrb[0].mxu0
          %v1956 = vadd.f32 0.0, %v1955
          %1957 = vmatprep.mubr.bf16.mxu0 %v875
          %1958 = vmatmul.mubr.bf16.gmra.mrb[0].mxu0 %v874
          %v1959 = vpop.f32.mrb[0].mxu0
          %v1960 = vadd.f32 0.0, %v1959
          %v1961 = vpop.f32.mrb[0].mxu0
          %v1962 = vadd.f32 0.0, %v1961
          %v1963 = vpop.f32.mrb[0].mxu0
          %v1964 = vadd.f32 0.0, %v1963
          %v1965 = vpop.f32.mrb[0].mxu0
          %v1966 = vadd.f32 0.0, %v1965
          %1967 = vmatprep.mubr.bf16.mxu0 %v877
          %1968 = vmatmul.mubr.bf16.gmra.mrb[0].mxu0 %v876
          %v1969 = vpop.f32.mrb[0].mxu0
          %v1970 = vadd.f32 0.0, %v1969
          %v1971 = vpop.f32.mrb[0].mxu0
          %v1972 = vadd.f32 0.0, %v1971
          %v1973 = vpop.f32.mrb[0].mxu0
          %v1974 = vadd.f32 0.0, %v1973
          %v1975 = vpop.f32.mrb[0].mxu0
          %v1976 = vadd.f32 0.0, %v1975
          %1977 = vdwg.mxu0
          %v1978 = vadd.f32 %v1416, %v1867
          %v1979 = vadd.f32 %v1417, %v1869
          %v1980 = vadd.f32 %v1418, %v1940
          %v1981 = vadd.f32 %v1419, %v1942
          %v1982 = vadd.f32 %v1420, %v1871
          %v1983 = vadd.f32 %v1421, %v1873
          %v1984 = vadd.f32 %v1422, %v1944
          %v1985 = vadd.f32 %v1423, %v1946
          %v1986 = vadd.f32 %v1424, %v1877
          %v1987 = vadd.f32 %v1425, %v1879
          %v1988 = vadd.f32 %v1426, %v1950
          %v1989 = vadd.f32 %v1427, %v1952
          %v1990 = vadd.f32 %v1428, %v1881
          %v1991 = vadd.f32 %v1429, %v1883
          %v1992 = vadd.f32 %v1430, %v1954
          %v1993 = vadd.f32 %v1431, %v1956
          %v1994 = vadd.f32 %v1432, %v1887
          %v1995 = vadd.f32 %v1433, %v1889
          %v1996 = vadd.f32 %v1434, %v1960
          %v1997 = vadd.f32 %v1435, %v1962
          %v1998 = vadd.f32 %v1436, %v1891
          %v1999 = vadd.f32 %v1437, %v1893
          %v2000 = vadd.f32 %v1438, %v1964
          %v2001 = vadd.f32 %v1439, %v1966
          %v2002 = vadd.f32 %v1440, %v1897
          %v2003 = vadd.f32 %v1441, %v1899
          %v2004 = vadd.f32 %v1442, %v1970
          %v2005 = vadd.f32 %v1443, %v1972
          %v2006 = vadd.f32 %v1444, %v1901
          %v2007 = vadd.f32 %v1445, %v1903
          %v2008 = vadd.f32 %v1446, %v1974
          %v2009 = vadd.f32 %v1447, %v1976
          %2010 = vst [vmem:[#allocation3] sm:$0xff] %v1978
          %2011 = vst [vmem:[#allocation3 + $0x8] sm:$0xff] %v1979
          %2012 = vst [vmem:[#allocation3 + $0x10] sm:$0xff] %v1980
          %2013 = vst [vmem:[#allocation3 + $0x18] sm:$0xff] %v1981
          %2014 = vst [vmem:[#allocation3 + $0x20] sm:$0xff] %v1982
          %2015 = vst [vmem:[#allocation3 + $0x28] sm:$0xff] %v1983
          %2016 = vst [vmem:[#allocation3 + $0x30] sm:$0xff] %v1984
          %2017 = vst [vmem:[#allocation3 + $0x38] sm:$0xff] %v1985
          %2018 = vst [vmem:[#allocation3 + $0x40] sm:$0xff] %v1986
          %2019 = vst [vmem:[#allocation3 + $0x48] sm:$0xff] %v1987
          %2020 = vst [vmem:[#allocation3 + $0x50] sm:$0xff] %v1988
          %2021 = vst [vmem:[#allocation3 + $0x58] sm:$0xff] %v1989
          %2022 = vst [vmem:[#allocation3 + $0x60] sm:$0xff] %v1990
          %2023 = vst [vmem:[#allocation3 + $0x68] sm:$0xff] %v1991
          %2024 = vst [vmem:[#allocation3 + $0x70] sm:$0xff] %v1992
          %2025 = vst [vmem:[#allocation3 + $0x78] sm:$0xff] %v1993
          %2026 = vst [vmem:[#allocation3 + $0x80] sm:$0xff] %v1994
          %2027 = vst [vmem:[#allocation3 + $0x88] sm:$0xff] %v1995
          %2028 = vst [vmem:[#allocation3 + $0x90] sm:$0xff] %v1996
          %2029 = vst [vmem:[#allocation3 + $0x98] sm:$0xff] %v1997
          %2030 = vst [vmem:[#allocation3 + $0xa0] sm:$0xff] %v1998
          %2031 = vst [vmem:[#allocation3 + $0xa8] sm:$0xff] %v1999
          %2032 = vst [vmem:[#allocation3 + $0xb0] sm:$0xff] %v2000
          %2033 = vst [vmem:[#allocation3 + $0xb8] sm:$0xff] %v2001
          %2034 = vst [vmem:[#allocation3 + $0xc0] sm:$0xff] %v2002
          %2035 = vst [vmem:[#allocation3 + $0xc8] sm:$0xff] %v2003
          %2036 = vst [vmem:[#allocation3 + $0xd0] sm:$0xff] %v2004
          %2037 = vst [vmem:[#allocation3 + $0xd8] sm:$0xff] %v2005
          %2038 = vst [vmem:[#allocation3 + $0xe0] sm:$0xff] %v2006
          %2039 = vst [vmem:[#allocation3 + $0xe8] sm:$0xff] %v2007
          %2040 = vst [vmem:[#allocation3 + $0xf0] sm:$0xff] %v2008
          %2041 = vst [vmem:[#allocation3 + $0xf8] sm:$0xff] %v2009
        $region72: #{tpu_custom_call.1} parent=43 // pred_fallthru
          _
        %s2042 = sld [smem:[#allocation6 + %s46]]
        %p2043 = scmp.ne.s32.totalorder %s2042, 0
        // Predicated region
        $region73: #{tpu_custom_call.1} parent=43 // pred_check
          %p2044 = pneg %p2043
        $region74: #{tpu_custom_call.1} parent=43 // pred_check_branch
          %2046 = sbr.rel (%p2044) target = $region76
        $region75: #{tpu_custom_call.1} parent=43 // pred_region
          %2048 = vset.pattern.permute.xlu0 0
          %2049 = vperm.xlu0 %2048, %v625
          %v2050 = vpop.permute.xlu0 %2049
          %v2053 = vunpack.c.l.s4 839922192
          %v2054 = vunpack.c.0.s8 %v2053
          %v2055 = vlaneseq
          %v2056 = vshrl.u32 %v2055, 7
          %v2057 = vsub.s32 %v2054, %v2056
          %v2058 = vrot.slane %v2050, %v2057
          %2060 = vset.pattern.permute.xlu0 0
          %2061 = vperm.xlu0 %2060, %v626
          %v2062 = vpop.permute.xlu0 %2061
          %v2065 = vunpack.c.l.s4 839922192
          %v2066 = vunpack.c.0.s8 %v2065
          %v2067 = vlaneseq
          %v2068 = vshrl.u32 %v2067, 7
          %v2069 = vsub.s32 %v2066, %v2068
          %v2070 = vrot.slane %v2062, %v2069
          %2072 = vset.pattern.permute.xlu0 0
          %2073 = vperm.xlu0 %2072, %v627
          %v2074 = vpop.permute.xlu0 %2073
          %v2077 = vunpack.c.l.s4 839922192
          %v2078 = vunpack.c.0.s8 %v2077
          %v2079 = vlaneseq
          %v2080 = vshrl.u32 %v2079, 7
          %v2081 = vsub.s32 %v2078, %v2080
          %v2082 = vrot.slane %v2074, %v2081
          %2084 = vset.pattern.permute.xlu0 0
          %2085 = vperm.xlu0 %2084, %v628
          %v2086 = vpop.permute.xlu0 %2085
          %v2089 = vunpack.c.l.s4 839922192
          %v2090 = vunpack.c.0.s8 %v2089
          %v2091 = vlaneseq
          %v2092 = vshrl.u32 %v2091, 7
          %v2093 = vsub.s32 %v2090, %v2092
          %v2094 = vrot.slane %v2086, %v2093
          %2096 = vset.pattern.permute.xlu0 0
          %2097 = vperm.xlu0 %2096, %v629
          %v2098 = vpop.permute.xlu0 %2097
          %v2101 = vunpack.c.l.s4 839922192
          %v2102 = vunpack.c.0.s8 %v2101
          %v2103 = vlaneseq
          %v2104 = vshrl.u32 %v2103, 7
          %v2105 = vsub.s32 %v2102, %v2104
          %v2106 = vrot.slane %v2098, %v2105
          %2108 = vset.pattern.permute.xlu0 0
          %2109 = vperm.xlu0 %2108, %v630
          %v2110 = vpop.permute.xlu0 %2109
          %v2113 = vunpack.c.l.s4 839922192
          %v2114 = vunpack.c.0.s8 %v2113
          %v2115 = vlaneseq
          %v2116 = vshrl.u32 %v2115, 7
          %v2117 = vsub.s32 %v2114, %v2116
          %v2118 = vrot.slane %v2110, %v2117
          %2120 = vset.pattern.permute.xlu0 0
          %2121 = vperm.xlu0 %2120, %v631
          %v2122 = vpop.permute.xlu0 %2121
          %v2125 = vunpack.c.l.s4 839922192
          %v2126 = vunpack.c.0.s8 %v2125
          %v2127 = vlaneseq
          %v2128 = vshrl.u32 %v2127, 7
          %v2129 = vsub.s32 %v2126, %v2128
          %v2130 = vrot.slane %v2122, %v2129
          %2132 = vset.pattern.permute.xlu0 0
          %2133 = vperm.xlu0 %2132, %v632
          %v2134 = vpop.permute.xlu0 %2133
          %v2137 = vunpack.c.l.s4 839922192
          %v2138 = vunpack.c.0.s8 %v2137
          %v2139 = vlaneseq
          %v2140 = vshrl.u32 %v2139, 7
          %v2141 = vsub.s32 %v2138, %v2140
          %v2142 = vrot.slane %v2134, %v2141
          %v2143 = vmul.bf16 %v617, %v2058
          %v2144 = vmul.bf16 %v618, %v2070
          %v2145 = vmul.bf16 %v619, %v2082
          %v2146 = vmul.bf16 %v620, %v2094
          %v2147 = vmul.bf16 %v621, %v2106
          %v2148 = vmul.bf16 %v622, %v2118
          %v2149 = vmul.bf16 %v623, %v2130
          %v2150 = vmul.bf16 %v624, %v2142
          %v2151 = vld [vmem:[#allocation2] sm:$0xff]
          %v2152 = vld [vmem:[#allocation2 + $0x8] sm:$0xff]
          %v2153 = vld [vmem:[#allocation2 + $0x10] sm:$0xff]
          %v2154 = vld [vmem:[#allocation2 + $0x18] sm:$0xff]
          %v2155 = vld [vmem:[#allocation2 + $0x20] sm:$0xff]
          %v2156 = vld [vmem:[#allocation2 + $0x28] sm:$0xff]
          %v2157 = vld [vmem:[#allocation2 + $0x30] sm:$0xff]
          %v2158 = vld [vmem:[#allocation2 + $0x38] sm:$0xff]
          %v2159 = vld [vmem:[#allocation2 + $0x40] sm:$0xff]
          %v2160 = vld [vmem:[#allocation2 + $0x48] sm:$0xff]
          %v2161 = vld [vmem:[#allocation2 + $0x50] sm:$0xff]
          %v2162 = vld [vmem:[#allocation2 + $0x58] sm:$0xff]
          %v2163 = vld [vmem:[#allocation2 + $0x60] sm:$0xff]
          %v2164 = vld [vmem:[#allocation2 + $0x68] sm:$0xff]
          %v2165 = vld [vmem:[#allocation2 + $0x70] sm:$0xff]
          %v2166 = vld [vmem:[#allocation2 + $0x78] sm:$0xff]
          %v2167 = vld [vmem:[#allocation2 + $0x80] sm:$0xff]
          %v2168 = vld [vmem:[#allocation2 + $0x88] sm:$0xff]
          %v2169 = vld [vmem:[#allocation2 + $0x90] sm:$0xff]
          %v2170 = vld [vmem:[#allocation2 + $0x98] sm:$0xff]
          %v2171 = vld [vmem:[#allocation2 + $0xa0] sm:$0xff]
          %v2172 = vld [vmem:[#allocation2 + $0xa8] sm:$0xff]
          %v2173 = vld [vmem:[#allocation2 + $0xb0] sm:$0xff]
          %v2174 = vld [vmem:[#allocation2 + $0xb8] sm:$0xff]
          %v2175 = vld [vmem:[#allocation2 + $0xc0] sm:$0xff]
          %v2176 = vld [vmem:[#allocation2 + $0xc8] sm:$0xff]
          %v2177 = vld [vmem:[#allocation2 + $0xd0] sm:$0xff]
          %v2178 = vld [vmem:[#allocation2 + $0xd8] sm:$0xff]
          %v2179 = vld [vmem:[#allocation2 + $0xe0] sm:$0xff]
          %v2180 = vld [vmem:[#allocation2 + $0xe8] sm:$0xff]
          %v2181 = vld [vmem:[#allocation2 + $0xf0] sm:$0xff]
          %v2182 = vld [vmem:[#allocation2 + $0xf8] sm:$0xff]
          %v2183 = vld [vmem:[%s459] sm:$0xff]
          %v2184 = vld [vmem:[%s459 + $0x8] sm:$0xff]
          %v2185 = vld [vmem:[%s459 + $0x10] sm:$0xff]
          %v2186 = vld [vmem:[%s459 + $0x18] sm:$0xff]
          %v2187 = vld [vmem:[%s459 + $0x20] sm:$0xff]
          %v2188 = vld [vmem:[%s459 + $0x28] sm:$0xff]
          %v2189 = vld [vmem:[%s459 + $0x30] sm:$0xff]
          %v2190 = vld [vmem:[%s459 + $0x38] sm:$0xff]
          %v2191 = vld [vmem:[%s459 + $0x40] sm:$0xff]
          %v2192 = vld [vmem:[%s459 + $0x48] sm:$0xff]
          %v2193 = vld [vmem:[%s459 + $0x50] sm:$0xff]
          %v2194 = vld [vmem:[%s459 + $0x58] sm:$0xff]
          %v2195 = vld [vmem:[%s459 + $0x60] sm:$0xff]
          %v2196 = vld [vmem:[%s459 + $0x68] sm:$0xff]
          %v2197 = vld [vmem:[%s459 + $0x70] sm:$0xff]
          %v2198 = vld [vmem:[%s459 + $0x78] sm:$0xff]
          %v2199 = vld [vmem:[%s459 + $0x80] sm:$0xff]
          %v2200 = vld [vmem:[%s459 + $0x88] sm:$0xff]
          %v2201 = vld [vmem:[%s459 + $0x90] sm:$0xff]
          %v2202 = vld [vmem:[%s459 + $0x98] sm:$0xff]
          %v2203 = vld [vmem:[%s459 + $0xa0] sm:$0xff]
          %v2204 = vld [vmem:[%s459 + $0xa8] sm:$0xff]
          %v2205 = vld [vmem:[%s459 + $0xb0] sm:$0xff]
          %v2206 = vld [vmem:[%s459 + $0xb8] sm:$0xff]
          %v2207 = vld [vmem:[%s459 + $0xc0] sm:$0xff]
          %v2208 = vld [vmem:[%s459 + $0xc8] sm:$0xff]
          %v2209 = vld [vmem:[%s459 + $0xd0] sm:$0xff]
          %v2210 = vld [vmem:[%s459 + $0xd8] sm:$0xff]
          %v2211 = vld [vmem:[%s459 + $0xe0] sm:$0xff]
          %v2212 = vld [vmem:[%s459 + $0xe8] sm:$0xff]
          %v2213 = vld [vmem:[%s459 + $0xf0] sm:$0xff]
          %v2214 = vld [vmem:[%s459 + $0xf8] sm:$0xff]
          %v2215 = vld [vmem:[%s459 + $0x100] sm:$0xff]
          %v2216 = vld [vmem:[%s459 + $0x108] sm:$0xff]
          %v2217 = vld [vmem:[%s459 + $0x110] sm:$0xff]
          %v2218 = vld [vmem:[%s459 + $0x118] sm:$0xff]
          %v2219 = vld [vmem:[%s459 + $0x120] sm:$0xff]
          %v2220 = vld [vmem:[%s459 + $0x128] sm:$0xff]
          %v2221 = vld [vmem:[%s459 + $0x130] sm:$0xff]
          %v2222 = vld [vmem:[%s459 + $0x138] sm:$0xff]
          %v2223 = vld [vmem:[%s459 + $0x140] sm:$0xff]
          %v2224 = vld [vmem:[%s459 + $0x148] sm:$0xff]
          %v2225 = vld [vmem:[%s459 + $0x150] sm:$0xff]
          %v2226 = vld [vmem:[%s459 + $0x158] sm:$0xff]
          %v2227 = vld [vmem:[%s459 + $0x160] sm:$0xff]
          %v2228 = vld [vmem:[%s459 + $0x168] sm:$0xff]
          %v2229 = vld [vmem:[%s459 + $0x170] sm:$0xff]
          %v2230 = vld [vmem:[%s459 + $0x178] sm:$0xff]
          %v2231 = vld [vmem:[%s459 + $0x180] sm:$0xff]
          %v2232 = vld [vmem:[%s459 + $0x188] sm:$0xff]
          %v2233 = vld [vmem:[%s459 + $0x190] sm:$0xff]
          %v2234 = vld [vmem:[%s459 + $0x198] sm:$0xff]
          %v2235 = vld [vmem:[%s459 + $0x1a0] sm:$0xff]
          %v2236 = vld [vmem:[%s459 + $0x1a8] sm:$0xff]
          %v2237 = vld [vmem:[%s459 + $0x1b0] sm:$0xff]
          %v2238 = vld [vmem:[%s459 + $0x1b8] sm:$0xff]
          %v2239 = vld [vmem:[%s459 + $0x1c0] sm:$0xff]
          %v2240 = vld [vmem:[%s459 + $0x1c8] sm:$0xff]
          %v2241 = vld [vmem:[%s459 + $0x1d0] sm:$0xff]
          %v2242 = vld [vmem:[%s459 + $0x1d8] sm:$0xff]
          %v2243 = vld [vmem:[%s459 + $0x1e0] sm:$0xff]
          %v2244 = vld [vmem:[%s459 + $0x1e8] sm:$0xff]
          %v2245 = vld [vmem:[%s459 + $0x1f0] sm:$0xff]
          %v2246 = vld [vmem:[%s459 + $0x1f8] sm:$0xff]
          %v2255 = vunpack.c.l.b16 %v2143
          %v2256 = vunpack.c.h.b16 %v2143
          %v2257 = vunpack.c.l.b16 %v2144
          %v2258 = vunpack.c.h.b16 %v2144
          %v2259 = vunpack.c.l.b16 %v2145
          %v2260 = vunpack.c.h.b16 %v2145
          %v2261 = vunpack.c.l.b16 %v2146
          %v2262 = vunpack.c.h.b16 %v2146
          %v2263 = vunpack.c.l.b16 %v2147
          %v2264 = vunpack.c.h.b16 %v2147
          %v2265 = vunpack.c.l.b16 %v2148
          %v2266 = vunpack.c.h.b16 %v2148
          %v2267 = vunpack.c.l.b16 %v2149
          %v2268 = vunpack.c.h.b16 %v2149
          %v2269 = vunpack.c.l.b16 %v2150
          %v2270 = vunpack.c.h.b16 %v2150
          %v2271 = vpack.c.b16 %v2257, %v2255
          %v2272 = vpack.c.b16 %v2258, %v2256
          %v2273 = vpack.c.b16 %v2261, %v2259
          %v2274 = vpack.c.b16 %v2262, %v2260
          %v2275 = vpack.c.b16 %v2265, %v2263
          %v2276 = vpack.c.b16 %v2266, %v2264
          %v2277 = vpack.c.b16 %v2269, %v2267
          %v2278 = vpack.c.b16 %v2270, %v2268
          %v2351 = vunpack.c.l.b16 %v2183
          %v2352 = vunpack.c.h.b16 %v2183
          %v2353 = vunpack.c.l.b16 %v2184
          %v2354 = vunpack.c.h.b16 %v2184
          %v2355 = vunpack.c.l.b16 %v2185
          %v2356 = vunpack.c.h.b16 %v2185
          %v2357 = vunpack.c.l.b16 %v2186
          %v2358 = vunpack.c.h.b16 %v2186
          %v2359 = vunpack.c.l.b16 %v2187
          %v2360 = vunpack.c.h.b16 %v2187
          %v2361 = vunpack.c.l.b16 %v2188
          %v2362 = vunpack.c.h.b16 %v2188
          %v2363 = vunpack.c.l.b16 %v2189
          %v2364 = vunpack.c.h.b16 %v2189
          %v2365 = vunpack.c.l.b16 %v2190
          %v2366 = vunpack.c.h.b16 %v2190
          %v2367 = vunpack.c.l.b16 %v2191
          %v2368 = vunpack.c.h.b16 %v2191
          %v2369 = vunpack.c.l.b16 %v2192
          %v2370 = vunpack.c.h.b16 %v2192
          %v2371 = vunpack.c.l.b16 %v2193
          %v2372 = vunpack.c.h.b16 %v2193
          %v2373 = vunpack.c.l.b16 %v2194
          %v2374 = vunpack.c.h.b16 %v2194
          %v2375 = vunpack.c.l.b16 %v2195
          %v2376 = vunpack.c.h.b16 %v2195
          %v2377 = vunpack.c.l.b16 %v2196
          %v2378 = vunpack.c.h.b16 %v2196
          %v2379 = vunpack.c.l.b16 %v2197
          %v2380 = vunpack.c.h.b16 %v2197
          %v2381 = vunpack.c.l.b16 %v2198
          %v2382 = vunpack.c.h.b16 %v2198
          %v2383 = vunpack.c.l.b16 %v2199
          %v2384 = vunpack.c.h.b16 %v2199
          %v2385 = vunpack.c.l.b16 %v2200
          %v2386 = vunpack.c.h.b16 %v2200
          %v2387 = vunpack.c.l.b16 %v2201
          %v2388 = vunpack.c.h.b16 %v2201
          %v2389 = vunpack.c.l.b16 %v2202
          %v2390 = vunpack.c.h.b16 %v2202
          %v2391 = vunpack.c.l.b16 %v2203
          %v2392 = vunpack.c.h.b16 %v2203
          %v2393 = vunpack.c.l.b16 %v2204
          %v2394 = vunpack.c.h.b16 %v2204
          %v2395 = vunpack.c.l.b16 %v2205
          %v2396 = vunpack.c.h.b16 %v2205
          %v2397 = vunpack.c.l.b16 %v2206
          %v2398 = vunpack.c.h.b16 %v2206
          %v2399 = vunpack.c.l.b16 %v2207
          %v2400 = vunpack.c.h.b16 %v2207
          %v2401 = vunpack.c.l.b16 %v2208
          %v2402 = vunpack.c.h.b16 %v2208
          %v2403 = vunpack.c.l.b16 %v2209
          %v2404 = vunpack.c.h.b16 %v2209
          %v2405 = vunpack.c.l.b16 %v2210
          %v2406 = vunpack.c.h.b16 %v2210
          %v2407 = vunpack.c.l.b16 %v2211
          %v2408 = vunpack.c.h.b16 %v2211
          %v2409 = vunpack.c.l.b16 %v2212
          %v2410 = vunpack.c.h.b16 %v2212
          %v2411 = vunpack.c.l.b16 %v2213
          %v2412 = vunpack.c.h.b16 %v2213
          %v2413 = vunpack.c.l.b16 %v2214
          %v2414 = vunpack.c.h.b16 %v2214
          %v2415 = vunpack.c.l.b16 %v2215
          %v2416 = vunpack.c.h.b16 %v2215
          %v2417 = vunpack.c.l.b16 %v2216
          %v2418 = vunpack.c.h.b16 %v2216
          %v2419 = vunpack.c.l.b16 %v2217
          %v2420 = vunpack.c.h.b16 %v2217
          %v2421 = vunpack.c.l.b16 %v2218
          %v2422 = vunpack.c.h.b16 %v2218
          %v2423 = vunpack.c.l.b16 %v2219
          %v2424 = vunpack.c.h.b16 %v2219
          %v2425 = vunpack.c.l.b16 %v2220
          %v2426 = vunpack.c.h.b16 %v2220
          %v2427 = vunpack.c.l.b16 %v2221
          %v2428 = vunpack.c.h.b16 %v2221
          %v2429 = vunpack.c.l.b16 %v2222
          %v2430 = vunpack.c.h.b16 %v2222
          %v2431 = vunpack.c.l.b16 %v2223
          %v2432 = vunpack.c.h.b16 %v2223
          %v2433 = vunpack.c.l.b16 %v2224
          %v2434 = vunpack.c.h.b16 %v2224
          %v2435 = vunpack.c.l.b16 %v2225
          %v2436 = vunpack.c.h.b16 %v2225
          %v2437 = vunpack.c.l.b16 %v2226
          %v2438 = vunpack.c.h.b16 %v2226
          %v2439 = vunpack.c.l.b16 %v2227
          %v2440 = vunpack.c.h.b16 %v2227
          %v2441 = vunpack.c.l.b16 %v2228
          %v2442 = vunpack.c.h.b16 %v2228
          %v2443 = vunpack.c.l.b16 %v2229
          %v2444 = vunpack.c.h.b16 %v2229
          %v2445 = vunpack.c.l.b16 %v2230
          %v2446 = vunpack.c.h.b16 %v2230
          %v2447 = vunpack.c.l.b16 %v2231
          %v2448 = vunpack.c.h.b16 %v2231
          %v2449 = vunpack.c.l.b16 %v2232
          %v2450 = vunpack.c.h.b16 %v2232
          %v2451 = vunpack.c.l.b16 %v2233
          %v2452 = vunpack.c.h.b16 %v2233
          %v2453 = vunpack.c.l.b16 %v2234
          %v2454 = vunpack.c.h.b16 %v2234
          %v2455 = vunpack.c.l.b16 %v2235
          %v2456 = vunpack.c.h.b16 %v2235
          %v2457 = vunpack.c.l.b16 %v2236
          %v2458 = vunpack.c.h.b16 %v2236
          %v2459 = vunpack.c.l.b16 %v2237
          %v2460 = vunpack.c.h.b16 %v2237
          %v2461 = vunpack.c.l.b16 %v2238
          %v2462 = vunpack.c.h.b16 %v2238
          %v2463 = vunpack.c.l.b16 %v2239
          %v2464 = vunpack.c.h.b16 %v2239
          %v2465 = vunpack.c.l.b16 %v2240
          %v2466 = vunpack.c.h.b16 %v2240
          %v2467 = vunpack.c.l.b16 %v2241
          %v2468 = vunpack.c.h.b16 %v2241
          %v2469 = vunpack.c.l.b16 %v2242
          %v2470 = vunpack.c.h.b16 %v2242
          %v2471 = vunpack.c.l.b16 %v2243
          %v2472 = vunpack.c.h.b16 %v2243
          %v2473 = vunpack.c.l.b16 %v2244
          %v2474 = vunpack.c.h.b16 %v2244
          %v2475 = vunpack.c.l.b16 %v2245
          %v2476 = vunpack.c.h.b16 %v2245
          %v2477 = vunpack.c.l.b16 %v2246
          %v2478 = vunpack.c.h.b16 %v2246
          %v2479 = vpack.c.b16 %v2355, %v2351
          %v2480 = vpack.c.b16 %v2356, %v2352
          %v2481 = vpack.c.b16 %v2357, %v2353
          %v2482 = vpack.c.b16 %v2358, %v2354
          %v2483 = vpack.c.b16 %v2363, %v2359
          %v2484 = vpack.c.b16 %v2364, %v2360
          %v2485 = vpack.c.b16 %v2365, %v2361
          %v2486 = vpack.c.b16 %v2366, %v2362
          %v2487 = vpack.c.b16 %v2371, %v2367
          %v2488 = vpack.c.b16 %v2372, %v2368
          %v2489 = vpack.c.b16 %v2373, %v2369
          %v2490 = vpack.c.b16 %v2374, %v2370
          %v2491 = vpack.c.b16 %v2379, %v2375
          %v2492 = vpack.c.b16 %v2380, %v2376
          %v2493 = vpack.c.b16 %v2381, %v2377
          %v2494 = vpack.c.b16 %v2382, %v2378
          %v2495 = vpack.c.b16 %v2387, %v2383
          %v2496 = vpack.c.b16 %v2388, %v2384
          %v2497 = vpack.c.b16 %v2389, %v2385
          %v2498 = vpack.c.b16 %v2390, %v2386
          %v2499 = vpack.c.b16 %v2395, %v2391
          %v2500 = vpack.c.b16 %v2396, %v2392
          %v2501 = vpack.c.b16 %v2397, %v2393
          %v2502 = vpack.c.b16 %v2398, %v2394
          %v2503 = vpack.c.b16 %v2403, %v2399
          %v2504 = vpack.c.b16 %v2404, %v2400
          %v2505 = vpack.c.b16 %v2405, %v2401
          %v2506 = vpack.c.b16 %v2406, %v2402
          %v2507 = vpack.c.b16 %v2411, %v2407
          %v2508 = vpack.c.b16 %v2412, %v2408
          %v2509 = vpack.c.b16 %v2413, %v2409
          %v2510 = vpack.c.b16 %v2414, %v2410
          %v2511 = vpack.c.b16 %v2419, %v2415
          %v2512 = vpack.c.b16 %v2420, %v2416
          %v2513 = vpack.c.b16 %v2421, %v2417
          %v2514 = vpack.c.b16 %v2422, %v2418
          %v2515 = vpack.c.b16 %v2427, %v2423
          %v2516 = vpack.c.b16 %v2428, %v2424
          %v2517 = vpack.c.b16 %v2429, %v2425
          %v2518 = vpack.c.b16 %v2430, %v2426
          %v2519 = vpack.c.b16 %v2435, %v2431
          %v2520 = vpack.c.b16 %v2436, %v2432
          %v2521 = vpack.c.b16 %v2437, %v2433
          %v2522 = vpack.c.b16 %v2438, %v2434
          %v2523 = vpack.c.b16 %v2443, %v2439
          %v2524 = vpack.c.b16 %v2444, %v2440
          %v2525 = vpack.c.b16 %v2445, %v2441
          %v2526 = vpack.c.b16 %v2446, %v2442
          %v2527 = vpack.c.b16 %v2451, %v2447
          %v2528 = vpack.c.b16 %v2452, %v2448
          %v2529 = vpack.c.b16 %v2453, %v2449
          %v2530 = vpack.c.b16 %v2454, %v2450
          %v2531 = vpack.c.b16 %v2459, %v2455
          %v2532 = vpack.c.b16 %v2460, %v2456
          %v2533 = vpack.c.b16 %v2461, %v2457
          %v2534 = vpack.c.b16 %v2462, %v2458
          %v2535 = vpack.c.b16 %v2467, %v2463
          %v2536 = vpack.c.b16 %v2468, %v2464
          %v2537 = vpack.c.b16 %v2469, %v2465
          %v2538 = vpack.c.b16 %v2470, %v2466
          %v2539 = vpack.c.b16 %v2475, %v2471
          %v2540 = vpack.c.b16 %v2476, %v2472
          %v2541 = vpack.c.b16 %v2477, %v2473
          %v2542 = vpack.c.b16 %v2478, %v2474
          %2607 = vmatprep.subr.bf16.mxu0 %v2480
          %2608 = vmatpush1.bf16.msra.mxu0 %v2479
          %2609 = vmatprep.subr.bf16.mxu0 %v2484
          %2610 = vmatpush1.bf16.msra.mxu0 %v2483
          %2611 = vmatprep.subr.bf16.mxu0 %v2488
          %2612 = vmatpush1.bf16.msra.mxu0 %v2487
          %2613 = vmatprep.subr.bf16.mxu0 %v2492
          %2614 = vmatpush1.bf16.msra.mxu0 %v2491
          %2615 = vmatprep.subr.bf16.mxu0 %v2496
          %2616 = vmatpush1.bf16.msra.mxu0 %v2495
          %2617 = vmatprep.subr.bf16.mxu0 %v2500
          %2618 = vmatpush1.bf16.msra.mxu0 %v2499
          %2619 = vmatprep.subr.bf16.mxu0 %v2504
          %2620 = vmatpush1.bf16.msra.mxu0 %v2503
          %2621 = vmatprep.subr.bf16.mxu0 %v2508
          %2622 = vmatpush1.bf16.msra.mxu0 %v2507
          %2623 = vmatprep.subr.bf16.mxu0 %v2512
          %2624 = vmatpush1.bf16.msra.mxu0 %v2511
          %2625 = vmatprep.subr.bf16.mxu0 %v2516
          %2626 = vmatpush1.bf16.msra.mxu0 %v2515
          %2627 = vmatprep.subr.bf16.mxu0 %v2520
          %2628 = vmatpush1.bf16.msra.mxu0 %v2519
          %2629 = vmatprep.subr.bf16.mxu0 %v2524
          %2630 = vmatpush1.bf16.msra.mxu0 %v2523
          %2631 = vmatprep.subr.bf16.mxu0 %v2528
          %2632 = vmatpush1.bf16.msra.mxu0 %v2527
          %2633 = vmatprep.subr.bf16.mxu0 %v2532
          %2634 = vmatpush1.bf16.msra.mxu0 %v2531
          %2635 = vmatprep.subr.bf16.mxu0 %v2536
          %2636 = vmatpush1.bf16.msra.mxu0 %v2535
          %2637 = vmatprep.subr.bf16.mxu0 %v2540
          %2638 = vmatpush1.bf16.msra.mxu0 %v2539
          %2639 = vmatprep.mubr.bf16.mxu0 %v2272
          %2640 = vmatmul.mubr.bf16.gmra.mrb[0].mxu0 %v2271
          %v2641 = vpop.f32.mrb[0].mxu0
          %v2642 = vadd.f32 0.0, %v2641
          %v2643 = vpop.f32.mrb[0].mxu0
          %v2644 = vadd.f32 0.0, %v2643
          %v2645 = vpop.f32.mrb[0].mxu0
          %v2646 = vadd.f32 0.0, %v2645
          %v2647 = vpop.f32.mrb[0].mxu0
          %v2648 = vadd.f32 0.0, %v2647
          %2649 = vmatprep.mubr.bf16.mxu0 %v2274
          %2650 = vmatmul.mubr.bf16.gmra.mrb[0].mxu0 %v2273
          %v2651 = vpop.f32.mrb[0].mxu0
          %v2652 = vadd.f32 0.0, %v2651
          %v2653 = vpop.f32.mrb[0].mxu0
          %v2654 = vadd.f32 0.0, %v2653
          %v2655 = vpop.f32.mrb[0].mxu0
          %v2656 = vadd.f32 0.0, %v2655
          %v2657 = vpop.f32.mrb[0].mxu0
          %v2658 = vadd.f32 0.0, %v2657
          %2659 = vmatprep.mubr.bf16.mxu0 %v2276
          %2660 = vmatmul.mubr.bf16.gmra.mrb[0].mxu0 %v2275
          %v2661 = vpop.f32.mrb[0].mxu0
          %v2662 = vadd.f32 0.0, %v2661
          %v2663 = vpop.f32.mrb[0].mxu0
          %v2664 = vadd.f32 0.0, %v2663
          %v2665 = vpop.f32.mrb[0].mxu0
          %v2666 = vadd.f32 0.0, %v2665
          %v2667 = vpop.f32.mrb[0].mxu0
          %v2668 = vadd.f32 0.0, %v2667
          %2669 = vmatprep.mubr.bf16.mxu0 %v2278
          %2670 = vmatmul.mubr.bf16.gmra.mrb[0].mxu0 %v2277
          %v2671 = vpop.f32.mrb[0].mxu0
          %v2672 = vadd.f32 0.0, %v2671
          %v2673 = vpop.f32.mrb[0].mxu0
          %v2674 = vadd.f32 0.0, %v2673
          %v2675 = vpop.f32.mrb[0].mxu0
          %v2676 = vadd.f32 0.0, %v2675
          %v2677 = vpop.f32.mrb[0].mxu0
          %v2678 = vadd.f32 0.0, %v2677
          %2679 = vdwg.mxu0
          %2680 = vmatprep.subr.bf16.mxu0 %v2482
          %2681 = vmatpush1.bf16.msra.mxu0 %v2481
          %2682 = vmatprep.subr.bf16.mxu0 %v2486
          %2683 = vmatpush1.bf16.msra.mxu0 %v2485
          %2684 = vmatprep.subr.bf16.mxu0 %v2490
          %2685 = vmatpush1.bf16.msra.mxu0 %v2489
          %2686 = vmatprep.subr.bf16.mxu0 %v2494
          %2687 = vmatpush1.bf16.msra.mxu0 %v2493
          %2688 = vmatprep.subr.bf16.mxu0 %v2498
          %2689 = vmatpush1.bf16.msra.mxu0 %v2497
          %2690 = vmatprep.subr.bf16.mxu0 %v2502
          %2691 = vmatpush1.bf16.msra.mxu0 %v2501
          %2692 = vmatprep.subr.bf16.mxu0 %v2506
          %2693 = vmatpush1.bf16.msra.mxu0 %v2505
          %2694 = vmatprep.subr.bf16.mxu0 %v2510
          %2695 = vmatpush1.bf16.msra.mxu0 %v2509
          %2696 = vmatprep.subr.bf16.mxu0 %v2514
          %2697 = vmatpush1.bf16.msra.mxu0 %v2513
          %2698 = vmatprep.subr.bf16.mxu0 %v2518
          %2699 = vmatpush1.bf16.msra.mxu0 %v2517
          %2700 = vmatprep.subr.bf16.mxu0 %v2522
          %2701 = vmatpush1.bf16.msra.mxu0 %v2521
          %2702 = vmatprep.subr.bf16.mxu0 %v2526
          %2703 = vmatpush1.bf16.msra.mxu0 %v2525
          %2704 = vmatprep.subr.bf16.mxu0 %v2530
          %2705 = vmatpush1.bf16.msra.mxu0 %v2529
          %2706 = vmatprep.subr.bf16.mxu0 %v2534
          %2707 = vmatpush1.bf16.msra.mxu0 %v2533
          %2708 = vmatprep.subr.bf16.mxu0 %v2538
          %2709 = vmatpush1.bf16.msra.mxu0 %v2537
          %2710 = vmatprep.subr.bf16.mxu0 %v2542
          %2711 = vmatpush1.bf16.msra.mxu0 %v2541
          %2712 = vmatprep.mubr.bf16.mxu0 %v2272
          %2713 = vmatmul.mubr.bf16.gmra.mrb[0].mxu0 %v2271
          %v2714 = vpop.f32.mrb[0].mxu0
          %v2715 = vadd.f32 0.0, %v2714
          %v2716 = vpop.f32.mrb[0].mxu0
          %v2717 = vadd.f32 0.0, %v2716
          %v2718 = vpop.f32.mrb[0].mxu0
          %v2719 = vadd.f32 0.0, %v2718
          %v2720 = vpop.f32.mrb[0].mxu0
          %v2721 = vadd.f32 0.0, %v2720
          %2722 = vmatprep.mubr.bf16.mxu0 %v2274
          %2723 = vmatmul.mubr.bf16.gmra.mrb[0].mxu0 %v2273
          %v2724 = vpop.f32.mrb[0].mxu0
          %v2725 = vadd.f32 0.0, %v2724
          %v2726 = vpop.f32.mrb[0].mxu0
          %v2727 = vadd.f32 0.0, %v2726
          %v2728 = vpop.f32.mrb[0].mxu0
          %v2729 = vadd.f32 0.0, %v2728
          %v2730 = vpop.f32.mrb[0].mxu0
          %v2731 = vadd.f32 0.0, %v2730
          %2732 = vmatprep.mubr.bf16.mxu0 %v2276
          %2733 = vmatmul.mubr.bf16.gmra.mrb[0].mxu0 %v2275
          %v2734 = vpop.f32.mrb[0].mxu0
          %v2735 = vadd.f32 0.0, %v2734
          %v2736 = vpop.f32.mrb[0].mxu0
          %v2737 = vadd.f32 0.0, %v2736
          %v2738 = vpop.f32.mrb[0].mxu0
          %v2739 = vadd.f32 0.0, %v2738
          %v2740 = vpop.f32.mrb[0].mxu0
          %v2741 = vadd.f32 0.0, %v2740
          %2742 = vmatprep.mubr.bf16.mxu0 %v2278
          %2743 = vmatmul.mubr.bf16.gmra.mrb[0].mxu0 %v2277
          %v2744 = vpop.f32.mrb[0].mxu0
          %v2745 = vadd.f32 0.0, %v2744
          %v2746 = vpop.f32.mrb[0].mxu0
          %v2747 = vadd.f32 0.0, %v2746
          %v2748 = vpop.f32.mrb[0].mxu0
          %v2749 = vadd.f32 0.0, %v2748
          %v2750 = vpop.f32.mrb[0].mxu0
          %v2751 = vadd.f32 0.0, %v2750
          %2752 = vdwg.mxu0
          %v2753 = vadd.f32 %v2151, %v2642
          %v2754 = vadd.f32 %v2152, %v2644
          %v2755 = vadd.f32 %v2153, %v2715
          %v2756 = vadd.f32 %v2154, %v2717
          %v2757 = vadd.f32 %v2155, %v2646
          %v2758 = vadd.f32 %v2156, %v2648
          %v2759 = vadd.f32 %v2157, %v2719
          %v2760 = vadd.f32 %v2158, %v2721
          %v2761 = vadd.f32 %v2159, %v2652
          %v2762 = vadd.f32 %v2160, %v2654
          %v2763 = vadd.f32 %v2161, %v2725
          %v2764 = vadd.f32 %v2162, %v2727
          %v2765 = vadd.f32 %v2163, %v2656
          %v2766 = vadd.f32 %v2164, %v2658
          %v2767 = vadd.f32 %v2165, %v2729
          %v2768 = vadd.f32 %v2166, %v2731
          %v2769 = vadd.f32 %v2167, %v2662
          %v2770 = vadd.f32 %v2168, %v2664
          %v2771 = vadd.f32 %v2169, %v2735
          %v2772 = vadd.f32 %v2170, %v2737
          %v2773 = vadd.f32 %v2171, %v2666
          %v2774 = vadd.f32 %v2172, %v2668
          %v2775 = vadd.f32 %v2173, %v2739
          %v2776 = vadd.f32 %v2174, %v2741
          %v2777 = vadd.f32 %v2175, %v2672
          %v2778 = vadd.f32 %v2176, %v2674
          %v2779 = vadd.f32 %v2177, %v2745
          %v2780 = vadd.f32 %v2178, %v2747
          %v2781 = vadd.f32 %v2179, %v2676
          %v2782 = vadd.f32 %v2180, %v2678
          %v2783 = vadd.f32 %v2181, %v2749
          %v2784 = vadd.f32 %v2182, %v2751
          %2785 = vst [vmem:[#allocation2] sm:$0xff] %v2753
          %2786 = vst [vmem:[#allocation2 + $0x8] sm:$0xff] %v2754
          %2787 = vst [vmem:[#allocation2 + $0x10] sm:$0xff] %v2755
          %2788 = vst [vmem:[#allocation2 + $0x18] sm:$0xff] %v2756
          %2789 = vst [vmem:[#allocation2 + $0x20] sm:$0xff] %v2757
          %2790 = vst [vmem:[#allocation2 + $0x28] sm:$0xff] %v2758
          %2791 = vst [vmem:[#allocation2 + $0x30] sm:$0xff] %v2759
          %2792 = vst [vmem:[#allocation2 + $0x38] sm:$0xff] %v2760
          %2793 = vst [vmem:[#allocation2 + $0x40] sm:$0xff] %v2761
          %2794 = vst [vmem:[#allocation2 + $0x48] sm:$0xff] %v2762
          %2795 = vst [vmem:[#allocation2 + $0x50] sm:$0xff] %v2763
          %2796 = vst [vmem:[#allocation2 + $0x58] sm:$0xff] %v2764
          %2797 = vst [vmem:[#allocation2 + $0x60] sm:$0xff] %v2765
          %2798 = vst [vmem:[#allocation2 + $0x68] sm:$0xff] %v2766
          %2799 = vst [vmem:[#allocation2 + $0x70] sm:$0xff] %v2767
          %2800 = vst [vmem:[#allocation2 + $0x78] sm:$0xff] %v2768
          %2801 = vst [vmem:[#allocation2 + $0x80] sm:$0xff] %v2769
          %2802 = vst [vmem:[#allocation2 + $0x88] sm:$0xff] %v2770
          %2803 = vst [vmem:[#allocation2 + $0x90] sm:$0xff] %v2771
          %2804 = vst [vmem:[#allocation2 + $0x98] sm:$0xff] %v2772
          %2805 = vst [vmem:[#allocation2 + $0xa0] sm:$0xff] %v2773
          %2806 = vst [vmem:[#allocation2 + $0xa8] sm:$0xff] %v2774
          %2807 = vst [vmem:[#allocation2 + $0xb0] sm:$0xff] %v2775
          %2808 = vst [vmem:[#allocation2 + $0xb8] sm:$0xff] %v2776
          %2809 = vst [vmem:[#allocation2 + $0xc0] sm:$0xff] %v2777
          %2810 = vst [vmem:[#allocation2 + $0xc8] sm:$0xff] %v2778
          %2811 = vst [vmem:[#allocation2 + $0xd0] sm:$0xff] %v2779
          %2812 = vst [vmem:[#allocation2 + $0xd8] sm:$0xff] %v2780
          %2813 = vst [vmem:[#allocation2 + $0xe0] sm:$0xff] %v2781
          %2814 = vst [vmem:[#allocation2 + $0xe8] sm:$0xff] %v2782
          %2815 = vst [vmem:[#allocation2 + $0xf0] sm:$0xff] %v2783
          %2816 = vst [vmem:[#allocation2 + $0xf8] sm:$0xff] %v2784
          %v2817 = vld [vmem:[#allocation3] sm:$0xff]
          %v2818 = vld [vmem:[#allocation3 + $0x8] sm:$0xff]
          %v2819 = vld [vmem:[#allocation3 + $0x10] sm:$0xff]
          %v2820 = vld [vmem:[#allocation3 + $0x18] sm:$0xff]
          %v2821 = vld [vmem:[#allocation3 + $0x20] sm:$0xff]
          %v2822 = vld [vmem:[#allocation3 + $0x28] sm:$0xff]
          %v2823 = vld [vmem:[#allocation3 + $0x30] sm:$0xff]
          %v2824 = vld [vmem:[#allocation3 + $0x38] sm:$0xff]
          %v2825 = vld [vmem:[#allocation3 + $0x40] sm:$0xff]
          %v2826 = vld [vmem:[#allocation3 + $0x48] sm:$0xff]
          %v2827 = vld [vmem:[#allocation3 + $0x50] sm:$0xff]
          %v2828 = vld [vmem:[#allocation3 + $0x58] sm:$0xff]
          %v2829 = vld [vmem:[#allocation3 + $0x60] sm:$0xff]
          %v2830 = vld [vmem:[#allocation3 + $0x68] sm:$0xff]
          %v2831 = vld [vmem:[#allocation3 + $0x70] sm:$0xff]
          %v2832 = vld [vmem:[#allocation3 + $0x78] sm:$0xff]
          %v2833 = vld [vmem:[#allocation3 + $0x80] sm:$0xff]
          %v2834 = vld [vmem:[#allocation3 + $0x88] sm:$0xff]
          %v2835 = vld [vmem:[#allocation3 + $0x90] sm:$0xff]
          %v2836 = vld [vmem:[#allocation3 + $0x98] sm:$0xff]
          %v2837 = vld [vmem:[#allocation3 + $0xa0] sm:$0xff]
          %v2838 = vld [vmem:[#allocation3 + $0xa8] sm:$0xff]
          %v2839 = vld [vmem:[#allocation3 + $0xb0] sm:$0xff]
          %v2840 = vld [vmem:[#allocation3 + $0xb8] sm:$0xff]
          %v2841 = vld [vmem:[#allocation3 + $0xc0] sm:$0xff]
          %v2842 = vld [vmem:[#allocation3 + $0xc8] sm:$0xff]
          %v2843 = vld [vmem:[#allocation3 + $0xd0] sm:$0xff]
          %v2844 = vld [vmem:[#allocation3 + $0xd8] sm:$0xff]
          %v2845 = vld [vmem:[#allocation3 + $0xe0] sm:$0xff]
          %v2846 = vld [vmem:[#allocation3 + $0xe8] sm:$0xff]
          %v2847 = vld [vmem:[#allocation3 + $0xf0] sm:$0xff]
          %v2848 = vld [vmem:[#allocation3 + $0xf8] sm:$0xff]
          %v2849 = vld [vmem:[%s468] sm:$0xff]
          %v2850 = vld [vmem:[%s468 + $0x8] sm:$0xff]
          %v2851 = vld [vmem:[%s468 + $0x10] sm:$0xff]
          %v2852 = vld [vmem:[%s468 + $0x18] sm:$0xff]
          %v2853 = vld [vmem:[%s468 + $0x20] sm:$0xff]
          %v2854 = vld [vmem:[%s468 + $0x28] sm:$0xff]
          %v2855 = vld [vmem:[%s468 + $0x30] sm:$0xff]
          %v2856 = vld [vmem:[%s468 + $0x38] sm:$0xff]
          %v2857 = vld [vmem:[%s468 + $0x40] sm:$0xff]
          %v2858 = vld [vmem:[%s468 + $0x48] sm:$0xff]
          %v2859 = vld [vmem:[%s468 + $0x50] sm:$0xff]
          %v2860 = vld [vmem:[%s468 + $0x58] sm:$0xff]
          %v2861 = vld [vmem:[%s468 + $0x60] sm:$0xff]
          %v2862 = vld [vmem:[%s468 + $0x68] sm:$0xff]
          %v2863 = vld [vmem:[%s468 + $0x70] sm:$0xff]
          %v2864 = vld [vmem:[%s468 + $0x78] sm:$0xff]
          %v2865 = vld [vmem:[%s468 + $0x80] sm:$0xff]
          %v2866 = vld [vmem:[%s468 + $0x88] sm:$0xff]
          %v2867 = vld [vmem:[%s468 + $0x90] sm:$0xff]
          %v2868 = vld [vmem:[%s468 + $0x98] sm:$0xff]
          %v2869 = vld [vmem:[%s468 + $0xa0] sm:$0xff]
          %v2870 = vld [vmem:[%s468 + $0xa8] sm:$0xff]
          %v2871 = vld [vmem:[%s468 + $0xb0] sm:$0xff]
          %v2872 = vld [vmem:[%s468 + $0xb8] sm:$0xff]
          %v2873 = vld [vmem:[%s468 + $0xc0] sm:$0xff]
          %v2874 = vld [vmem:[%s468 + $0xc8] sm:$0xff]
          %v2875 = vld [vmem:[%s468 + $0xd0] sm:$0xff]
          %v2876 = vld [vmem:[%s468 + $0xd8] sm:$0xff]
          %v2877 = vld [vmem:[%s468 + $0xe0] sm:$0xff]
          %v2878 = vld [vmem:[%s468 + $0xe8] sm:$0xff]
          %v2879 = vld [vmem:[%s468 + $0xf0] sm:$0xff]
          %v2880 = vld [vmem:[%s468 + $0xf8] sm:$0xff]
          %v2881 = vld [vmem:[%s468 + $0x100] sm:$0xff]
          %v2882 = vld [vmem:[%s468 + $0x108] sm:$0xff]
          %v2883 = vld [vmem:[%s468 + $0x110] sm:$0xff]
          %v2884 = vld [vmem:[%s468 + $0x118] sm:$0xff]
          %v2885 = vld [vmem:[%s468 + $0x120] sm:$0xff]
          %v2886 = vld [vmem:[%s468 + $0x128] sm:$0xff]
          %v2887 = vld [vmem:[%s468 + $0x130] sm:$0xff]
          %v2888 = vld [vmem:[%s468 + $0x138] sm:$0xff]
          %v2889 = vld [vmem:[%s468 + $0x140] sm:$0xff]
          %v2890 = vld [vmem:[%s468 + $0x148] sm:$0xff]
          %v2891 = vld [vmem:[%s468 + $0x150] sm:$0xff]
          %v2892 = vld [vmem:[%s468 + $0x158] sm:$0xff]
          %v2893 = vld [vmem:[%s468 + $0x160] sm:$0xff]
          %v2894 = vld [vmem:[%s468 + $0x168] sm:$0xff]
          %v2895 = vld [vmem:[%s468 + $0x170] sm:$0xff]
          %v2896 = vld [vmem:[%s468 + $0x178] sm:$0xff]
          %v2897 = vld [vmem:[%s468 + $0x180] sm:$0xff]
          %v2898 = vld [vmem:[%s468 + $0x188] sm:$0xff]
          %v2899 = vld [vmem:[%s468 + $0x190] sm:$0xff]
          %v2900 = vld [vmem:[%s468 + $0x198] sm:$0xff]
          %v2901 = vld [vmem:[%s468 + $0x1a0] sm:$0xff]
          %v2902 = vld [vmem:[%s468 + $0x1a8] sm:$0xff]
          %v2903 = vld [vmem:[%s468 + $0x1b0] sm:$0xff]
          %v2904 = vld [vmem:[%s468 + $0x1b8] sm:$0xff]
          %v2905 = vld [vmem:[%s468 + $0x1c0] sm:$0xff]
          %v2906 = vld [vmem:[%s468 + $0x1c8] sm:$0xff]
          %v2907 = vld [vmem:[%s468 + $0x1d0] sm:$0xff]
          %v2908 = vld [vmem:[%s468 + $0x1d8] sm:$0xff]
          %v2909 = vld [vmem:[%s468 + $0x1e0] sm:$0xff]
          %v2910 = vld [vmem:[%s468 + $0x1e8] sm:$0xff]
          %v2911 = vld [vmem:[%s468 + $0x1f0] sm:$0xff]
          %v2912 = vld [vmem:[%s468 + $0x1f8] sm:$0xff]
          %v2977 = vunpack.c.l.b16 %v2849
          %v2978 = vunpack.c.h.b16 %v2849
          %v2979 = vunpack.c.l.b16 %v2850
          %v2980 = vunpack.c.h.b16 %v2850
          %v2981 = vunpack.c.l.b16 %v2851
          %v2982 = vunpack.c.h.b16 %v2851
          %v2983 = vunpack.c.l.b16 %v2852
          %v2984 = vunpack.c.h.b16 %v2852
          %v2985 = vunpack.c.l.b16 %v2853
          %v2986 = vunpack.c.h.b16 %v2853
          %v2987 = vunpack.c.l.b16 %v2854
          %v2988 = vunpack.c.h.b16 %v2854
          %v2989 = vunpack.c.l.b16 %v2855
          %v2990 = vunpack.c.h.b16 %v2855
          %v2991 = vunpack.c.l.b16 %v2856
          %v2992 = vunpack.c.h.b16 %v2856
          %v2993 = vunpack.c.l.b16 %v2857
          %v2994 = vunpack.c.h.b16 %v2857
          %v2995 = vunpack.c.l.b16 %v2858
          %v2996 = vunpack.c.h.b16 %v2858
          %v2997 = vunpack.c.l.b16 %v2859
          %v2998 = vunpack.c.h.b16 %v2859
          %v2999 = vunpack.c.l.b16 %v2860
          %v3000 = vunpack.c.h.b16 %v2860
          %v3001 = vunpack.c.l.b16 %v2861
          %v3002 = vunpack.c.h.b16 %v2861
          %v3003 = vunpack.c.l.b16 %v2862
          %v3004 = vunpack.c.h.b16 %v2862
          %v3005 = vunpack.c.l.b16 %v2863
          %v3006 = vunpack.c.h.b16 %v2863
          %v3007 = vunpack.c.l.b16 %v2864
          %v3008 = vunpack.c.h.b16 %v2864
          %v3009 = vunpack.c.l.b16 %v2865
          %v3010 = vunpack.c.h.b16 %v2865
          %v3011 = vunpack.c.l.b16 %v2866
          %v3012 = vunpack.c.h.b16 %v2866
          %v3013 = vunpack.c.l.b16 %v2867
          %v3014 = vunpack.c.h.b16 %v2867
          %v3015 = vunpack.c.l.b16 %v2868
          %v3016 = vunpack.c.h.b16 %v2868
          %v3017 = vunpack.c.l.b16 %v2869
          %v3018 = vunpack.c.h.b16 %v2869
          %v3019 = vunpack.c.l.b16 %v2870
          %v3020 = vunpack.c.h.b16 %v2870
          %v3021 = vunpack.c.l.b16 %v2871
          %v3022 = vunpack.c.h.b16 %v2871
          %v3023 = vunpack.c.l.b16 %v2872
          %v3024 = vunpack.c.h.b16 %v2872
          %v3025 = vunpack.c.l.b16 %v2873
          %v3026 = vunpack.c.h.b16 %v2873
          %v3027 = vunpack.c.l.b16 %v2874
          %v3028 = vunpack.c.h.b16 %v2874
          %v3029 = vunpack.c.l.b16 %v2875
          %v3030 = vunpack.c.h.b16 %v2875
          %v3031 = vunpack.c.l.b16 %v2876
          %v3032 = vunpack.c.h.b16 %v2876
          %v3033 = vunpack.c.l.b16 %v2877
          %v3034 = vunpack.c.h.b16 %v2877
          %v3035 = vunpack.c.l.b16 %v2878
          %v3036 = vunpack.c.h.b16 %v2878
          %v3037 = vunpack.c.l.b16 %v2879
          %v3038 = vunpack.c.h.b16 %v2879
          %v3039 = vunpack.c.l.b16 %v2880
          %v3040 = vunpack.c.h.b16 %v2880
          %v3041 = vunpack.c.l.b16 %v2881
          %v3042 = vunpack.c.h.b16 %v2881
          %v3043 = vunpack.c.l.b16 %v2882
          %v3044 = vunpack.c.h.b16 %v2882
          %v3045 = vunpack.c.l.b16 %v2883
          %v3046 = vunpack.c.h.b16 %v2883
          %v3047 = vunpack.c.l.b16 %v2884
          %v3048 = vunpack.c.h.b16 %v2884
          %v3049 = vunpack.c.l.b16 %v2885
          %v3050 = vunpack.c.h.b16 %v2885
          %v3051 = vunpack.c.l.b16 %v2886
          %v3052 = vunpack.c.h.b16 %v2886
          %v3053 = vunpack.c.l.b16 %v2887
          %v3054 = vunpack.c.h.b16 %v2887
          %v3055 = vunpack.c.l.b16 %v2888
          %v3056 = vunpack.c.h.b16 %v2888
          %v3057 = vunpack.c.l.b16 %v2889
          %v3058 = vunpack.c.h.b16 %v2889
          %v3059 = vunpack.c.l.b16 %v2890
          %v3060 = vunpack.c.h.b16 %v2890
          %v3061 = vunpack.c.l.b16 %v2891
          %v3062 = vunpack.c.h.b16 %v2891
          %v3063 = vunpack.c.l.b16 %v2892
          %v3064 = vunpack.c.h.b16 %v2892
          %v3065 = vunpack.c.l.b16 %v2893
          %v3066 = vunpack.c.h.b16 %v2893
          %v3067 = vunpack.c.l.b16 %v2894
          %v3068 = vunpack.c.h.b16 %v2894
          %v3069 = vunpack.c.l.b16 %v2895
          %v3070 = vunpack.c.h.b16 %v2895
          %v3071 = vunpack.c.l.b16 %v2896
          %v3072 = vunpack.c.h.b16 %v2896
          %v3073 = vunpack.c.l.b16 %v2897
          %v3074 = vunpack.c.h.b16 %v2897
          %v3075 = vunpack.c.l.b16 %v2898
          %v3076 = vunpack.c.h.b16 %v2898
          %v3077 = vunpack.c.l.b16 %v2899
          %v3078 = vunpack.c.h.b16 %v2899
          %v3079 = vunpack.c.l.b16 %v2900
          %v3080 = vunpack.c.h.b16 %v2900
          %v3081 = vunpack.c.l.b16 %v2901
          %v3082 = vunpack.c.h.b16 %v2901
          %v3083 = vunpack.c.l.b16 %v2902
          %v3084 = vunpack.c.h.b16 %v2902
          %v3085 = vunpack.c.l.b16 %v2903
          %v3086 = vunpack.c.h.b16 %v2903
          %v3087 = vunpack.c.l.b16 %v2904
          %v3088 = vunpack.c.h.b16 %v2904
          %v3089 = vunpack.c.l.b16 %v2905
          %v3090 = vunpack.c.h.b16 %v2905
          %v3091 = vunpack.c.l.b16 %v2906
          %v3092 = vunpack.c.h.b16 %v2906
          %v3093 = vunpack.c.l.b16 %v2907
          %v3094 = vunpack.c.h.b16 %v2907
          %v3095 = vunpack.c.l.b16 %v2908
          %v3096 = vunpack.c.h.b16 %v2908
          %v3097 = vunpack.c.l.b16 %v2909
          %v3098 = vunpack.c.h.b16 %v2909
          %v3099 = vunpack.c.l.b16 %v2910
          %v3100 = vunpack.c.h.b16 %v2910
          %v3101 = vunpack.c.l.b16 %v2911
          %v3102 = vunpack.c.h.b16 %v2911
          %v3103 = vunpack.c.l.b16 %v2912
          %v3104 = vunpack.c.h.b16 %v2912
          %v3105 = vpack.c.b16 %v2981, %v2977
          %v3106 = vpack.c.b16 %v2982, %v2978
          %v3107 = vpack.c.b16 %v2983, %v2979
          %v3108 = vpack.c.b16 %v2984, %v2980
          %v3109 = vpack.c.b16 %v2989, %v2985
          %v3110 = vpack.c.b16 %v2990, %v2986
          %v3111 = vpack.c.b16 %v2991, %v2987
          %v3112 = vpack.c.b16 %v2992, %v2988
          %v3113 = vpack.c.b16 %v2997, %v2993
          %v3114 = vpack.c.b16 %v2998, %v2994
          %v3115 = vpack.c.b16 %v2999, %v2995
          %v3116 = vpack.c.b16 %v3000, %v2996
          %v3117 = vpack.c.b16 %v3005, %v3001
          %v3118 = vpack.c.b16 %v3006, %v3002
          %v3119 = vpack.c.b16 %v3007, %v3003
          %v3120 = vpack.c.b16 %v3008, %v3004
          %v3121 = vpack.c.b16 %v3013, %v3009
          %v3122 = vpack.c.b16 %v3014, %v3010
          %v3123 = vpack.c.b16 %v3015, %v3011
          %v3124 = vpack.c.b16 %v3016, %v3012
          %v3125 = vpack.c.b16 %v3021, %v3017
          %v3126 = vpack.c.b16 %v3022, %v3018
          %v3127 = vpack.c.b16 %v3023, %v3019
          %v3128 = vpack.c.b16 %v3024, %v3020
          %v3129 = vpack.c.b16 %v3029, %v3025
          %v3130 = vpack.c.b16 %v3030, %v3026
          %v3131 = vpack.c.b16 %v3031, %v3027
          %v3132 = vpack.c.b16 %v3032, %v3028
          %v3133 = vpack.c.b16 %v3037, %v3033
          %v3134 = vpack.c.b16 %v3038, %v3034
          %v3135 = vpack.c.b16 %v3039, %v3035
          %v3136 = vpack.c.b16 %v3040, %v3036
          %v3137 = vpack.c.b16 %v3045, %v3041
          %v3138 = vpack.c.b16 %v3046, %v3042
          %v3139 = vpack.c.b16 %v3047, %v3043
          %v3140 = vpack.c.b16 %v3048, %v3044
          %v3141 = vpack.c.b16 %v3053, %v3049
          %v3142 = vpack.c.b16 %v3054, %v3050
          %v3143 = vpack.c.b16 %v3055, %v3051
          %v3144 = vpack.c.b16 %v3056, %v3052
          %v3145 = vpack.c.b16 %v3061, %v3057
          %v3146 = vpack.c.b16 %v3062, %v3058
          %v3147 = vpack.c.b16 %v3063, %v3059
          %v3148 = vpack.c.b16 %v3064, %v3060
          %v3149 = vpack.c.b16 %v3069, %v3065
          %v3150 = vpack.c.b16 %v3070, %v3066
          %v3151 = vpack.c.b16 %v3071, %v3067
          %v3152 = vpack.c.b16 %v3072, %v3068
          %v3153 = vpack.c.b16 %v3077, %v3073
          %v3154 = vpack.c.b16 %v3078, %v3074
          %v3155 = vpack.c.b16 %v3079, %v3075
          %v3156 = vpack.c.b16 %v3080, %v3076
          %v3157 = vpack.c.b16 %v3085, %v3081
          %v3158 = vpack.c.b16 %v3086, %v3082
          %v3159 = vpack.c.b16 %v3087, %v3083
          %v3160 = vpack.c.b16 %v3088, %v3084
          %v3161 = vpack.c.b16 %v3093, %v3089
          %v3162 = vpack.c.b16 %v3094, %v3090
          %v3163 = vpack.c.b16 %v3095, %v3091
          %v3164 = vpack.c.b16 %v3096, %v3092
          %v3165 = vpack.c.b16 %v3101, %v3097
          %v3166 = vpack.c.b16 %v3102, %v3098
          %v3167 = vpack.c.b16 %v3103, %v3099
          %v3168 = vpack.c.b16 %v3104, %v3100
          %3233 = vmatprep.subr.bf16.mxu0 %v3106
          %3234 = vmatpush1.bf16.msra.mxu0 %v3105
          %3235 = vmatprep.subr.bf16.mxu0 %v3110
          %3236 = vmatpush1.bf16.msra.mxu0 %v3109
          %3237 = vmatprep.subr.bf16.mxu0 %v3114
          %3238 = vmatpush1.bf16.msra.mxu0 %v3113
          %3239 = vmatprep.subr.bf16.mxu0 %v3118
          %3240 = vmatpush1.bf16.msra.mxu0 %v3117
          %3241 = vmatprep.subr.bf16.mxu0 %v3122
          %3242 = vmatpush1.bf16.msra.mxu0 %v3121
          %3243 = vmatprep.subr.bf16.mxu0 %v3126
          %3244 = vmatpush1.bf16.msra.mxu0 %v3125
          %3245 = vmatprep.subr.bf16.mxu0 %v3130
          %3246 = vmatpush1.bf16.msra.mxu0 %v3129
          %3247 = vmatprep.subr.bf16.mxu0 %v3134
          %3248 = vmatpush1.bf16.msra.mxu0 %v3133
          %3249 = vmatprep.subr.bf16.mxu0 %v3138
          %3250 = vmatpush1.bf16.msra.mxu0 %v3137
          %3251 = vmatprep.subr.bf16.mxu0 %v3142
          %3252 = vmatpush1.bf16.msra.mxu0 %v3141
          %3253 = vmatprep.subr.bf16.mxu0 %v3146
          %3254 = vmatpush1.bf16.msra.mxu0 %v3145
          %3255 = vmatprep.subr.bf16.mxu0 %v3150
          %3256 = vmatpush1.bf16.msra.mxu0 %v3149
          %3257 = vmatprep.subr.bf16.mxu0 %v3154
          %3258 = vmatpush1.bf16.msra.mxu0 %v3153
          %3259 = vmatprep.subr.bf16.mxu0 %v3158
          %3260 = vmatpush1.bf16.msra.mxu0 %v3157
          %3261 = vmatprep.subr.bf16.mxu0 %v3162
          %3262 = vmatpush1.bf16.msra.mxu0 %v3161
          %3263 = vmatprep.subr.bf16.mxu0 %v3166
          %3264 = vmatpush1.bf16.msra.mxu0 %v3165
          %3265 = vmatprep.mubr.bf16.mxu0 %v2272
          %3266 = vmatmul.mubr.bf16.gmra.mrb[0].mxu0 %v2271
          %v3267 = vpop.f32.mrb[0].mxu0
          %v3268 = vadd.f32 0.0, %v3267
          %v3269 = vpop.f32.mrb[0].mxu0
          %v3270 = vadd.f32 0.0, %v3269
          %v3271 = vpop.f32.mrb[0].mxu0
          %v3272 = vadd.f32 0.0, %v3271
          %v3273 = vpop.f32.mrb[0].mxu0
          %v3274 = vadd.f32 0.0, %v3273
          %3275 = vmatprep.mubr.bf16.mxu0 %v2274
          %3276 = vmatmul.mubr.bf16.gmra.mrb[0].mxu0 %v2273
          %v3277 = vpop.f32.mrb[0].mxu0
          %v3278 = vadd.f32 0.0, %v3277
          %v3279 = vpop.f32.mrb[0].mxu0
          %v3280 = vadd.f32 0.0, %v3279
          %v3281 = vpop.f32.mrb[0].mxu0
          %v3282 = vadd.f32 0.0, %v3281
          %v3283 = vpop.f32.mrb[0].mxu0
          %v3284 = vadd.f32 0.0, %v3283
          %3285 = vmatprep.mubr.bf16.mxu0 %v2276
          %3286 = vmatmul.mubr.bf16.gmra.mrb[0].mxu0 %v2275
          %v3287 = vpop.f32.mrb[0].mxu0
          %v3288 = vadd.f32 0.0, %v3287
          %v3289 = vpop.f32.mrb[0].mxu0
          %v3290 = vadd.f32 0.0, %v3289
          %v3291 = vpop.f32.mrb[0].mxu0
          %v3292 = vadd.f32 0.0, %v3291
          %v3293 = vpop.f32.mrb[0].mxu0
          %v3294 = vadd.f32 0.0, %v3293
          %3295 = vmatprep.mubr.bf16.mxu0 %v2278
          %3296 = vmatmul.mubr.bf16.gmra.mrb[0].mxu0 %v2277
          %v3297 = vpop.f32.mrb[0].mxu0
          %v3298 = vadd.f32 0.0, %v3297
          %v3299 = vpop.f32.mrb[0].mxu0
          %v3300 = vadd.f32 0.0, %v3299
          %v3301 = vpop.f32.mrb[0].mxu0
          %v3302 = vadd.f32 0.0, %v3301
          %v3303 = vpop.f32.mrb[0].mxu0
          %v3304 = vadd.f32 0.0, %v3303
          %3305 = vdwg.mxu0
          %3306 = vmatprep.subr.bf16.mxu0 %v3108
          %3307 = vmatpush1.bf16.msra.mxu0 %v3107
          %3308 = vmatprep.subr.bf16.mxu0 %v3112
          %3309 = vmatpush1.bf16.msra.mxu0 %v3111
          %3310 = vmatprep.subr.bf16.mxu0 %v3116
          %3311 = vmatpush1.bf16.msra.mxu0 %v3115
          %3312 = vmatprep.subr.bf16.mxu0 %v3120
          %3313 = vmatpush1.bf16.msra.mxu0 %v3119
          %3314 = vmatprep.subr.bf16.mxu0 %v3124
          %3315 = vmatpush1.bf16.msra.mxu0 %v3123
          %3316 = vmatprep.subr.bf16.mxu0 %v3128
          %3317 = vmatpush1.bf16.msra.mxu0 %v3127
          %3318 = vmatprep.subr.bf16.mxu0 %v3132
          %3319 = vmatpush1.bf16.msra.mxu0 %v3131
          %3320 = vmatprep.subr.bf16.mxu0 %v3136
          %3321 = vmatpush1.bf16.msra.mxu0 %v3135
          %3322 = vmatprep.subr.bf16.mxu0 %v3140
          %3323 = vmatpush1.bf16.msra.mxu0 %v3139
          %3324 = vmatprep.subr.bf16.mxu0 %v3144
          %3325 = vmatpush1.bf16.msra.mxu0 %v3143
          %3326 = vmatprep.subr.bf16.mxu0 %v3148
          %3327 = vmatpush1.bf16.msra.mxu0 %v3147
          %3328 = vmatprep.subr.bf16.mxu0 %v3152
          %3329 = vmatpush1.bf16.msra.mxu0 %v3151
          %3330 = vmatprep.subr.bf16.mxu0 %v3156
          %3331 = vmatpush1.bf16.msra.mxu0 %v3155
          %3332 = vmatprep.subr.bf16.mxu0 %v3160
          %3333 = vmatpush1.bf16.msra.mxu0 %v3159
          %3334 = vmatprep.subr.bf16.mxu0 %v3164
          %3335 = vmatpush1.bf16.msra.mxu0 %v3163
          %3336 = vmatprep.subr.bf16.mxu0 %v3168
          %3337 = vmatpush1.bf16.msra.mxu0 %v3167
          %3338 = vmatprep.mubr.bf16.mxu0 %v2272
          %3339 = vmatmul.mubr.bf16.gmra.mrb[0].mxu0 %v2271
          %v3340 = vpop.f32.mrb[0].mxu0
          %v3341 = vadd.f32 0.0, %v3340
          %v3342 = vpop.f32.mrb[0].mxu0
          %v3343 = vadd.f32 0.0, %v3342
          %v3344 = vpop.f32.mrb[0].mxu0
          %v3345 = vadd.f32 0.0, %v3344
          %v3346 = vpop.f32.mrb[0].mxu0
          %v3347 = vadd.f32 0.0, %v3346
          %3348 = vmatprep.mubr.bf16.mxu0 %v2274
          %3349 = vmatmul.mubr.bf16.gmra.mrb[0].mxu0 %v2273
          %v3350 = vpop.f32.mrb[0].mxu0
          %v3351 = vadd.f32 0.0, %v3350
          %v3352 = vpop.f32.mrb[0].mxu0
          %v3353 = vadd.f32 0.0, %v3352
          %v3354 = vpop.f32.mrb[0].mxu0
          %v3355 = vadd.f32 0.0, %v3354
          %v3356 = vpop.f32.mrb[0].mxu0
          %v3357 = vadd.f32 0.0, %v3356
          %3358 = vmatprep.mubr.bf16.mxu0 %v2276
          %3359 = vmatmul.mubr.bf16.gmra.mrb[0].mxu0 %v2275
          %v3360 = vpop.f32.mrb[0].mxu0
          %v3361 = vadd.f32 0.0, %v3360
          %v3362 = vpop.f32.mrb[0].mxu0
          %v3363 = vadd.f32 0.0, %v3362
          %v3364 = vpop.f32.mrb[0].mxu0
          %v3365 = vadd.f32 0.0, %v3364
          %v3366 = vpop.f32.mrb[0].mxu0
          %v3367 = vadd.f32 0.0, %v3366
          %3368 = vmatprep.mubr.bf16.mxu0 %v2278
          %3369 = vmatmul.mubr.bf16.gmra.mrb[0].mxu0 %v2277
          %v3370 = vpop.f32.mrb[0].mxu0
          %v3371 = vadd.f32 0.0, %v3370
          %v3372 = vpop.f32.mrb[0].mxu0
          %v3373 = vadd.f32 0.0, %v3372
          %v3374 = vpop.f32.mrb[0].mxu0
          %v3375 = vadd.f32 0.0, %v3374
          %v3376 = vpop.f32.mrb[0].mxu0
          %v3377 = vadd.f32 0.0, %v3376
          %3378 = vdwg.mxu0
          %v3379 = vadd.f32 %v2817, %v3268
          %v3380 = vadd.f32 %v2818, %v3270
          %v3381 = vadd.f32 %v2819, %v3341
          %v3382 = vadd.f32 %v2820, %v3343
          %v3383 = vadd.f32 %v2821, %v3272
          %v3384 = vadd.f32 %v2822, %v3274
          %v3385 = vadd.f32 %v2823, %v3345
          %v3386 = vadd.f32 %v2824, %v3347
          %v3387 = vadd.f32 %v2825, %v3278
          %v3388 = vadd.f32 %v2826, %v3280
          %v3389 = vadd.f32 %v2827, %v3351
          %v3390 = vadd.f32 %v2828, %v3353
          %v3391 = vadd.f32 %v2829, %v3282
          %v3392 = vadd.f32 %v2830, %v3284
          %v3393 = vadd.f32 %v2831, %v3355
          %v3394 = vadd.f32 %v2832, %v3357
          %v3395 = vadd.f32 %v2833, %v3288
          %v3396 = vadd.f32 %v2834, %v3290
          %v3397 = vadd.f32 %v2835, %v3361
          %v3398 = vadd.f32 %v2836, %v3363
          %v3399 = vadd.f32 %v2837, %v3292
          %v3400 = vadd.f32 %v2838, %v3294
          %v3401 = vadd.f32 %v2839, %v3365
          %v3402 = vadd.f32 %v2840, %v3367
          %v3403 = vadd.f32 %v2841, %v3298
          %v3404 = vadd.f32 %v2842, %v3300
          %v3405 = vadd.f32 %v2843, %v3371
          %v3406 = vadd.f32 %v2844, %v3373
          %v3407 = vadd.f32 %v2845, %v3302
          %v3408 = vadd.f32 %v2846, %v3304
          %v3409 = vadd.f32 %v2847, %v3375
          %v3410 = vadd.f32 %v2848, %v3377
          %3411 = vst [vmem:[#allocation3] sm:$0xff] %v3379
          %3412 = vst [vmem:[#allocation3 + $0x8] sm:$0xff] %v3380
          %3413 = vst [vmem:[#allocation3 + $0x10] sm:$0xff] %v3381
          %3414 = vst [vmem:[#allocation3 + $0x18] sm:$0xff] %v3382
          %3415 = vst [vmem:[#allocation3 + $0x20] sm:$0xff] %v3383
          %3416 = vst [vmem:[#allocation3 + $0x28] sm:$0xff] %v3384
          %3417 = vst [vmem:[#allocation3 + $0x30] sm:$0xff] %v3385
          %3418 = vst [vmem:[#allocation3 + $0x38] sm:$0xff] %v3386
          %3419 = vst [vmem:[#allocation3 + $0x40] sm:$0xff] %v3387
          %3420 = vst [vmem:[#allocation3 + $0x48] sm:$0xff] %v3388
          %3421 = vst [vmem:[#allocation3 + $0x50] sm:$0xff] %v3389
          %3422 = vst [vmem:[#allocation3 + $0x58] sm:$0xff] %v3390
          %3423 = vst [vmem:[#allocation3 + $0x60] sm:$0xff] %v3391
          %3424 = vst [vmem:[#allocation3 + $0x68] sm:$0xff] %v3392
          %3425 = vst [vmem:[#allocation3 + $0x70] sm:$0xff] %v3393
          %3426 = vst [vmem:[#allocation3 + $0x78] sm:$0xff] %v3394
          %3427 = vst [vmem:[#allocation3 + $0x80] sm:$0xff] %v3395
          %3428 = vst [vmem:[#allocation3 + $0x88] sm:$0xff] %v3396
          %3429 = vst [vmem:[#allocation3 + $0x90] sm:$0xff] %v3397
          %3430 = vst [vmem:[#allocation3 + $0x98] sm:$0xff] %v3398
          %3431 = vst [vmem:[#allocation3 + $0xa0] sm:$0xff] %v3399
          %3432 = vst [vmem:[#allocation3 + $0xa8] sm:$0xff] %v3400
          %3433 = vst [vmem:[#allocation3 + $0xb0] sm:$0xff] %v3401
          %3434 = vst [vmem:[#allocation3 + $0xb8] sm:$0xff] %v3402
          %3435 = vst [vmem:[#allocation3 + $0xc0] sm:$0xff] %v3403
          %3436 = vst [vmem:[#allocation3 + $0xc8] sm:$0xff] %v3404
          %3437 = vst [vmem:[#allocation3 + $0xd0] sm:$0xff] %v3405
          %3438 = vst [vmem:[#allocation3 + $0xd8] sm:$0xff] %v3406
          %3439 = vst [vmem:[#allocation3 + $0xe0] sm:$0xff] %v3407
          %3440 = vst [vmem:[#allocation3 + $0xe8] sm:$0xff] %v3408
          %3441 = vst [vmem:[#allocation3 + $0xf0] sm:$0xff] %v3409
          %3442 = vst [vmem:[#allocation3 + $0xf8] sm:$0xff] %v3410
        $region76: #{tpu_custom_call.1} parent=43 // pred_fallthru
          _
        %p3443 = scmp.eq.s32.totalorder %s48, 1
        // Predicated region
        $region77: #{tpu_custom_call.1} parent=43 // pred_check
          %p3444 = pneg %p3443
        $region78: #{tpu_custom_call.1} parent=43 // pred_check_branch
          %3446 = sbr.rel (%p3444) target = $region80
        $region79: #{tpu_custom_call.1} parent=43 // pred_region
          %v3447 = vld [vmem:[#allocation2] sm:$0xff]
          %v3448 = vld [vmem:[#allocation2 + $0x8] sm:$0xff]
          %v3449 = vld [vmem:[#allocation2 + $0x10] sm:$0xff]
          %v3450 = vld [vmem:[#allocation2 + $0x18] sm:$0xff]
          %v3451 = vld [vmem:[#allocation2 + $0x20] sm:$0xff]
          %v3452 = vld [vmem:[#allocation2 + $0x28] sm:$0xff]
          %v3453 = vld [vmem:[#allocation2 + $0x30] sm:$0xff]
          %v3454 = vld [vmem:[#allocation2 + $0x38] sm:$0xff]
          %v3455 = vld [vmem:[#allocation2 + $0x40] sm:$0xff]
          %v3456 = vld [vmem:[#allocation2 + $0x48] sm:$0xff]
          %v3457 = vld [vmem:[#allocation2 + $0x50] sm:$0xff]
          %v3458 = vld [vmem:[#allocation2 + $0x58] sm:$0xff]
          %v3459 = vld [vmem:[#allocation2 + $0x60] sm:$0xff]
          %v3460 = vld [vmem:[#allocation2 + $0x68] sm:$0xff]
          %v3461 = vld [vmem:[#allocation2 + $0x70] sm:$0xff]
          %v3462 = vld [vmem:[#allocation2 + $0x78] sm:$0xff]
          %v3463 = vld [vmem:[#allocation2 + $0x80] sm:$0xff]
          %v3464 = vld [vmem:[#allocation2 + $0x88] sm:$0xff]
          %v3465 = vld [vmem:[#allocation2 + $0x90] sm:$0xff]
          %v3466 = vld [vmem:[#allocation2 + $0x98] sm:$0xff]
          %v3467 = vld [vmem:[#allocation2 + $0xa0] sm:$0xff]
          %v3468 = vld [vmem:[#allocation2 + $0xa8] sm:$0xff]
          %v3469 = vld [vmem:[#allocation2 + $0xb0] sm:$0xff]
          %v3470 = vld [vmem:[#allocation2 + $0xb8] sm:$0xff]
          %v3471 = vld [vmem:[#allocation2 + $0xc0] sm:$0xff]
          %v3472 = vld [vmem:[#allocation2 + $0xc8] sm:$0xff]
          %v3473 = vld [vmem:[#allocation2 + $0xd0] sm:$0xff]
          %v3474 = vld [vmem:[#allocation2 + $0xd8] sm:$0xff]
          %v3475 = vld [vmem:[#allocation2 + $0xe0] sm:$0xff]
          %v3476 = vld [vmem:[#allocation2 + $0xe8] sm:$0xff]
          %v3477 = vld [vmem:[#allocation2 + $0xf0] sm:$0xff]
          %v3478 = vld [vmem:[#allocation2 + $0xf8] sm:$0xff]
          %v3479 = vxor.u32 %v3447, 2147483648
          %v3480 = vxor.u32 %v3448, 2147483648
          %v3481 = vxor.u32 %v3449, 2147483648
          %v3482 = vxor.u32 %v3450, 2147483648
          %v3483 = vxor.u32 %v3451, 2147483648
          %v3484 = vxor.u32 %v3452, 2147483648
          %v3485 = vxor.u32 %v3453, 2147483648
          %v3486 = vxor.u32 %v3454, 2147483648
          %v3487 = vxor.u32 %v3455, 2147483648
          %v3488 = vxor.u32 %v3456, 2147483648
          %v3489 = vxor.u32 %v3457, 2147483648
          %v3490 = vxor.u32 %v3458, 2147483648
          %v3491 = vxor.u32 %v3459, 2147483648
          %v3492 = vxor.u32 %v3460, 2147483648
          %v3493 = vxor.u32 %v3461, 2147483648
          %v3494 = vxor.u32 %v3462, 2147483648
          %v3495 = vxor.u32 %v3463, 2147483648
          %v3496 = vxor.u32 %v3464, 2147483648
          %v3497 = vxor.u32 %v3465, 2147483648
          %v3498 = vxor.u32 %v3466, 2147483648
          %v3499 = vxor.u32 %v3467, 2147483648
          %v3500 = vxor.u32 %v3468, 2147483648
          %v3501 = vxor.u32 %v3469, 2147483648
          %v3502 = vxor.u32 %v3470, 2147483648
          %v3503 = vxor.u32 %v3471, 2147483648
          %v3504 = vxor.u32 %v3472, 2147483648
          %v3505 = vxor.u32 %v3473, 2147483648
          %v3506 = vxor.u32 %v3474, 2147483648
          %v3507 = vxor.u32 %v3475, 2147483648
          %v3508 = vxor.u32 %v3476, 2147483648
          %v3509 = vxor.u32 %v3477, 2147483648
          %v3510 = vxor.u32 %v3478, 2147483648
          %v3511 = vmul.f32 %v3479, 1.442695
          %v3512 = vpow.pop %v3511
          %v3513 = vmul.f32 %v3480, 1.442695
          %v3514 = vpow.pop %v3513
          %v3515 = vmul.f32 %v3481, 1.442695
          %v3516 = vpow.pop %v3515
          %v3517 = vmul.f32 %v3482, 1.442695
          %v3518 = vpow.pop %v3517
          %v3519 = vmul.f32 %v3483, 1.442695
          %v3520 = vpow.pop %v3519
          %v3521 = vmul.f32 %v3484, 1.442695
          %v3522 = vpow.pop %v3521
          %v3523 = vmul.f32 %v3485, 1.442695
          %v3524 = vpow.pop %v3523
          %v3525 = vmul.f32 %v3486, 1.442695
          %v3526 = vpow.pop %v3525
          %v3527 = vmul.f32 %v3487, 1.442695
          %v3528 = vpow.pop %v3527
          %v3529 = vmul.f32 %v3488, 1.442695
          %v3530 = vpow.pop %v3529
          %v3531 = vmul.f32 %v3489, 1.442695
          %v3532 = vpow.pop %v3531
          %v3533 = vmul.f32 %v3490, 1.442695
          %v3534 = vpow.pop %v3533
          %v3535 = vmul.f32 %v3491, 1.442695
          %v3536 = vpow.pop %v3535
          %v3537 = vmul.f32 %v3492, 1.442695
          %v3538 = vpow.pop %v3537
          %v3539 = vmul.f32 %v3493, 1.442695
          %v3540 = vpow.pop %v3539
          %v3541 = vmul.f32 %v3494, 1.442695
          %v3542 = vpow.pop %v3541
          %v3543 = vmul.f32 %v3495, 1.442695
          %v3544 = vpow.pop %v3543
          %v3545 = vmul.f32 %v3496, 1.442695
          %v3546 = vpow.pop %v3545
          %v3547 = vmul.f32 %v3497, 1.442695
          %v3548 = vpow.pop %v3547
          %v3549 = vmul.f32 %v3498, 1.442695
          %v3550 = vpow.pop %v3549
          %v3551 = vmul.f32 %v3499, 1.442695
          %v3552 = vpow.pop %v3551
          %v3553 = vmul.f32 %v3500, 1.442695
          %v3554 = vpow.pop %v3553
          %v3555 = vmul.f32 %v3501, 1.442695
          %v3556 = vpow.pop %v3555
          %v3557 = vmul.f32 %v3502, 1.442695
          %v3558 = vpow.pop %v3557
          %v3559 = vmul.f32 %v3503, 1.442695
          %v3560 = vpow.pop %v3559
          %v3561 = vmul.f32 %v3504, 1.442695
          %v3562 = vpow.pop %v3561
          %v3563 = vmul.f32 %v3505, 1.442695
          %v3564 = vpow.pop %v3563
          %v3565 = vmul.f32 %v3506, 1.442695
          %v3566 = vpow.pop %v3565
          %v3567 = vmul.f32 %v3507, 1.442695
          %v3568 = vpow.pop %v3567
          %v3569 = vmul.f32 %v3508, 1.442695
          %v3570 = vpow.pop %v3569
          %v3571 = vmul.f32 %v3509, 1.442695
          %v3572 = vpow.pop %v3571
          %v3573 = vmul.f32 %v3510, 1.442695
          %v3574 = vpow.pop %v3573
          %v3575 = vadd.f32 %v3512, 1.0
          %v3576 = vadd.f32 %v3514, 1.0
          %v3577 = vadd.f32 %v3516, 1.0
          %v3578 = vadd.f32 %v3518, 1.0
          %v3579 = vadd.f32 %v3520, 1.0
          %v3580 = vadd.f32 %v3522, 1.0
          %v3581 = vadd.f32 %v3524, 1.0
          %v3582 = vadd.f32 %v3526, 1.0
          %v3583 = vadd.f32 %v3528, 1.0
          %v3584 = vadd.f32 %v3530, 1.0
          %v3585 = vadd.f32 %v3532, 1.0
          %v3586 = vadd.f32 %v3534, 1.0
          %v3587 = vadd.f32 %v3536, 1.0
          %v3588 = vadd.f32 %v3538, 1.0
          %v3589 = vadd.f32 %v3540, 1.0
          %v3590 = vadd.f32 %v3542, 1.0
          %v3591 = vadd.f32 %v3544, 1.0
          %v3592 = vadd.f32 %v3546, 1.0
          %v3593 = vadd.f32 %v3548, 1.0
          %v3594 = vadd.f32 %v3550, 1.0
          %v3595 = vadd.f32 %v3552, 1.0
          %v3596 = vadd.f32 %v3554, 1.0
          %v3597 = vadd.f32 %v3556, 1.0
          %v3598 = vadd.f32 %v3558, 1.0
          %v3599 = vadd.f32 %v3560, 1.0
          %v3600 = vadd.f32 %v3562, 1.0
          %v3601 = vadd.f32 %v3564, 1.0
          %v3602 = vadd.f32 %v3566, 1.0
          %v3603 = vadd.f32 %v3568, 1.0
          %v3604 = vadd.f32 %v3570, 1.0
          %v3605 = vadd.f32 %v3572, 1.0
          %v3606 = vadd.f32 %v3574, 1.0
          %v3607 = vrcp.pop %v3575
          %v3608 = vmul.f32 1.0, %v3607
          %v3609 = vrcp.pop %v3576
          %v3610 = vmul.f32 1.0, %v3609
          %v3611 = vrcp.pop %v3577
          %v3612 = vmul.f32 1.0, %v3611
          %v3613 = vrcp.pop %v3578
          %v3614 = vmul.f32 1.0, %v3613
          %v3615 = vrcp.pop %v3579
          %v3616 = vmul.f32 1.0, %v3615
          %v3617 = vrcp.pop %v3580
          %v3618 = vmul.f32 1.0, %v3617
          %v3619 = vrcp.pop %v3581
          %v3620 = vmul.f32 1.0, %v3619
          %v3621 = vrcp.pop %v3582
          %v3622 = vmul.f32 1.0, %v3621
          %v3623 = vrcp.pop %v3583
          %v3624 = vmul.f32 1.0, %v3623
          %v3625 = vrcp.pop %v3584
          %v3626 = vmul.f32 1.0, %v3625
          %v3627 = vrcp.pop %v3585
          %v3628 = vmul.f32 1.0, %v3627
          %v3629 = vrcp.pop %v3586
          %v3630 = vmul.f32 1.0, %v3629
          %v3631 = vrcp.pop %v3587
          %v3632 = vmul.f32 1.0, %v3631
          %v3633 = vrcp.pop %v3588
          %v3634 = vmul.f32 1.0, %v3633
          %v3635 = vrcp.pop %v3589
          %v3636 = vmul.f32 1.0, %v3635
          %v3637 = vrcp.pop %v3590
          %v3638 = vmul.f32 1.0, %v3637
          %v3639 = vrcp.pop %v3591
          %v3640 = vmul.f32 1.0, %v3639
          %v3641 = vrcp.pop %v3592
          %v3642 = vmul.f32 1.0, %v3641
          %v3643 = vrcp.pop %v3593
          %v3644 = vmul.f32 1.0, %v3643
          %v3645 = vrcp.pop %v3594
          %v3646 = vmul.f32 1.0, %v3645
          %v3647 = vrcp.pop %v3595
          %v3648 = vmul.f32 1.0, %v3647
          %v3649 = vrcp.pop %v3596
          %v3650 = vmul.f32 1.0, %v3649
          %v3651 = vrcp.pop %v3597
          %v3652 = vmul.f32 1.0, %v3651
          %v3653 = vrcp.pop %v3598
          %v3654 = vmul.f32 1.0, %v3653
          %v3655 = vrcp.pop %v3599
          %v3656 = vmul.f32 1.0, %v3655
          %v3657 = vrcp.pop %v3600
          %v3658 = vmul.f32 1.0, %v3657
          %v3659 = vrcp.pop %v3601
          %v3660 = vmul.f32 1.0, %v3659
          %v3661 = vrcp.pop %v3602
          %v3662 = vmul.f32 1.0, %v3661
          %v3663 = vrcp.pop %v3603
          %v3664 = vmul.f32 1.0, %v3663
          %v3665 = vrcp.pop %v3604
          %v3666 = vmul.f32 1.0, %v3665
          %v3667 = vrcp.pop %v3605
          %v3668 = vmul.f32 1.0, %v3667
          %v3669 = vrcp.pop %v3606
          %v3670 = vmul.f32 1.0, %v3669
          %v3671 = vmul.f32 %v3447, %v3608
          %v3672 = vmul.f32 %v3448, %v3610
          %v3673 = vmul.f32 %v3449, %v3612
          %v3674 = vmul.f32 %v3450, %v3614
          %v3675 = vmul.f32 %v3451, %v3616
          %v3676 = vmul.f32 %v3452, %v3618
          %v3677 = vmul.f32 %v3453, %v3620
          %v3678 = vmul.f32 %v3454, %v3622
          %v3679 = vmul.f32 %v3455, %v3624
          %v3680 = vmul.f32 %v3456, %v3626
          %v3681 = vmul.f32 %v3457, %v3628
          %v3682 = vmul.f32 %v3458, %v3630
          %v3683 = vmul.f32 %v3459, %v3632
          %v3684 = vmul.f32 %v3460, %v3634
          %v3685 = vmul.f32 %v3461, %v3636
          %v3686 = vmul.f32 %v3462, %v3638
          %v3687 = vmul.f32 %v3463, %v3640
          %v3688 = vmul.f32 %v3464, %v3642
          %v3689 = vmul.f32 %v3465, %v3644
          %v3690 = vmul.f32 %v3466, %v3646
          %v3691 = vmul.f32 %v3467, %v3648
          %v3692 = vmul.f32 %v3468, %v3650
          %v3693 = vmul.f32 %v3469, %v3652
          %v3694 = vmul.f32 %v3470, %v3654
          %v3695 = vmul.f32 %v3471, %v3656
          %v3696 = vmul.f32 %v3472, %v3658
          %v3697 = vmul.f32 %v3473, %v3660
          %v3698 = vmul.f32 %v3474, %v3662
          %v3699 = vmul.f32 %v3475, %v3664
          %v3700 = vmul.f32 %v3476, %v3666
          %v3701 = vmul.f32 %v3477, %v3668
          %v3702 = vmul.f32 %v3478, %v3670
          %v3703 = vld [vmem:[#allocation3] sm:$0xff]
          %v3704 = vld [vmem:[#allocation3 + $0x8] sm:$0xff]
          %v3705 = vld [vmem:[#allocation3 + $0x10] sm:$0xff]
          %v3706 = vld [vmem:[#allocation3 + $0x18] sm:$0xff]
          %v3707 = vld [vmem:[#allocation3 + $0x20] sm:$0xff]
          %v3708 = vld [vmem:[#allocation3 + $0x28] sm:$0xff]
          %v3709 = vld [vmem:[#allocation3 + $0x30] sm:$0xff]
          %v3710 = vld [vmem:[#allocation3 + $0x38] sm:$0xff]
          %v3711 = vld [vmem:[#allocation3 + $0x40] sm:$0xff]
          %v3712 = vld [vmem:[#allocation3 + $0x48] sm:$0xff]
          %v3713 = vld [vmem:[#allocation3 + $0x50] sm:$0xff]
          %v3714 = vld [vmem:[#allocation3 + $0x58] sm:$0xff]
          %v3715 = vld [vmem:[#allocation3 + $0x60] sm:$0xff]
          %v3716 = vld [vmem:[#allocation3 + $0x68] sm:$0xff]
          %v3717 = vld [vmem:[#allocation3 + $0x70] sm:$0xff]
          %v3718 = vld [vmem:[#allocation3 + $0x78] sm:$0xff]
          %v3719 = vld [vmem:[#allocation3 + $0x80] sm:$0xff]
          %v3720 = vld [vmem:[#allocation3 + $0x88] sm:$0xff]
          %v3721 = vld [vmem:[#allocation3 + $0x90] sm:$0xff]
          %v3722 = vld [vmem:[#allocation3 + $0x98] sm:$0xff]
          %v3723 = vld [vmem:[#allocation3 + $0xa0] sm:$0xff]
          %v3724 = vld [vmem:[#allocation3 + $0xa8] sm:$0xff]
          %v3725 = vld [vmem:[#allocation3 + $0xb0] sm:$0xff]
          %v3726 = vld [vmem:[#allocation3 + $0xb8] sm:$0xff]
          %v3727 = vld [vmem:[#allocation3 + $0xc0] sm:$0xff]
          %v3728 = vld [vmem:[#allocation3 + $0xc8] sm:$0xff]
          %v3729 = vld [vmem:[#allocation3 + $0xd0] sm:$0xff]
          %v3730 = vld [vmem:[#allocation3 + $0xd8] sm:$0xff]
          %v3731 = vld [vmem:[#allocation3 + $0xe0] sm:$0xff]
          %v3732 = vld [vmem:[#allocation3 + $0xe8] sm:$0xff]
          %v3733 = vld [vmem:[#allocation3 + $0xf0] sm:$0xff]
          %v3734 = vld [vmem:[#allocation3 + $0xf8] sm:$0xff]
          %v3735 = vmul.f32 %v3671, %v3703
          %v3736 = vmul.f32 %v3672, %v3704
          %v3737 = vmul.f32 %v3673, %v3705
          %v3738 = vmul.f32 %v3674, %v3706
          %v3739 = vmul.f32 %v3675, %v3707
          %v3740 = vmul.f32 %v3676, %v3708
          %v3741 = vmul.f32 %v3677, %v3709
          %v3742 = vmul.f32 %v3678, %v3710
          %v3743 = vmul.f32 %v3679, %v3711
          %v3744 = vmul.f32 %v3680, %v3712
          %v3745 = vmul.f32 %v3681, %v3713
          %v3746 = vmul.f32 %v3682, %v3714
          %v3747 = vmul.f32 %v3683, %v3715
          %v3748 = vmul.f32 %v3684, %v3716
          %v3749 = vmul.f32 %v3685, %v3717
          %v3750 = vmul.f32 %v3686, %v3718
          %v3751 = vmul.f32 %v3687, %v3719
          %v3752 = vmul.f32 %v3688, %v3720
          %v3753 = vmul.f32 %v3689, %v3721
          %v3754 = vmul.f32 %v3690, %v3722
          %v3755 = vmul.f32 %v3691, %v3723
          %v3756 = vmul.f32 %v3692, %v3724
          %v3757 = vmul.f32 %v3693, %v3725
          %v3758 = vmul.f32 %v3694, %v3726
          %v3759 = vmul.f32 %v3695, %v3727
          %v3760 = vmul.f32 %v3696, %v3728
          %v3761 = vmul.f32 %v3697, %v3729
          %v3762 = vmul.f32 %v3698, %v3730
          %v3763 = vmul.f32 %v3699, %v3731
          %v3764 = vmul.f32 %v3700, %v3732
          %v3765 = vmul.f32 %v3701, %v3733
          %v3766 = vmul.f32 %v3702, %v3734
          %v3767 = vpack.c.bf16 %v3739, %v3735
          %v3768 = vpack.c.bf16 %v3740, %v3736
          %v3769 = vpack.c.bf16 %v3741, %v3737
          %v3770 = vpack.c.bf16 %v3742, %v3738
          %v3771 = vpack.c.bf16 %v3747, %v3743
          %v3772 = vpack.c.bf16 %v3748, %v3744
          %v3773 = vpack.c.bf16 %v3749, %v3745
          %v3774 = vpack.c.bf16 %v3750, %v3746
          %v3775 = vpack.c.bf16 %v3755, %v3751
          %v3776 = vpack.c.bf16 %v3756, %v3752
          %v3777 = vpack.c.bf16 %v3757, %v3753
          %v3778 = vpack.c.bf16 %v3758, %v3754
          %v3779 = vpack.c.bf16 %v3763, %v3759
          %v3780 = vpack.c.bf16 %v3764, %v3760
          %v3781 = vpack.c.bf16 %v3765, %v3761
          %v3782 = vpack.c.bf16 %v3766, %v3762
          %v3799 = vunpack.c.l.b16 %v3767
          %v3800 = vunpack.c.l.b16 %v3768
          %v3801 = vunpack.c.l.b16 %v3769
          %v3802 = vunpack.c.l.b16 %v3770
          %v3803 = vunpack.c.h.b16 %v3767
          %v3804 = vunpack.c.h.b16 %v3768
          %v3805 = vunpack.c.h.b16 %v3769
          %v3806 = vunpack.c.h.b16 %v3770
          %v3807 = vunpack.c.l.b16 %v3771
          %v3808 = vunpack.c.l.b16 %v3772
          %v3809 = vunpack.c.l.b16 %v3773
          %v3810 = vunpack.c.l.b16 %v3774
          %v3811 = vunpack.c.h.b16 %v3771
          %v3812 = vunpack.c.h.b16 %v3772
          %v3813 = vunpack.c.h.b16 %v3773
          %v3814 = vunpack.c.h.b16 %v3774
          %v3815 = vunpack.c.l.b16 %v3775
          %v3816 = vunpack.c.l.b16 %v3776
          %v3817 = vunpack.c.l.b16 %v3777
          %v3818 = vunpack.c.l.b16 %v3778
          %v3819 = vunpack.c.h.b16 %v3775
          %v3820 = vunpack.c.h.b16 %v3776
          %v3821 = vunpack.c.h.b16 %v3777
          %v3822 = vunpack.c.h.b16 %v3778
          %v3823 = vunpack.c.l.b16 %v3779
          %v3824 = vunpack.c.l.b16 %v3780
          %v3825 = vunpack.c.l.b16 %v3781
          %v3826 = vunpack.c.l.b16 %v3782
          %v3827 = vunpack.c.h.b16 %v3779
          %v3828 = vunpack.c.h.b16 %v3780
          %v3829 = vunpack.c.h.b16 %v3781
          %v3830 = vunpack.c.h.b16 %v3782
          %v3831 = vpack.c.b16 %v3800, %v3799
          %v3832 = vpack.c.b16 %v3802, %v3801
          %v3833 = vpack.c.b16 %v3804, %v3803
          %v3834 = vpack.c.b16 %v3806, %v3805
          %v3835 = vpack.c.b16 %v3808, %v3807
          %v3836 = vpack.c.b16 %v3810, %v3809
          %v3837 = vpack.c.b16 %v3812, %v3811
          %v3838 = vpack.c.b16 %v3814, %v3813
          %v3839 = vpack.c.b16 %v3816, %v3815
          %v3840 = vpack.c.b16 %v3818, %v3817
          %v3841 = vpack.c.b16 %v3820, %v3819
          %v3842 = vpack.c.b16 %v3822, %v3821
          %v3843 = vpack.c.b16 %v3824, %v3823
          %v3844 = vpack.c.b16 %v3826, %v3825
          %v3845 = vpack.c.b16 %v3828, %v3827
          %v3846 = vpack.c.b16 %v3830, %v3829
          %3863 = vst [vmem:[%s521] sm:$0xff] %v3831
          %3864 = vst [vmem:[%s521 + $0x8] sm:$0xff] %v3832
          %3865 = vst [vmem:[%s521 + $0x10] sm:$0xff] %v3833
          %3866 = vst [vmem:[%s521 + $0x18] sm:$0xff] %v3834
          %3867 = vst [vmem:[%s521 + $0x20] sm:$0xff] %v3835
          %3868 = vst [vmem:[%s521 + $0x28] sm:$0xff] %v3836
          %3869 = vst [vmem:[%s521 + $0x30] sm:$0xff] %v3837
          %3870 = vst [vmem:[%s521 + $0x38] sm:$0xff] %v3838
          %3871 = vst [vmem:[%s521 + $0x40] sm:$0xff] %v3839
          %3872 = vst [vmem:[%s521 + $0x48] sm:$0xff] %v3840
          %3873 = vst [vmem:[%s521 + $0x50] sm:$0xff] %v3841
          %3874 = vst [vmem:[%s521 + $0x58] sm:$0xff] %v3842
          %3875 = vst [vmem:[%s521 + $0x60] sm:$0xff] %v3843
          %3876 = vst [vmem:[%s521 + $0x68] sm:$0xff] %v3844
          %3877 = vst [vmem:[%s521 + $0x70] sm:$0xff] %v3845
          %3878 = vst [vmem:[%s521 + $0x78] sm:$0xff] %v3846
        $region80: #{tpu_custom_call.1} parent=43 // pred_fallthru
          _
        %s3879 = sand.u32 %s252, 1
        %s3880 = scalar_lea.sflag [#allocation9], %s3879
        %s3881 = sand.u32 %s252, 1
        %s3882 = smul.addr %s3881, 128
        %s3883 = scalar_lea.vmem [#allocation16], %s3882
        // Predicated region
        $region81: #{tpu_custom_call.1} parent=43 // pred_check
          %p3884 = pneg %p262
        $region82: #{tpu_custom_call.1} parent=43 // pred_check_branch
          %3886 = sbr.rel (%p3884) target = $region84
        $region83: #{tpu_custom_call.1} parent=43 // pred_region
          %s3887 = smul.u32 8, %s46
          %s3888 = smul.u32 4, %s47
          %s3890 = ssub.s32 2048, 2048
          %3891 = vsyncadd %s3880, %s3890
          %s3892 = smul.addr %s3887, 8
          %s3893 = sadd.s32 %s3888, %s3892
          %s3894 = smul.addr %s3893, 64
          %s3895 = scalar_lea.hbm %s8, %s3894
          %s3896 = sshll.u32 %s3883, 4
          %s3897 = int_to_ptr.vmem [resolvable:$true] %s3896
          %3902 = dma.vmem_to_hbm [thread:$0]  %s3897, 2048, %s3895, %s3880, 256, 512, 16
        $region84: #{tpu_custom_call.1} parent=43 // pred_fallthru
          _
      $region44: #{tpu_custom_call.1} parent=5 // pred_fallthru
        _
      %p3903 = scmp.le.s32.totalorder 2, %s36
      // Predicated region
      $region85: #{tpu_custom_call.1} parent=5 // pred_check
        %p3904 = pneg %p3903
      $region86: #{tpu_custom_call.1} parent=5 // pred_check_branch
        %3906 = sbr.rel (%p3904) target = $region88
      $region87: #{tpu_custom_call.1} parent=5 // pred_region
        %s3907 = ssub.s32 %s36, 2
        // Predicated region
        $region89: #{tpu_custom_call.1} parent=87 // pred_check
          %p3908 = pneg %p268
        $region90: #{tpu_custom_call.1} parent=87 // pred_check_branch
          %3910 = sbr.rel (%p3908) target = $region92
        $region91: #{tpu_custom_call.1} parent=87 // pred_region
          %s3911 = sand.u32 %s253, 1
          %s3912 = scalar_lea.sflag [#allocation9], %s3911
          %s3913 = sand.u32 %s253, 1
          %s3914 = smul.addr %s3913, 128
          %s3915 = scalar_lea.vmem [#allocation16], %s3914
          %3916 = dma.done %s3912, 2048
        $region92: #{tpu_custom_call.1} parent=87 // pred_fallthru
          _
      $region88: #{tpu_custom_call.1} parent=5 // pred_fallthru
        _
    $region6: #{tpu_custom_call.1} parent=1 // loop_footer
      %s40 = sadd.s32 1, %s36
    $region7: #{tpu_custom_call.1} parent=1 // loop_footer_branch
      %35 = sbr.rel target = $region3
    $region8: #{tpu_custom_call.1} parent=1 // loop_exit
      _
    %3917 = vsyncpa [#allocation8], 1
    %s3918 = scalar_lea.sflag [#allocation8], 1
    %3919 = vsyncpa %s3918, 1
    %3920 = vsyncpa [#allocation11], 1
    %s3921 = scalar_lea.sflag [#allocation11], 1
    %3922 = vsyncpa %s3921, 1
    %3923 = vsyncpa [#allocation14], 1
    %s3924 = scalar_lea.sflag [#allocation14], 1
    %3925 = vsyncpa %s3924, 1
    %3926 = vsyncpa [#allocation9], 1
    %s3927 = scalar_lea.sflag [#allocation9], 1
    %3928 = vsyncpa %s3927, 1

</llo_original>
